<compile_context>
chip_gen: v6e
topology: v6e:2x2x1
jax: 0.10.0
libtpu: 0.0.40
codegen_flags: <defaults>
</compile_context>

<pallas_src>
import functools

import jax
import jax.numpy as jnp
from jax import lax
from jax.experimental import pallas as pl
from jax.experimental.pallas import tpu as pltpu


# ---------------------------------------------------------------------------
# Kernel 1: GRU stack recurrence over one time chunk per grid step.
# ---------------------------------------------------------------------------
def gru_stack_kernel(x_ref, h0_ref, wih_ref, whh_ref, bih_ref, bhh_ref,
                     htop_ref, hs_ref,
                     h_scratch, io_buf):
    """One grid step == one time chunk of the full GRU stack.

    x_ref    : (T, B, E)   bf16  embedded inputs for this chunk
    h0_ref   : (L, B, H)   f32   initial hidden state (full, constant block)
    wih_ref  : (L, E, 3H)  bf16  input->hidden weights (PyTorch W_ih^T)
    whh_ref  : (L, H, 3H)  bf16  hidden->hidden weights (PyTorch W_hh^T)
    bih_ref  : (L, 1, 3H)  f32   input biases
    bhh_ref  : (L, 1, 3H)  f32   hidden biases
    htop_ref : (T, B, H)   f32   top-layer hidden states for this chunk (per-chunk output)
    hs_ref   : (L, B, H)   f32   final hidden state (written on last chunk only)
    h_scratch: VMEM (L, B, H)    f32, persists across chunks (the recurrent carry)
    io_buf   : VMEM (T*B, H)     f32, inter-layer activation buffer within a chunk
    """
    c = pl.program_id(0)

    @pl.when(c == 0)
    def _():
        h_scratch[...] = h0_ref[...]

    L = h_scratch.shape[0]
    H = h_scratch.shape[2]
    T, B, E = x_ref.shape

    # Static loop over layers (L is a small compile-time constant).
    for layer in range(L):
        # ---- Batched input-gate matmul for the whole chunk (no time dependence). ----
        if layer == 0:
            inp = x_ref[...].reshape(T * B, E)                  # bf16
        else:
            inp = io_buf[...].astype(jnp.bfloat16)              # (T*B, H)
        gi_all = jnp.dot(inp, wih_ref[layer],
                         preferred_element_type=jnp.float32) + bih_ref[layer]  # (T*B, 3H) f32

        h = h_scratch[layer]                                    # (B, H) f32
        whh = whh_ref[layer]                                    # (H, 3H) bf16
        bhh = bhh_ref[layer]                                    # (1, 3H) f32

        # ---- Serial time recurrence within the chunk (fully unrolled, static indices). ----
        for t in range(T):
            gi = gi_all[t * B:(t + 1) * B, :]                   # (B, 3H)
            gh = jnp.dot(h.astype(jnp.bfloat16), whh,
                         preferred_element_type=jnp.float32) + bhh  # (B, 3H)

            # PyTorch gate order: r, z, n  (lane-aligned slices when H % 128 == 0).
            i_r, i_z, i_n = gi[:, :H], gi[:, H:2 * H], gi[:, 2 * H:]
            h_r, h_z, h_n = gh[:, :H], gh[:, H:2 * H], gh[:, 2 * H:]

            r = jax.nn.sigmoid(i_r + h_r)
            z = jax.nn.sigmoid(i_z + h_z)
            n = jnp.tanh(i_n + r * h_n)
            h = (1.0 - z) * n + z * h

            if layer == L - 1:
                htop_ref[t] = h.astype(htop_ref.dtype)
            else:
                io_buf[t * B:(t + 1) * B, :] = h

        h_scratch[layer] = h

    # Write the final hidden state only once, on the last chunk.
    @pl.when(c == pl.num_programs(0) - 1)
    def _():
        hs_ref[...] = h_scratch[...]


# ---------------------------------------------------------------------------
# Kernel 2: tied output projection, one big tiled matmul over (S*B, V).
# ---------------------------------------------------------------------------
def tied_proj_kernel(h_ref, w_ref, b_ref, out_ref):
    """logits tile = h_tile @ emb_tile^T + bias_tile.

    h_ref  : (tm, H)  f32   top-layer hidden rows
    w_ref  : (tn, H)  bf16  embedding rows (tied weight) -- contracted on H, no HBM transpose
    b_ref  : (1, tn)  f32
    out_ref: (tm, tn) f32
    """
    h = h_ref[...].astype(jnp.bfloat16)
    acc = lax.dot_general(h, w_ref[...],
                          dimension_numbers=(((1,), (1,)), ((), ())),
                          preferred_element_type=jnp.float32)
    out_ref[...] = acc + b_ref[...]


# ---------------------------------------------------------------------------
# Wrapper
# ---------------------------------------------------------------------------
def rnnlm_forward(x_idx, h0, params, *, t_chunk=8, proj_tm=128, proj_tn=128):
    """x_idx: (S, B) int32, h0: (L, B, H) f32. Returns (logits (S, B, V), hs (L, B, H))."""
    emb = params["embedding"]                 # (V, E) f32
    wih = params["w_ih"]                      # (L, E, 3H)
    whh = params["w_hh"]                      # (L, H, 3H)
    bih = params["b_ih"]                      # (L, 1, 3H)
    bhh = params["b_hh"]                      # (L, 1, 3H)
    bout = params["b_out"]                    # (1, V)

    S, B = x_idx.shape
    L, _, H = h0.shape
    V, E = emb.shape
    assert E == H, "weight tying (linear.weight = embedding.weight) requires hidden == emb"

    # --- glue: bf16 weight prep + embedding lookup (gather) + dropout(identity, eval) ---
    emb_bf16 = emb.astype(jnp.bfloat16)       # used for both the gather and the tied projection
    wih_bf16 = wih.astype(jnp.bfloat16)
    whh_bf16 = whh.astype(jnp.bfloat16)
    x_emb = jnp.take(emb_bf16, x_idx, axis=0)  # (S, B, E) bf16

    # Choose a time-chunk size that divides S.
    t_chunk = min(t_chunk, S)
    while S % t_chunk:
        t_chunk -= 1
    n_chunks = S // t_chunk

    # ---------------- recurrent kernel ----------------
    rec_grid_spec = pltpu.PrefetchScalarGridSpec(
        num_scalar_prefetch=0,
        grid=(n_chunks,),
        in_specs=[
            pl.BlockSpec((t_chunk, B, E), lambda c: (c, 0, 0)),     # x_emb chunk
            pl.BlockSpec((L, B, H), lambda c: (0, 0, 0)),           # h0
            pl.BlockSpec((L, E, 3 * H), lambda c: (0, 0, 0)),       # w_ih
            pl.BlockSpec((L, H, 3 * H), lambda c: (0, 0, 0)),       # w_hh
            pl.BlockSpec((L, 1, 3 * H), lambda c: (0, 0, 0)),       # b_ih
            pl.BlockSpec((L, 1, 3 * H), lambda c: (0, 0, 0)),       # b_hh
        ],
        out_specs=[
            pl.BlockSpec((t_chunk, B, H), lambda c: (c, 0, 0)),     # top-layer hidden states
            pl.BlockSpec((L, B, H), lambda c: (0, 0, 0)),           # final hidden state
        ],
        scratch_shapes=[
            pltpu.VMEM((L, B, H), jnp.float32),                     # recurrent carry
            pltpu.VMEM((t_chunk * B, H), jnp.float32),              # inter-layer buffer
        ],
    )

    h_top, hs = pl.pallas_call(
        gru_stack_kernel,
        out_shape=(
            jax.ShapeDtypeStruct((S, B, H), jnp.float32),
            jax.ShapeDtypeStruct((L, B, H), jnp.float32),
        ),
        grid_spec=rec_grid_spec,
        compiler_params=pltpu.CompilerParams(
            dimension_semantics=("arbitrary",),   # time recurrence is sequential
        ),
    )(x_emb, h0, wih_bf16, whh_bf16, bih, bhh)

    # ---------------- tied output projection (hoisted out of the recurrence) ----------------
    M = S * B
    if M % proj_tm:
        proj_tm = M
    if V % proj_tn:
        proj_tn = V

    h_top_flat = h_top.reshape(M, H)

    proj_grid_spec = pltpu.PrefetchScalarGridSpec(
        num_scalar_prefetch=0,
        grid=(M // proj_tm, V // proj_tn),
        in_specs=[
            pl.BlockSpec((proj_tm, H), lambda i, j: (i, 0)),        # hidden rows
            pl.BlockSpec((proj_tn, H), lambda i, j: (j, 0)),        # embedding rows (tied W)
            pl.BlockSpec((1, proj_tn), lambda i, j: (0, j)),        # bias
        ],
        out_specs=pl.BlockSpec((proj_tm, proj_tn), lambda i, j: (i, j)),
    )

    logits_flat = pl.pallas_call(
        tied_proj_kernel,
        out_shape=jax.ShapeDtypeStruct((M, V), jnp.float32),
        grid_spec=proj_grid_spec,
        compiler_params=pltpu.CompilerParams(
            dimension_semantics=("parallel", "parallel"),
        ),
    )(h_top_flat, emb_bf16, bout)

    logits = logits_flat.reshape(S, B, V)
    return logits, hs


def init_params(key, vocab_size, emb_size, hidden_size, num_layers):
    assert emb_size == hidden_size
    keys = jax.random.split(key, 6)
    scale = 0.1
    embedding = scale * jax.random.normal(keys[0], (vocab_size, emb_size), jnp.float32)
    # PyTorch GRU weights are (3H, in) / (3H, H); stored pre-transposed for x @ W.
    w_ih = scale * jax.random.normal(keys[1], (num_layers, emb_size, 3 * hidden_size), jnp.float32)
    w_hh = scale * jax.random.normal(keys[2], (num_layers, hidden_size, 3 * hidden_size), jnp.float32)
    b_ih = scale * jax.random.normal(keys[3], (num_layers, 1, 3 * hidden_size), jnp.float32)
    b_hh = scale * jax.random.normal(keys[4], (num_layers, 1, 3 * hidden_size), jnp.float32)
    b_out = scale * jax.random.normal(keys[5], (1, vocab_size), jnp.float32)
    return {
        "embedding": embedding,
        "w_ih": w_ih,
        "w_hh": w_hh,
        "b_ih": b_ih,
        "b_hh": b_hh,
        "b_out": b_out,
    }


if __name__ == "__main__":
    # Small, lane-aligned shapes (H multiple of 128, V multiple of 128, B multiple of 8).
    vocab_size = 512
    emb_size = 128
    hidden_size = 128     # must equal emb_size due to weight tying
    num_layers = 2
    seq_len = 32
    batch = 8

    key = jax.random.PRNGKey(0)
    k_params, k_x, k_h = jax.random.split(key, 3)

    params = init_params(k_params, vocab_size, emb_size, hidden_size, num_layers)
    x_idx = jax.random.randint(k_x, (seq_len, batch), 0, vocab_size, dtype=jnp.int32)
    h0 = 0.1 * jax.random.normal(k_h, (num_layers, batch, hidden_size), jnp.float32)

    fwd = jax.jit(functools.partial(rnnlm_forward, params=params))
    logits, hs = fwd(x_idx, h0)
    jax.block_until_ready((logits, hs))

    assert logits.shape == (seq_len, batch, vocab_size)
    assert hs.shape == (num_layers, batch, hidden_size)
    assert bool(jnp.all(jnp.isfinite(logits))) and bool(jnp.all(jnp.isfinite(hs)))
    print("KERNEL_OK")
</pallas_src>

<mosaic_0001>
module attributes {stable_mosaic.version = 11 : i64} {
  func.func @tied_proj_kernel(%arg0: i32, %arg1: i32, %arg2: memref<128x128xf32, #tpu.memory_space<vmem>>, %arg3: memref<128x128xbf16, #tpu.memory_space<vmem>>, %arg4: memref<1x128xf32, #tpu.memory_space<vmem>>, %arg5: memref<128x128xf32, #tpu.memory_space<vmem>>) attributes {dimension_semantics = [#tpu.dimension_semantics<parallel>, #tpu.dimension_semantics<parallel>], iteration_bounds = array<i64: 2, 4>, scalar_prefetch = 0 : i64, scratch_operands = 0 : i64, tpu.core_type = #tpu.core_type<tc>, window_params = [{transform_indices = @transform_0, window_bounds = array<i64: 128, 128>}, {transform_indices = @transform_1, window_bounds = array<i64: 128, 128>}, {transform_indices = @transform_2, window_bounds = array<i64: 1, 128>}, {transform_indices = @transform_3, window_bounds = array<i64: 128, 128>}]} {
    %c0 = arith.constant 0 : index
    %c0_0 = arith.constant 0 : index
    %0 = vector.load %arg2[%c0, %c0_0] : memref<128x128xf32, #tpu.memory_space<vmem>>, vector<128x128xf32>
    %1 = arith.truncf %0 : vector<128x128xf32> to vector<128x128xbf16>
    %c0_1 = arith.constant 0 : index
    %c0_2 = arith.constant 0 : index
    %2 = vector.load %arg3[%c0_1, %c0_2] : memref<128x128xbf16, #tpu.memory_space<vmem>>, vector<128x128xbf16>
    %cst = arith.constant dense<0.000000e+00> : vector<128x128xf32>
    %3 = tpu.matmul %1, %2, %cst {dimension_numbers = #tpu.dot_dimension_numbers<[1], [1], [0], [0], [0, 0, 1, 0], [], []>} : vector<128x128xbf16>, vector<128x128xbf16>, vector<128x128xf32> -> vector<128x128xf32>
    %c0_3 = arith.constant 0 : index
    %c0_4 = arith.constant 0 : index
    %4 = vector.load %arg4[%c0_3, %c0_4] : memref<1x128xf32, #tpu.memory_space<vmem>>, vector<1x128xf32>
    %5 = vector.broadcast %4 : vector<1x128xf32> to vector<128x128xf32>
    %6 = arith.addf %3, %5 : vector<128x128xf32>
    %c0_5 = arith.constant 0 : index
    %c0_6 = arith.constant 0 : index
    %7 = vector.load %arg5[%c0_5, %c0_6] : memref<128x128xf32, #tpu.memory_space<vmem>>, vector<128x128xf32>
    tpu.vector_store %arg5[%c0_5, %c0_6], %6 {strides = array<i32>} : memref<128x128xf32, #tpu.memory_space<vmem>>, vector<128x128xf32>,
    return
  }
  func.func @transform_0(%arg0: i32, %arg1: i32) -> (i32, i32) {
    %c0_i32 = arith.constant 0 : i32
    %c0_i32_0 = arith.constant 0 : i32
    return %arg0, %c0_i32 : i32, i32
  }
  func.func @transform_1(%arg0: i32, %arg1: i32) -> (i32, i32) {
    %c0_i32 = arith.constant 0 : i32
    %c0_i32_0 = arith.constant 0 : i32
    return %arg1, %c0_i32 : i32, i32
  }
  func.func @transform_2(%arg0: i32, %arg1: i32) -> (i32, i32) {
    %c0_i32 = arith.constant 0 : i32
    %c0_i32_0 = arith.constant 0 : i32
    return %c0_i32, %arg1 : i32, i32
  }
  func.func @transform_3(%arg0: i32, %arg1: i32) -> (i32, i32) {
    %c0_i32 = arith.constant 0 : i32
    return %arg0, %arg1 : i32, i32
  }
}

module attributes {stable_mosaic.version = 11 : i64} {
  func.func @gru_stack_kernel(%arg0: i32, %arg1: memref<8x8x128xbf16, #tpu.memory_space<vmem>>, %arg2: memref<2x8x128xf32, #tpu.memory_space<vmem>>, %arg3: memref<2x128x384xbf16, #tpu.memory_space<vmem>>, %arg4: memref<2x128x384xbf16, #tpu.memory_space<vmem>>, %arg5: memref<2x1x384xf32, #tpu.memory_space<vmem>>, %arg6: memref<2x1x384xf32, #tpu.memory_space<vmem>>, %arg7: memref<8x8x128xf32, #tpu.memory_space<vmem>>, %arg8: memref<2x8x128xf32, #tpu.memory_space<vmem>>, %arg9: memref<2x8x128xf32, #tpu.memory_space<vmem>>, %arg10: memref<64x128xf32, #tpu.memory_space<vmem>>) attributes {dimension_semantics = [#tpu.dimension_semantics<arbitrary>], iteration_bounds = array<i64: 4>, scalar_prefetch = 0 : i64, scratch_operands = 2 : i64, tpu.core_type = #tpu.core_type<tc>, window_params = [{transform_indices = @transform_0, window_bounds = array<i64: 8, 8, 128>}, {pipeline_mode = #tpu.pipeline_mode<synchronous>, transform_indices = @transform_1, window_bounds = array<i64: 2, 8, 128>}, {pipeline_mode = #tpu.pipeline_mode<synchronous>, transform_indices = @transform_2, window_bounds = array<i64: 2, 128, 384>}, {pipeline_mode = #tpu.pipeline_mode<synchronous>, transform_indices = @transform_3, window_bounds = array<i64: 2, 128, 384>}, {pipeline_mode = #tpu.pipeline_mode<synchronous>, transform_indices = @transform_4, window_bounds = array<i64: 2, 1, 384>}, {pipeline_mode = #tpu.pipeline_mode<synchronous>, transform_indices = @transform_5, window_bounds = array<i64: 2, 1, 384>}, {transform_indices = @transform_6, window_bounds = array<i64: 8, 8, 128>}, {pipeline_mode = #tpu.pipeline_mode<synchronous>, transform_indices = @transform_7, window_bounds = array<i64: 2, 8, 128>}]} {
    %c0_i32 = arith.constant 0 : i32
    %0 = arith.cmpi eq, %arg0, %c0_i32 : i32
    %1 = arith.extui %0 : i1 to i32
    %c0_i32_0 = arith.constant 0 : i32
    %2 = arith.cmpi ne, %1, %c0_i32_0 : i32
    scf.if %2 {
      %c0_133 = arith.constant 0 : index
      %c0_134 = arith.constant 0 : index
      %c0_135 = arith.constant 0 : index
      %570 = vector.load %arg2[%c0_133, %c0_134, %c0_135] : memref<2x8x128xf32, #tpu.memory_space<vmem>>, vector<2x8x128xf32>
      %c0_136 = arith.constant 0 : index
      %c0_137 = arith.constant 0 : index
      %c0_138 = arith.constant 0 : index
      %571 = vector.load %arg9[%c0_136, %c0_137, %c0_138] : memref<2x8x128xf32, #tpu.memory_space<vmem>>, vector<2x8x128xf32>
      tpu.vector_store %arg9[%c0_136, %c0_137, %c0_138], %570 {strides = array<i32>} : memref<2x8x128xf32, #tpu.memory_space<vmem>>, vector<2x8x128xf32>,
    } else {
    }
    %c0 = arith.constant 0 : index
    %c0_1 = arith.constant 0 : index
    %c0_2 = arith.constant 0 : index
    %3 = vector.load %arg1[%c0, %c0_1, %c0_2] : memref<8x8x128xbf16, #tpu.memory_space<vmem>>, vector<8x8x128xbf16>
    %4 = vector.shape_cast %3 : vector<8x8x128xbf16> to vector<64x128xbf16>
    %c0_3 = arith.constant 0 : index
    %c0_4 = arith.constant 0 : index
    %c0_5 = arith.constant 0 : index
    %5 = vector.load %arg3[%c0_3, %c0_4, %c0_5] : memref<2x128x384xbf16, #tpu.memory_space<vmem>>, vector<1x128x384xbf16>
    %6 = vector.shape_cast %5 : vector<1x128x384xbf16> to vector<128x384xbf16>
    %cst = arith.constant dense<0.000000e+00> : vector<64x384xf32>
    %7 = tpu.matmul %4, %6, %cst {dimension_numbers = #tpu.dot_dimension_numbers<[1], [0], [0], [1], [0, 0, 1, 1], [], []>} : vector<64x128xbf16>, vector<128x384xbf16>, vector<64x384xf32> -> vector<64x384xf32>
    %c0_6 = arith.constant 0 : index
    %c0_7 = arith.constant 0 : index
    %c0_8 = arith.constant 0 : index
    %8 = vector.load %arg5[%c0_6, %c0_7, %c0_8] : memref<2x1x384xf32, #tpu.memory_space<vmem>>, vector<1x1x384xf32>
    %9 = vector.shape_cast %8 : vector<1x1x384xf32> to vector<1x384xf32>
    %10 = vector.broadcast %9 : vector<1x384xf32> to vector<64x384xf32>
    %11 = arith.addf %7, %10 : vector<64x384xf32>
    %c0_9 = arith.constant 0 : index
    %c0_10 = arith.constant 0 : index
    %c0_11 = arith.constant 0 : index
    %12 = vector.load %arg9[%c0_9, %c0_10, %c0_11] : memref<2x8x128xf32, #tpu.memory_space<vmem>>, vector<1x8x128xf32>
    %13 = vector.shape_cast %12 : vector<1x8x128xf32> to vector<8x128xf32>
    %c0_12 = arith.constant 0 : index
    %c0_13 = arith.constant 0 : index
    %c0_14 = arith.constant 0 : index
    %14 = vector.load %arg4[%c0_12, %c0_13, %c0_14] : memref<2x128x384xbf16, #tpu.memory_space<vmem>>, vector<1x128x384xbf16>
    %15 = vector.shape_cast %14 : vector<1x128x384xbf16> to vector<128x384xbf16>
    %c0_15 = arith.constant 0 : index
    %c0_16 = arith.constant 0 : index
    %c0_17 = arith.constant 0 : index
    %16 = vector.load %arg6[%c0_15, %c0_16, %c0_17] : memref<2x1x384xf32, #tpu.memory_space<vmem>>, vector<1x1x384xf32>
    %17 = vector.shape_cast %16 : vector<1x1x384xf32> to vector<1x384xf32>
    %18 = vector.extract_strided_slice %11 {offsets = [0, 0], sizes = [8, 384], strides = [1, 1]} : vector<64x384xf32> to vector<8x384xf32>
    %19 = arith.truncf %13 : vector<8x128xf32> to vector<8x128xbf16>
    %cst_18 = arith.constant dense<0.000000e+00> : vector<8x384xf32>
    %20 = tpu.matmul %19, %15, %cst_18 {dimension_numbers = #tpu.dot_dimension_numbers<[1], [0], [0], [1], [0, 0, 1, 1], [], []>} : vector<8x128xbf16>, vector<128x384xbf16>, vector<8x384xf32> -> vector<8x384xf32>
    %21 = vector.broadcast %17 : vector<1x384xf32> to vector<8x384xf32>
    %22 = arith.addf %20, %21 : vector<8x384xf32>
    %23 = vector.extract_strided_slice %18 {offsets = [0, 0], sizes = [8, 128], strides = [1, 1]} : vector<8x384xf32> to vector<8x128xf32>
    %24 = vector.extract_strided_slice %18 {offsets = [0, 128], sizes = [8, 128], strides = [1, 1]} : vector<8x384xf32> to vector<8x128xf32>
    %25 = vector.extract_strided_slice %18 {offsets = [0, 256], sizes = [8, 128], strides = [1, 1]} : vector<8x384xf32> to vector<8x128xf32>
    %26 = vector.extract_strided_slice %22 {offsets = [0, 0], sizes = [8, 128], strides = [1, 1]} : vector<8x384xf32> to vector<8x128xf32>
    %27 = vector.extract_strided_slice %22 {offsets = [0, 128], sizes = [8, 128], strides = [1, 1]} : vector<8x384xf32> to vector<8x128xf32>
    %28 = vector.extract_strided_slice %22 {offsets = [0, 256], sizes = [8, 128], strides = [1, 1]} : vector<8x384xf32> to vector<8x128xf32>
    %29 = arith.addf %23, %26 : vector<8x128xf32>
    %30 = arith.negf %29 : vector<8x128xf32>
    %31 = math.exp %30 : vector<8x128xf32>
    %cst_19 = arith.constant 1.000000e+00 : f32
    %32 = vector.broadcast %cst_19 : f32 to vector<8x128xf32>
    %33 = arith.addf %32, %31 : vector<8x128xf32>
    %34 = arith.divf %32, %33 : vector<8x128xf32>
    %35 = arith.addf %24, %27 : vector<8x128xf32>
    %36 = arith.negf %35 : vector<8x128xf32>
    %37 = math.exp %36 : vector<8x128xf32>
    %cst_20 = arith.constant 1.000000e+00 : f32
    %38 = vector.broadcast %cst_20 : f32 to vector<8x128xf32>
    %39 = arith.addf %38, %37 : vector<8x128xf32>
    %40 = arith.divf %38, %39 : vector<8x128xf32>
    %41 = arith.mulf %34, %28 : vector<8x128xf32>
    %42 = arith.addf %25, %41 : vector<8x128xf32>
    %43 = math.tanh %42 : vector<8x128xf32>
    %cst_21 = arith.constant 1.000000e+00 : f32
    %44 = vector.broadcast %cst_21 : f32 to vector<8x128xf32>
    %45 = arith.subf %44, %40 : vector<8x128xf32>
    %46 = arith.mulf %45, %43 : vector<8x128xf32>
    %47 = arith.mulf %40, %13 : vector<8x128xf32>
    %48 = arith.addf %46, %47 : vector<8x128xf32>
    %c0_22 = arith.constant 0 : index
    %c0_23 = arith.constant 0 : index
    %49 = vector.load %arg10[%c0_22, %c0_23] : memref<64x128xf32, #tpu.memory_space<vmem>>, vector<8x128xf32>
    tpu.vector_store %arg10[%c0_22, %c0_23], %48 {strides = array<i32>} : memref<64x128xf32, #tpu.memory_space<vmem>>, vector<8x128xf32>,
    %50 = vector.extract_strided_slice %11 {offsets = [8, 0], sizes = [8, 384], strides = [1, 1]} : vector<64x384xf32> to vector<8x384xf32>
    %51 = arith.truncf %48 : vector<8x128xf32> to vector<8x128xbf16>
    %cst_24 = arith.constant dense<0.000000e+00> : vector<8x384xf32>
    %52 = tpu.matmul %51, %15, %cst_24 {dimension_numbers = #tpu.dot_dimension_numbers<[1], [0], [0], [1], [0, 0, 1, 1], [], []>} : vector<8x128xbf16>, vector<128x384xbf16>, vector<8x384xf32> -> vector<8x384xf32>
    %53 = vector.broadcast %17 : vector<1x384xf32> to vector<8x384xf32>
    %54 = arith.addf %52, %53 : vector<8x384xf32>
    %55 = vector.extract_strided_slice %50 {offsets = [0, 0], sizes = [8, 128], strides = [1, 1]} : vector<8x384xf32> to vector<8x128xf32>
    %56 = vector.extract_strided_slice %50 {offsets = [0, 128], sizes = [8, 128], strides = [1, 1]} : vector<8x384xf32> to vector<8x128xf32>
    %57 = vector.extract_strided_slice %50 {offsets = [0, 256], sizes = [8, 128], strides = [1, 1]} : vector<8x384xf32> to vector<8x128xf32>
    %58 = vector.extract_strided_slice %54 {offsets = [0, 0], sizes = [8, 128], strides = [1, 1]} : vector<8x384xf32> to vector<8x128xf32>
    %59 = vector.extract_strided_slice %54 {offsets = [0, 128], sizes = [8, 128], strides = [1, 1]} : vector<8x384xf32> to vector<8x128xf32>
    %60 = vector.extract_strided_slice %54 {offsets = [0, 256], sizes = [8, 128], strides = [1, 1]} : vector<8x384xf32> to vector<8x128xf32>
    %61 = arith.addf %55, %58 : vector<8x128xf32>
    %62 = arith.negf %61 : vector<8x128xf32>
    %63 = math.exp %62 : vector<8x128xf32>
    %cst_25 = arith.constant 1.000000e+00 : f32
    %64 = vector.broadcast %cst_25 : f32 to vector<8x128xf32>
    %65 = arith.addf %64, %63 : vector<8x128xf32>
    %66 = arith.divf %64, %65 : vector<8x128xf32>
    %67 = arith.addf %56, %59 : vector<8x128xf32>
    %68 = arith.negf %67 : vector<8x128xf32>
    %69 = math.exp %68 : vector<8x128xf32>
    %cst_26 = arith.constant 1.000000e+00 : f32
    %70 = vector.broadcast %cst_26 : f32 to vector<8x128xf32>
    %71 = arith.addf %70, %69 : vector<8x128xf32>
    %72 = arith.divf %70, %71 : vector<8x128xf32>
    %73 = arith.mulf %66, %60 : vector<8x128xf32>
    %74 = arith.addf %57, %73 : vector<8x128xf32>
    %75 = math.tanh %74 : vector<8x128xf32>
    %cst_27 = arith.constant 1.000000e+00 : f32
    %76 = vector.broadcast %cst_27 : f32 to vector<8x128xf32>
    %77 = arith.subf %76, %72 : vector<8x128xf32>
    %78 = arith.mulf %77, %75 : vector<8x128xf32>
    %79 = arith.mulf %72, %48 : vector<8x128xf32>
    %80 = arith.addf %78, %79 : vector<8x128xf32>
    %c8 = arith.constant 8 : index
    %c0_28 = arith.constant 0 : index
    %81 = vector.load %arg10[%c8, %c0_28] : memref<64x128xf32, #tpu.memory_space<vmem>>, vector<8x128xf32>
    tpu.vector_store %arg10[%c8, %c0_28], %80 {strides = array<i32>} : memref<64x128xf32, #tpu.memory_space<vmem>>, vector<8x128xf32>,
    %82 = vector.extract_strided_slice %11 {offsets = [16, 0], sizes = [8, 384], strides = [1, 1]} : vector<64x384xf32> to vector<8x384xf32>
    %83 = arith.truncf %80 : vector<8x128xf32> to vector<8x128xbf16>
    %cst_29 = arith.constant dense<0.000000e+00> : vector<8x384xf32>
    %84 = tpu.matmul %83, %15, %cst_29 {dimension_numbers = #tpu.dot_dimension_numbers<[1], [0], [0], [1], [0, 0, 1, 1], [], []>} : vector<8x128xbf16>, vector<128x384xbf16>, vector<8x384xf32> -> vector<8x384xf32>
    %85 = vector.broadcast %17 : vector<1x384xf32> to vector<8x384xf32>
    %86 = arith.addf %84, %85 : vector<8x384xf32>
    %87 = vector.extract_strided_slice %82 {offsets = [0, 0], sizes = [8, 128], strides = [1, 1]} : vector<8x384xf32> to vector<8x128xf32>
    %88 = vector.extract_strided_slice %82 {offsets = [0, 128], sizes = [8, 128], strides = [1, 1]} : vector<8x384xf32> to vector<8x128xf32>
    %89 = vector.extract_strided_slice %82 {offsets = [0, 256], sizes = [8, 128], strides = [1, 1]} : vector<8x384xf32> to vector<8x128xf32>
    %90 = vector.extract_strided_slice %86 {offsets = [0, 0], sizes = [8, 128], strides = [1, 1]} : vector<8x384xf32> to vector<8x128xf32>
    %91 = vector.extract_strided_slice %86 {offsets = [0, 128], sizes = [8, 128], strides = [1, 1]} : vector<8x384xf32> to vector<8x128xf32>
    %92 = vector.extract_strided_slice %86 {offsets = [0, 256], sizes = [8, 128], strides = [1, 1]} : vector<8x384xf32> to vector<8x128xf32>
    %93 = arith.addf %87, %90 : vector<8x128xf32>
    %94 = arith.negf %93 : vector<8x128xf32>
    %95 = math.exp %94 : vector<8x128xf32>
    %cst_30 = arith.constant 1.000000e+00 : f32
    %96 = vector.broadcast %cst_30 : f32 to vector<8x128xf32>
    %97 = arith.addf %96, %95 : vector<8x128xf32>
    %98 = arith.divf %96, %97 : vector<8x128xf32>
    %99 = arith.addf %88, %91 : vector<8x128xf32>
    %100 = arith.negf %99 : vector<8x128xf32>
    %101 = math.exp %100 : vector<8x128xf32>
    %cst_31 = arith.constant 1.000000e+00 : f32
    %102 = vector.broadcast %cst_31 : f32 to vector<8x128xf32>
    %103 = arith.addf %102, %101 : vector<8x128xf32>
    %104 = arith.divf %102, %103 : vector<8x128xf32>
    %105 = arith.mulf %98, %92 : vector<8x128xf32>
    %106 = arith.addf %89, %105 : vector<8x128xf32>
    %107 = math.tanh %106 : vector<8x128xf32>
    %cst_32 = arith.constant 1.000000e+00 : f32
    %108 = vector.broadcast %cst_32 : f32 to vector<8x128xf32>
    %109 = arith.subf %108, %104 : vector<8x128xf32>
    %110 = arith.mulf %109, %107 : vector<8x128xf32>
    %111 = arith.mulf %104, %80 : vector<8x128xf32>
    %112 = arith.addf %110, %111 : vector<8x128xf32>
    %c16 = arith.constant 16 : index
    %c0_33 = arith.constant 0 : index
    %113 = vector.load %arg10[%c16, %c0_33] : memref<64x128xf32, #tpu.memory_space<vmem>>, vector<8x128xf32>
    tpu.vector_store %arg10[%c16, %c0_33], %112 {strides = array<i32>} : memref<64x128xf32, #tpu.memory_space<vmem>>, vector<8x128xf32>,
    %114 = vector.extract_strided_slice %11 {offsets = [24, 0], sizes = [8, 384], strides = [1, 1]} : vector<64x384xf32> to vector<8x384xf32>
    %115 = arith.truncf %112 : vector<8x128xf32> to vector<8x128xbf16>
    %cst_34 = arith.constant dense<0.000000e+00> : vector<8x384xf32>
    %116 = tpu.matmul %115, %15, %cst_34 {dimension_numbers = #tpu.dot_dimension_numbers<[1], [0], [0], [1], [0, 0, 1, 1], [], []>} : vector<8x128xbf16>, vector<128x384xbf16>, vector<8x384xf32> -> vector<8x384xf32>
    %117 = vector.broadcast %17 : vector<1x384xf32> to vector<8x384xf32>
    %118 = arith.addf %116, %117 : vector<8x384xf32>
    %119 = vector.extract_strided_slice %114 {offsets = [0, 0], sizes = [8, 128], strides = [1, 1]} : vector<8x384xf32> to vector<8x128xf32>
    %120 = vector.extract_strided_slice %114 {offsets = [0, 128], sizes = [8, 128], strides = [1, 1]} : vector<8x384xf32> to vector<8x128xf32>
    %121 = vector.extract_strided_slice %114 {offsets = [0, 256], sizes = [8, 128], strides = [1, 1]} : vector<8x384xf32> to vector<8x128xf32>
    %122 = vector.extract_strided_slice %118 {offsets = [0, 0], sizes = [8, 128], strides = [1, 1]} : vector<8x384xf32> to vector<8x128xf32>
    %123 = vector.extract_strided_slice %118 {offsets = [0, 128], sizes = [8, 128], strides = [1, 1]} : vector<8x384xf32> to vector<8x128xf32>
    %124 = vector.extract_strided_slice %118 {offsets = [0, 256], sizes = [8, 128], strides = [1, 1]} : vector<8x384xf32> to vector<8x128xf32>
    %125 = arith.addf %119, %122 : vector<8x128xf32>
    %126 = arith.negf %125 : vector<8x128xf32>
    %127 = math.exp %126 : vector<8x128xf32>
    %cst_35 = arith.constant 1.000000e+00 : f32
    %128 = vector.broadcast %cst_35 : f32 to vector<8x128xf32>
    %129 = arith.addf %128, %127 : vector<8x128xf32>
    %130 = arith.divf %128, %129 : vector<8x128xf32>
    %131 = arith.addf %120, %123 : vector<8x128xf32>
    %132 = arith.negf %131 : vector<8x128xf32>
    %133 = math.exp %132 : vector<8x128xf32>
    %cst_36 = arith.constant 1.000000e+00 : f32
    %134 = vector.broadcast %cst_36 : f32 to vector<8x128xf32>
    %135 = arith.addf %134, %133 : vector<8x128xf32>
    %136 = arith.divf %134, %135 : vector<8x128xf32>
    %137 = arith.mulf %130, %124 : vector<8x128xf32>
    %138 = arith.addf %121, %137 : vector<8x128xf32>
    %139 = math.tanh %138 : vector<8x128xf32>
    %cst_37 = arith.constant 1.000000e+00 : f32
    %140 = vector.broadcast %cst_37 : f32 to vector<8x128xf32>
    %141 = arith.subf %140, %136 : vector<8x128xf32>
    %142 = arith.mulf %141, %139 : vector<8x128xf32>
    %143 = arith.mulf %136, %112 : vector<8x128xf32>
    %144 = arith.addf %142, %143 : vector<8x128xf32>
    %c24 = arith.constant 24 : index
    %c0_38 = arith.constant 0 : index
    %145 = vector.load %arg10[%c24, %c0_38] : memref<64x128xf32, #tpu.memory_space<vmem>>, vector<8x128xf32>
    tpu.vector_store %arg10[%c24, %c0_38], %144 {strides = array<i32>} : memref<64x128xf32, #tpu.memory_space<vmem>>, vector<8x128xf32>,
    %146 = vector.extract_strided_slice %11 {offsets = [32, 0], sizes = [8, 384], strides = [1, 1]} : vector<64x384xf32> to vector<8x384xf32>
    %147 = arith.truncf %144 : vector<8x128xf32> to vector<8x128xbf16>
    %cst_39 = arith.constant dense<0.000000e+00> : vector<8x384xf32>
    %148 = tpu.matmul %147, %15, %cst_39 {dimension_numbers = #tpu.dot_dimension_numbers<[1], [0], [0], [1], [0, 0, 1, 1], [], []>} : vector<8x128xbf16>, vector<128x384xbf16>, vector<8x384xf32> -> vector<8x384xf32>
    %149 = vector.broadcast %17 : vector<1x384xf32> to vector<8x384xf32>
    %150 = arith.addf %148, %149 : vector<8x384xf32>
    %151 = vector.extract_strided_slice %146 {offsets = [0, 0], sizes = [8, 128], strides = [1, 1]} : vector<8x384xf32> to vector<8x128xf32>
    %152 = vector.extract_strided_slice %146 {offsets = [0, 128], sizes = [8, 128], strides = [1, 1]} : vector<8x384xf32> to vector<8x128xf32>
    %153 = vector.extract_strided_slice %146 {offsets = [0, 256], sizes = [8, 128], strides = [1, 1]} : vector<8x384xf32> to vector<8x128xf32>
    %154 = vector.extract_strided_slice %150 {offsets = [0, 0], sizes = [8, 128], strides = [1, 1]} : vector<8x384xf32> to vector<8x128xf32>
    %155 = vector.extract_strided_slice %150 {offsets = [0, 128], sizes = [8, 128], strides = [1, 1]} : vector<8x384xf32> to vector<8x128xf32>
    %156 = vector.extract_strided_slice %150 {offsets = [0, 256], sizes = [8, 128], strides = [1, 1]} : vector<8x384xf32> to vector<8x128xf32>
    %157 = arith.addf %151, %154 : vector<8x128xf32>
    %158 = arith.negf %157 : vector<8x128xf32>
    %159 = math.exp %158 : vector<8x128xf32>
    %cst_40 = arith.constant 1.000000e+00 : f32
    %160 = vector.broadcast %cst_40 : f32 to vector<8x128xf32>
    %161 = arith.addf %160, %159 : vector<8x128xf32>
    %162 = arith.divf %160, %161 : vector<8x128xf32>
    %163 = arith.addf %152, %155 : vector<8x128xf32>
    %164 = arith.negf %163 : vector<8x128xf32>
    %165 = math.exp %164 : vector<8x128xf32>
    %cst_41 = arith.constant 1.000000e+00 : f32
    %166 = vector.broadcast %cst_41 : f32 to vector<8x128xf32>
    %167 = arith.addf %166, %165 : vector<8x128xf32>
    %168 = arith.divf %166, %167 : vector<8x128xf32>
    %169 = arith.mulf %162, %156 : vector<8x128xf32>
    %170 = arith.addf %153, %169 : vector<8x128xf32>
    %171 = math.tanh %170 : vector<8x128xf32>
    %cst_42 = arith.constant 1.000000e+00 : f32
    %172 = vector.broadcast %cst_42 : f32 to vector<8x128xf32>
    %173 = arith.subf %172, %168 : vector<8x128xf32>
    %174 = arith.mulf %173, %171 : vector<8x128xf32>
    %175 = arith.mulf %168, %144 : vector<8x128xf32>
    %176 = arith.addf %174, %175 : vector<8x128xf32>
    %c32 = arith.constant 32 : index
    %c0_43 = arith.constant 0 : index
    %177 = vector.load %arg10[%c32, %c0_43] : memref<64x128xf32, #tpu.memory_space<vmem>>, vector<8x128xf32>
    tpu.vector_store %arg10[%c32, %c0_43], %176 {strides = array<i32>} : memref<64x128xf32, #tpu.memory_space<vmem>>, vector<8x128xf32>,
    %178 = vector.extract_strided_slice %11 {offsets = [40, 0], sizes = [8, 384], strides = [1, 1]} : vector<64x384xf32> to vector<8x384xf32>
    %179 = arith.truncf %176 : vector<8x128xf32> to vector<8x128xbf16>
    %cst_44 = arith.constant dense<0.000000e+00> : vector<8x384xf32>
    %180 = tpu.matmul %179, %15, %cst_44 {dimension_numbers = #tpu.dot_dimension_numbers<[1], [0], [0], [1], [0, 0, 1, 1], [], []>} : vector<8x128xbf16>, vector<128x384xbf16>, vector<8x384xf32> -> vector<8x384xf32>
    %181 = vector.broadcast %17 : vector<1x384xf32> to vector<8x384xf32>
    %182 = arith.addf %180, %181 : vector<8x384xf32>
    %183 = vector.extract_strided_slice %178 {offsets = [0, 0], sizes = [8, 128], strides = [1, 1]} : vector<8x384xf32> to vector<8x128xf32>
    %184 = vector.extract_strided_slice %178 {offsets = [0, 128], sizes = [8, 128], strides = [1, 1]} : vector<8x384xf32> to vector<8x128xf32>
    %185 = vector.extract_strided_slice %178 {offsets = [0, 256], sizes = [8, 128], strides = [1, 1]} : vector<8x384xf32> to vector<8x128xf32>
    %186 = vector.extract_strided_slice %182 {offsets = [0, 0], sizes = [8, 128], strides = [1, 1]} : vector<8x384xf32> to vector<8x128xf32>
    %187 = vector.extract_strided_slice %182 {offsets = [0, 128], sizes = [8, 128], strides = [1, 1]} : vector<8x384xf32> to vector<8x128xf32>
    %188 = vector.extract_strided_slice %182 {offsets = [0, 256], sizes = [8, 128], strides = [1, 1]} : vector<8x384xf32> to vector<8x128xf32>
    %189 = arith.addf %183, %186 : vector<8x128xf32>
    %190 = arith.negf %189 : vector<8x128xf32>
    %191 = math.exp %190 : vector<8x128xf32>
    %cst_45 = arith.constant 1.000000e+00 : f32
    %192 = vector.broadcast %cst_45 : f32 to vector<8x128xf32>
    %193 = arith.addf %192, %191 : vector<8x128xf32>
    %194 = arith.divf %192, %193 : vector<8x128xf32>
    %195 = arith.addf %184, %187 : vector<8x128xf32>
    %196 = arith.negf %195 : vector<8x128xf32>
    %197 = math.exp %196 : vector<8x128xf32>
    %cst_46 = arith.constant 1.000000e+00 : f32
    %198 = vector.broadcast %cst_46 : f32 to vector<8x128xf32>
    %199 = arith.addf %198, %197 : vector<8x128xf32>
    %200 = arith.divf %198, %199 : vector<8x128xf32>
    %201 = arith.mulf %194, %188 : vector<8x128xf32>
    %202 = arith.addf %185, %201 : vector<8x128xf32>
    %203 = math.tanh %202 : vector<8x128xf32>
    %cst_47 = arith.constant 1.000000e+00 : f32
    %204 = vector.broadcast %cst_47 : f32 to vector<8x128xf32>
    %205 = arith.subf %204, %200 : vector<8x128xf32>
    %206 = arith.mulf %205, %203 : vector<8x128xf32>
    %207 = arith.mulf %200, %176 : vector<8x128xf32>
    %208 = arith.addf %206, %207 : vector<8x128xf32>
    %c40 = arith.constant 40 : index
    %c0_48 = arith.constant 0 : index
    %209 = vector.load %arg10[%c40, %c0_48] : memref<64x128xf32, #tpu.memory_space<vmem>>, vector<8x128xf32>
    tpu.vector_store %arg10[%c40, %c0_48], %208 {strides = array<i32>} : memref<64x128xf32, #tpu.memory_space<vmem>>, vector<8x128xf32>,
    %210 = vector.extract_strided_slice %11 {offsets = [48, 0], sizes = [8, 384], strides = [1, 1]} : vector<64x384xf32> to vector<8x384xf32>
    %211 = arith.truncf %208 : vector<8x128xf32> to vector<8x128xbf16>
    %cst_49 = arith.constant dense<0.000000e+00> : vector<8x384xf32>
    %212 = tpu.matmul %211, %15, %cst_49 {dimension_numbers = #tpu.dot_dimension_numbers<[1], [0], [0], [1], [0, 0, 1, 1], [], []>} : vector<8x128xbf16>, vector<128x384xbf16>, vector<8x384xf32> -> vector<8x384xf32>
    %213 = vector.broadcast %17 : vector<1x384xf32> to vector<8x384xf32>
    %214 = arith.addf %212, %213 : vector<8x384xf32>
    %215 = vector.extract_strided_slice %210 {offsets = [0, 0], sizes = [8, 128], strides = [1, 1]} : vector<8x384xf32> to vector<8x128xf32>
    %216 = vector.extract_strided_slice %210 {offsets = [0, 128], sizes = [8, 128], strides = [1, 1]} : vector<8x384xf32> to vector<8x128xf32>
    %217 = vector.extract_strided_slice %210 {offsets = [0, 256], sizes = [8, 128], strides = [1, 1]} : vector<8x384xf32> to vector<8x128xf32>
    %218 = vector.extract_strided_slice %214 {offsets = [0, 0], sizes = [8, 128], strides = [1, 1]} : vector<8x384xf32> to vector<8x128xf32>
    %219 = vector.extract_strided_slice %214 {offsets = [0, 128], sizes = [8, 128], strides = [1, 1]} : vector<8x384xf32> to vector<8x128xf32>
    %220 = vector.extract_strided_slice %214 {offsets = [0, 256], sizes = [8, 128], strides = [1, 1]} : vector<8x384xf32> to vector<8x128xf32>
    %221 = arith.addf %215, %218 : vector<8x128xf32>
    %222 = arith.negf %221 : vector<8x128xf32>
    %223 = math.exp %222 : vector<8x128xf32>
    %cst_50 = arith.constant 1.000000e+00 : f32
    %224 = vector.broadcast %cst_50 : f32 to vector<8x128xf32>
    %225 = arith.addf %224, %223 : vector<8x128xf32>
    %226 = arith.divf %224, %225 : vector<8x128xf32>
    %227 = arith.addf %216, %219 : vector<8x128xf32>
    %228 = arith.negf %227 : vector<8x128xf32>
    %229 = math.exp %228 : vector<8x128xf32>
    %cst_51 = arith.constant 1.000000e+00 : f32
    %230 = vector.broadcast %cst_51 : f32 to vector<8x128xf32>
    %231 = arith.addf %230, %229 : vector<8x128xf32>
    %232 = arith.divf %230, %231 : vector<8x128xf32>
    %233 = arith.mulf %226, %220 : vector<8x128xf32>
    %234 = arith.addf %217, %233 : vector<8x128xf32>
    %235 = math.tanh %234 : vector<8x128xf32>
    %cst_52 = arith.constant 1.000000e+00 : f32
    %236 = vector.broadcast %cst_52 : f32 to vector<8x128xf32>
    %237 = arith.subf %236, %232 : vector<8x128xf32>
    %238 = arith.mulf %237, %235 : vector<8x128xf32>
    %239 = arith.mulf %232, %208 : vector<8x128xf32>
    %240 = arith.addf %238, %239 : vector<8x128xf32>
    %c48 = arith.constant 48 : index
    %c0_53 = arith.constant 0 : index
    %241 = vector.load %arg10[%c48, %c0_53] : memref<64x128xf32, #tpu.memory_space<vmem>>, vector<8x128xf32>
    tpu.vector_store %arg10[%c48, %c0_53], %240 {strides = array<i32>} : memref<64x128xf32, #tpu.memory_space<vmem>>, vector<8x128xf32>,
    %242 = vector.extract_strided_slice %11 {offsets = [56, 0], sizes = [8, 384], strides = [1, 1]} : vector<64x384xf32> to vector<8x384xf32>
    %243 = arith.truncf %240 : vector<8x128xf32> to vector<8x128xbf16>
    %cst_54 = arith.constant dense<0.000000e+00> : vector<8x384xf32>
    %244 = tpu.matmul %243, %15, %cst_54 {dimension_numbers = #tpu.dot_dimension_numbers<[1], [0], [0], [1], [0, 0, 1, 1], [], []>} : vector<8x128xbf16>, vector<128x384xbf16>, vector<8x384xf32> -> vector<8x384xf32>
    %245 = vector.broadcast %17 : vector<1x384xf32> to vector<8x384xf32>
    %246 = arith.addf %244, %245 : vector<8x384xf32>
    %247 = vector.extract_strided_slice %242 {offsets = [0, 0], sizes = [8, 128], strides = [1, 1]} : vector<8x384xf32> to vector<8x128xf32>
    %248 = vector.extract_strided_slice %242 {offsets = [0, 128], sizes = [8, 128], strides = [1, 1]} : vector<8x384xf32> to vector<8x128xf32>
    %249 = vector.extract_strided_slice %242 {offsets = [0, 256], sizes = [8, 128], strides = [1, 1]} : vector<8x384xf32> to vector<8x128xf32>
    %250 = vector.extract_strided_slice %246 {offsets = [0, 0], sizes = [8, 128], strides = [1, 1]} : vector<8x384xf32> to vector<8x128xf32>
    %251 = vector.extract_strided_slice %246 {offsets = [0, 128], sizes = [8, 128], strides = [1, 1]} : vector<8x384xf32> to vector<8x128xf32>
    %252 = vector.extract_strided_slice %246 {offsets = [0, 256], sizes = [8, 128], strides = [1, 1]} : vector<8x384xf32> to vector<8x128xf32>
    %253 = arith.addf %247, %250 : vector<8x128xf32>
    %254 = arith.negf %253 : vector<8x128xf32>
    %255 = math.exp %254 : vector<8x128xf32>
    %cst_55 = arith.constant 1.000000e+00 : f32
    %256 = vector.broadcast %cst_55 : f32 to vector<8x128xf32>
    %257 = arith.addf %256, %255 : vector<8x128xf32>
    %258 = arith.divf %256, %257 : vector<8x128xf32>
    %259 = arith.addf %248, %251 : vector<8x128xf32>
    %260 = arith.negf %259 : vector<8x128xf32>
    %261 = math.exp %260 : vector<8x128xf32>
    %cst_56 = arith.constant 1.000000e+00 : f32
    %262 = vector.broadcast %cst_56 : f32 to vector<8x128xf32>
    %263 = arith.addf %262, %261 : vector<8x128xf32>
    %264 = arith.divf %262, %263 : vector<8x128xf32>
    %265 = arith.mulf %258, %252 : vector<8x128xf32>
    %266 = arith.addf %249, %265 : vector<8x128xf32>
    %267 = math.tanh %266 : vector<8x128xf32>
    %cst_57 = arith.constant 1.000000e+00 : f32
    %268 = vector.broadcast %cst_57 : f32 to vector<8x128xf32>
    %269 = arith.subf %268, %264 : vector<8x128xf32>
    %270 = arith.mulf %269, %267 : vector<8x128xf32>
    %271 = arith.mulf %264, %240 : vector<8x128xf32>
    %272 = arith.addf %270, %271 : vector<8x128xf32>
    %c56 = arith.constant 56 : index
    %c0_58 = arith.constant 0 : index
    %273 = vector.load %arg10[%c56, %c0_58] : memref<64x128xf32, #tpu.memory_space<vmem>>, vector<8x128xf32>
    tpu.vector_store %arg10[%c56, %c0_58], %272 {strides = array<i32>} : memref<64x128xf32, #tpu.memory_space<vmem>>, vector<8x128xf32>,
    %c0_59 = arith.constant 0 : index
    %c0_60 = arith.constant 0 : index
    %c0_61 = arith.constant 0 : index
    %274 = vector.load %arg9[%c0_59, %c0_60, %c0_61] : memref<2x8x128xf32, #tpu.memory_space<vmem>>, vector<1x8x128xf32>
    %275 = vector.shape_cast %274 : vector<1x8x128xf32> to vector<8x128xf32>
    %276 = vector.shape_cast %272 : vector<8x128xf32> to vector<1x8x128xf32>
    tpu.vector_store %arg9[%c0_59, %c0_60, %c0_61], %276 {strides = array<i32>} : memref<2x8x128xf32, #tpu.memory_space<vmem>>, vector<1x8x128xf32>,
    %c0_62 = arith.constant 0 : index
    %c0_63 = arith.constant 0 : index
    %277 = vector.load %arg10[%c0_62, %c0_63] : memref<64x128xf32, #tpu.memory_space<vmem>>, vector<64x128xf32>
    %278 = arith.truncf %277 : vector<64x128xf32> to vector<64x128xbf16>
    %c1 = arith.constant 1 : index
    %c0_64 = arith.constant 0 : index
    %c0_65 = arith.constant 0 : index
    %279 = vector.load %arg3[%c1, %c0_64, %c0_65] : memref<2x128x384xbf16, #tpu.memory_space<vmem>>, vector<1x128x384xbf16>
    %280 = vector.shape_cast %279 : vector<1x128x384xbf16> to vector<128x384xbf16>
    %cst_66 = arith.constant dense<0.000000e+00> : vector<64x384xf32>
    %281 = tpu.matmul %278, %280, %cst_66 {dimension_numbers = #tpu.dot_dimension_numbers<[1], [0], [0], [1], [0, 0, 1, 1], [], []>} : vector<64x128xbf16>, vector<128x384xbf16>, vector<64x384xf32> -> vector<64x384xf32>
    %c1_67 = arith.constant 1 : index
    %c0_68 = arith.constant 0 : index
    %c0_69 = arith.constant 0 : index
    %282 = vector.load %arg5[%c1_67, %c0_68, %c0_69] : memref<2x1x384xf32, #tpu.memory_space<vmem>>, vector<1x1x384xf32>
    %283 = vector.shape_cast %282 : vector<1x1x384xf32> to vector<1x384xf32>
    %284 = vector.broadcast %283 : vector<1x384xf32> to vector<64x384xf32>
    %285 = arith.addf %281, %284 : vector<64x384xf32>
    %c1_70 = arith.constant 1 : index
    %c0_71 = arith.constant 0 : index
    %c0_72 = arith.constant 0 : index
    %286 = vector.load %arg9[%c1_70, %c0_71, %c0_72] : memref<2x8x128xf32, #tpu.memory_space<vmem>>, vector<1x8x128xf32>
    %287 = vector.shape_cast %286 : vector<1x8x128xf32> to vector<8x128xf32>
    %c1_73 = arith.constant 1 : index
    %c0_74 = arith.constant 0 : index
    %c0_75 = arith.constant 0 : index
    %288 = vector.load %arg4[%c1_73, %c0_74, %c0_75] : memref<2x128x384xbf16, #tpu.memory_space<vmem>>, vector<1x128x384xbf16>
    %289 = vector.shape_cast %288 : vector<1x128x384xbf16> to vector<128x384xbf16>
    %c1_76 = arith.constant 1 : index
    %c0_77 = arith.constant 0 : index
    %c0_78 = arith.constant 0 : index
    %290 = vector.load %arg6[%c1_76, %c0_77, %c0_78] : memref<2x1x384xf32, #tpu.memory_space<vmem>>, vector<1x1x384xf32>
    %291 = vector.shape_cast %290 : vector<1x1x384xf32> to vector<1x384xf32>
    %292 = vector.extract_strided_slice %285 {offsets = [0, 0], sizes = [8, 384], strides = [1, 1]} : vector<64x384xf32> to vector<8x384xf32>
    %293 = arith.truncf %287 : vector<8x128xf32> to vector<8x128xbf16>
    %cst_79 = arith.constant dense<0.000000e+00> : vector<8x384xf32>
    %294 = tpu.matmul %293, %289, %cst_79 {dimension_numbers = #tpu.dot_dimension_numbers<[1], [0], [0], [1], [0, 0, 1, 1], [], []>} : vector<8x128xbf16>, vector<128x384xbf16>, vector<8x384xf32> -> vector<8x384xf32>
    %295 = vector.broadcast %291 : vector<1x384xf32> to vector<8x384xf32>
    %296 = arith.addf %294, %295 : vector<8x384xf32>
    %297 = vector.extract_strided_slice %292 {offsets = [0, 0], sizes = [8, 128], strides = [1, 1]} : vector<8x384xf32> to vector<8x128xf32>
    %298 = vector.extract_strided_slice %292 {offsets = [0, 128], sizes = [8, 128], strides = [1, 1]} : vector<8x384xf32> to vector<8x128xf32>
    %299 = vector.extract_strided_slice %292 {offsets = [0, 256], sizes = [8, 128], strides = [1, 1]} : vector<8x384xf32> to vector<8x128xf32>
    %300 = vector.extract_strided_slice %296 {offsets = [0, 0], sizes = [8, 128], strides = [1, 1]} : vector<8x384xf32> to vector<8x128xf32>
    %301 = vector.extract_strided_slice %296 {offsets = [0, 128], sizes = [8, 128], strides = [1, 1]} : vector<8x384xf32> to vector<8x128xf32>
    %302 = vector.extract_strided_slice %296 {offsets = [0, 256], sizes = [8, 128], strides = [1, 1]} : vector<8x384xf32> to vector<8x128xf32>
    %303 = arith.addf %297, %300 : vector<8x128xf32>
    %304 = arith.negf %303 : vector<8x128xf32>
    %305 = math.exp %304 : vector<8x128xf32>
    %cst_80 = arith.constant 1.000000e+00 : f32
    %306 = vector.broadcast %cst_80 : f32 to vector<8x128xf32>
    %307 = arith.addf %306, %305 : vector<8x128xf32>
    %308 = arith.divf %306, %307 : vector<8x128xf32>
    %309 = arith.addf %298, %301 : vector<8x128xf32>
    %310 = arith.negf %309 : vector<8x128xf32>
    %311 = math.exp %310 : vector<8x128xf32>
    %cst_81 = arith.constant 1.000000e+00 : f32
    %312 = vector.broadcast %cst_81 : f32 to vector<8x128xf32>
    %313 = arith.addf %312, %311 : vector<8x128xf32>
    %314 = arith.divf %312, %313 : vector<8x128xf32>
    %315 = arith.mulf %308, %302 : vector<8x128xf32>
    %316 = arith.addf %299, %315 : vector<8x128xf32>
    %317 = math.tanh %316 : vector<8x128xf32>
    %cst_82 = arith.constant 1.000000e+00 : f32
    %318 = vector.broadcast %cst_82 : f32 to vector<8x128xf32>
    %319 = arith.subf %318, %314 : vector<8x128xf32>
    %320 = arith.mulf %319, %317 : vector<8x128xf32>
    %321 = arith.mulf %314, %287 : vector<8x128xf32>
    %322 = arith.addf %320, %321 : vector<8x128xf32>
    %c0_83 = arith.constant 0 : index
    %c0_84 = arith.constant 0 : index
    %c0_85 = arith.constant 0 : index
    %323 = vector.load %arg7[%c0_83, %c0_84, %c0_85] : memref<8x8x128xf32, #tpu.memory_space<vmem>>, vector<1x8x128xf32>
    %324 = vector.shape_cast %323 : vector<1x8x128xf32> to vector<8x128xf32>
    %325 = vector.shape_cast %322 : vector<8x128xf32> to vector<1x8x128xf32>
    tpu.vector_store %arg7[%c0_83, %c0_84, %c0_85], %325 {strides = array<i32>} : memref<8x8x128xf32, #tpu.memory_space<vmem>>, vector<1x8x128xf32>,
    %326 = vector.extract_strided_slice %285 {offsets = [8, 0], sizes = [8, 384], strides = [1, 1]} : vector<64x384xf32> to vector<8x384xf32>
    %327 = arith.truncf %322 : vector<8x128xf32> to vector<8x128xbf16>
    %cst_86 = arith.constant dense<0.000000e+00> : vector<8x384xf32>
    %328 = tpu.matmul %327, %289, %cst_86 {dimension_numbers = #tpu.dot_dimension_numbers<[1], [0], [0], [1], [0, 0, 1, 1], [], []>} : vector<8x128xbf16>, vector<128x384xbf16>, vector<8x384xf32> -> vector<8x384xf32>
    %329 = vector.broadcast %291 : vector<1x384xf32> to vector<8x384xf32>
    %330 = arith.addf %328, %329 : vector<8x384xf32>
    %331 = vector.extract_strided_slice %326 {offsets = [0, 0], sizes = [8, 128], strides = [1, 1]} : vector<8x384xf32> to vector<8x128xf32>
    %332 = vector.extract_strided_slice %326 {offsets = [0, 128], sizes = [8, 128], strides = [1, 1]} : vector<8x384xf32> to vector<8x128xf32>
    %333 = vector.extract_strided_slice %326 {offsets = [0, 256], sizes = [8, 128], strides = [1, 1]} : vector<8x384xf32> to vector<8x128xf32>
    %334 = vector.extract_strided_slice %330 {offsets = [0, 0], sizes = [8, 128], strides = [1, 1]} : vector<8x384xf32> to vector<8x128xf32>
    %335 = vector.extract_strided_slice %330 {offsets = [0, 128], sizes = [8, 128], strides = [1, 1]} : vector<8x384xf32> to vector<8x128xf32>
    %336 = vector.extract_strided_slice %330 {offsets = [0, 256], sizes = [8, 128], strides = [1, 1]} : vector<8x384xf32> to vector<8x128xf32>
    %337 = arith.addf %331, %334 : vector<8x128xf32>
    %338 = arith.negf %337 : vector<8x128xf32>
    %339 = math.exp %338 : vector<8x128xf32>
    %cst_87 = arith.constant 1.000000e+00 : f32
    %340 = vector.broadcast %cst_87 : f32 to vector<8x128xf32>
    %341 = arith.addf %340, %339 : vector<8x128xf32>
    %342 = arith.divf %340, %341 : vector<8x128xf32>
    %343 = arith.addf %332, %335 : vector<8x128xf32>
    %344 = arith.negf %343 : vector<8x128xf32>
    %345 = math.exp %344 : vector<8x128xf32>
    %cst_88 = arith.constant 1.000000e+00 : f32
    %346 = vector.broadcast %cst_88 : f32 to vector<8x128xf32>
    %347 = arith.addf %346, %345 : vector<8x128xf32>
    %348 = arith.divf %346, %347 : vector<8x128xf32>
    %349 = arith.mulf %342, %336 : vector<8x128xf32>
    %350 = arith.addf %333, %349 : vector<8x128xf32>
    %351 = math.tanh %350 : vector<8x128xf32>
    %cst_89 = arith.constant 1.000000e+00 : f32
    %352 = vector.broadcast %cst_89 : f32 to vector<8x128xf32>
    %353 = arith.subf %352, %348 : vector<8x128xf32>
    %354 = arith.mulf %353, %351 : vector<8x128xf32>
    %355 = arith.mulf %348, %322 : vector<8x128xf32>
    %356 = arith.addf %354, %355 : vector<8x128xf32>
    %c1_90 = arith.constant 1 : index
    %c0_91 = arith.constant 0 : index
    %c0_92 = arith.constant 0 : index
    %357 = vector.load %arg7[%c1_90, %c0_91, %c0_92] : memref<8x8x128xf32, #tpu.memory_space<vmem>>, vector<1x8x128xf32>
    %358 = vector.shape_cast %357 : vector<1x8x128xf32> to vector<8x128xf32>
    %359 = vector.shape_cast %356 : vector<8x128xf32> to vector<1x8x128xf32>
    tpu.vector_store %arg7[%c1_90, %c0_91, %c0_92], %359 {strides = array<i32>} : memref<8x8x128xf32, #tpu.memory_space<vmem>>, vector<1x8x128xf32>,
    %360 = vector.extract_strided_slice %285 {offsets = [16, 0], sizes = [8, 384], strides = [1, 1]} : vector<64x384xf32> to vector<8x384xf32>
    %361 = arith.truncf %356 : vector<8x128xf32> to vector<8x128xbf16>
    %cst_93 = arith.constant dense<0.000000e+00> : vector<8x384xf32>
    %362 = tpu.matmul %361, %289, %cst_93 {dimension_numbers = #tpu.dot_dimension_numbers<[1], [0], [0], [1], [0, 0, 1, 1], [], []>} : vector<8x128xbf16>, vector<128x384xbf16>, vector<8x384xf32> -> vector<8x384xf32>
    %363 = vector.broadcast %291 : vector<1x384xf32> to vector<8x384xf32>
    %364 = arith.addf %362, %363 : vector<8x384xf32>
    %365 = vector.extract_strided_slice %360 {offsets = [0, 0], sizes = [8, 128], strides = [1, 1]} : vector<8x384xf32> to vector<8x128xf32>
    %366 = vector.extract_strided_slice %360 {offsets = [0, 128], sizes = [8, 128], strides = [1, 1]} : vector<8x384xf32> to vector<8x128xf32>
    %367 = vector.extract_strided_slice %360 {offsets = [0, 256], sizes = [8, 128], strides = [1, 1]} : vector<8x384xf32> to vector<8x128xf32>
    %368 = vector.extract_strided_slice %364 {offsets = [0, 0], sizes = [8, 128], strides = [1, 1]} : vector<8x384xf32> to vector<8x128xf32>
    %369 = vector.extract_strided_slice %364 {offsets = [0, 128], sizes = [8, 128], strides = [1, 1]} : vector<8x384xf32> to vector<8x128xf32>
    %370 = vector.extract_strided_slice %364 {offsets = [0, 256], sizes = [8, 128], strides = [1, 1]} : vector<8x384xf32> to vector<8x128xf32>
    %371 = arith.addf %365, %368 : vector<8x128xf32>
    %372 = arith.negf %371 : vector<8x128xf32>
    %373 = math.exp %372 : vector<8x128xf32>
    %cst_94 = arith.constant 1.000000e+00 : f32
    %374 = vector.broadcast %cst_94 : f32 to vector<8x128xf32>
    %375 = arith.addf %374, %373 : vector<8x128xf32>
    %376 = arith.divf %374, %375 : vector<8x128xf32>
    %377 = arith.addf %366, %369 : vector<8x128xf32>
    %378 = arith.negf %377 : vector<8x128xf32>
    %379 = math.exp %378 : vector<8x128xf32>
    %cst_95 = arith.constant 1.000000e+00 : f32
    %380 = vector.broadcast %cst_95 : f32 to vector<8x128xf32>
    %381 = arith.addf %380, %379 : vector<8x128xf32>
    %382 = arith.divf %380, %381 : vector<8x128xf32>
    %383 = arith.mulf %376, %370 : vector<8x128xf32>
    %384 = arith.addf %367, %383 : vector<8x128xf32>
    %385 = math.tanh %384 : vector<8x128xf32>
    %cst_96 = arith.constant 1.000000e+00 : f32
    %386 = vector.broadcast %cst_96 : f32 to vector<8x128xf32>
    %387 = arith.subf %386, %382 : vector<8x128xf32>
    %388 = arith.mulf %387, %385 : vector<8x128xf32>
    %389 = arith.mulf %382, %356 : vector<8x128xf32>
    %390 = arith.addf %388, %389 : vector<8x128xf32>
    %c2 = arith.constant 2 : index
    %c0_97 = arith.constant 0 : index
    %c0_98 = arith.constant 0 : index
    %391 = vector.load %arg7[%c2, %c0_97, %c0_98] : memref<8x8x128xf32, #tpu.memory_space<vmem>>, vector<1x8x128xf32>
    %392 = vector.shape_cast %391 : vector<1x8x128xf32> to vector<8x128xf32>
    %393 = vector.shape_cast %390 : vector<8x128xf32> to vector<1x8x128xf32>
    tpu.vector_store %arg7[%c2, %c0_97, %c0_98], %393 {strides = array<i32>} : memref<8x8x128xf32, #tpu.memory_space<vmem>>, vector<1x8x128xf32>,
    %394 = vector.extract_strided_slice %285 {offsets = [24, 0], sizes = [8, 384], strides = [1, 1]} : vector<64x384xf32> to vector<8x384xf32>
    %395 = arith.truncf %390 : vector<8x128xf32> to vector<8x128xbf16>
    %cst_99 = arith.constant dense<0.000000e+00> : vector<8x384xf32>
    %396 = tpu.matmul %395, %289, %cst_99 {dimension_numbers = #tpu.dot_dimension_numbers<[1], [0], [0], [1], [0, 0, 1, 1], [], []>} : vector<8x128xbf16>, vector<128x384xbf16>, vector<8x384xf32> -> vector<8x384xf32>
    %397 = vector.broadcast %291 : vector<1x384xf32> to vector<8x384xf32>
    %398 = arith.addf %396, %397 : vector<8x384xf32>
    %399 = vector.extract_strided_slice %394 {offsets = [0, 0], sizes = [8, 128], strides = [1, 1]} : vector<8x384xf32> to vector<8x128xf32>
    %400 = vector.extract_strided_slice %394 {offsets = [0, 128], sizes = [8, 128], strides = [1, 1]} : vector<8x384xf32> to vector<8x128xf32>
    %401 = vector.extract_strided_slice %394 {offsets = [0, 256], sizes = [8, 128], strides = [1, 1]} : vector<8x384xf32> to vector<8x128xf32>
    %402 = vector.extract_strided_slice %398 {offsets = [0, 0], sizes = [8, 128], strides = [1, 1]} : vector<8x384xf32> to vector<8x128xf32>
    %403 = vector.extract_strided_slice %398 {offsets = [0, 128], sizes = [8, 128], strides = [1, 1]} : vector<8x384xf32> to vector<8x128xf32>
    %404 = vector.extract_strided_slice %398 {offsets = [0, 256], sizes = [8, 128], strides = [1, 1]} : vector<8x384xf32> to vector<8x128xf32>
    %405 = arith.addf %399, %402 : vector<8x128xf32>
    %406 = arith.negf %405 : vector<8x128xf32>
    %407 = math.exp %406 : vector<8x128xf32>
    %cst_100 = arith.constant 1.000000e+00 : f32
    %408 = vector.broadcast %cst_100 : f32 to vector<8x128xf32>
    %409 = arith.addf %408, %407 : vector<8x128xf32>
    %410 = arith.divf %408, %409 : vector<8x128xf32>
    %411 = arith.addf %400, %403 : vector<8x128xf32>
    %412 = arith.negf %411 : vector<8x128xf32>
    %413 = math.exp %412 : vector<8x128xf32>
    %cst_101 = arith.constant 1.000000e+00 : f32
    %414 = vector.broadcast %cst_101 : f32 to vector<8x128xf32>
    %415 = arith.addf %414, %413 : vector<8x128xf32>
    %416 = arith.divf %414, %415 : vector<8x128xf32>
    %417 = arith.mulf %410, %404 : vector<8x128xf32>
    %418 = arith.addf %401, %417 : vector<8x128xf32>
    %419 = math.tanh %418 : vector<8x128xf32>
    %cst_102 = arith.constant 1.000000e+00 : f32
    %420 = vector.broadcast %cst_102 : f32 to vector<8x128xf32>
    %421 = arith.subf %420, %416 : vector<8x128xf32>
    %422 = arith.mulf %421, %419 : vector<8x128xf32>
    %423 = arith.mulf %416, %390 : vector<8x128xf32>
    %424 = arith.addf %422, %423 : vector<8x128xf32>
    %c3 = arith.constant 3 : index
    %c0_103 = arith.constant 0 : index
    %c0_104 = arith.constant 0 : index
    %425 = vector.load %arg7[%c3, %c0_103, %c0_104] : memref<8x8x128xf32, #tpu.memory_space<vmem>>, vector<1x8x128xf32>
    %426 = vector.shape_cast %425 : vector<1x8x128xf32> to vector<8x128xf32>
    %427 = vector.shape_cast %424 : vector<8x128xf32> to vector<1x8x128xf32>
    tpu.vector_store %arg7[%c3, %c0_103, %c0_104], %427 {strides = array<i32>} : memref<8x8x128xf32, #tpu.memory_space<vmem>>, vector<1x8x128xf32>,
    %428 = vector.extract_strided_slice %285 {offsets = [32, 0], sizes = [8, 384], strides = [1, 1]} : vector<64x384xf32> to vector<8x384xf32>
    %429 = arith.truncf %424 : vector<8x128xf32> to vector<8x128xbf16>
    %cst_105 = arith.constant dense<0.000000e+00> : vector<8x384xf32>
    %430 = tpu.matmul %429, %289, %cst_105 {dimension_numbers = #tpu.dot_dimension_numbers<[1], [0], [0], [1], [0, 0, 1, 1], [], []>} : vector<8x128xbf16>, vector<128x384xbf16>, vector<8x384xf32> -> vector<8x384xf32>
    %431 = vector.broadcast %291 : vector<1x384xf32> to vector<8x384xf32>
    %432 = arith.addf %430, %431 : vector<8x384xf32>
    %433 = vector.extract_strided_slice %428 {offsets = [0, 0], sizes = [8, 128], strides = [1, 1]} : vector<8x384xf32> to vector<8x128xf32>
    %434 = vector.extract_strided_slice %428 {offsets = [0, 128], sizes = [8, 128], strides = [1, 1]} : vector<8x384xf32> to vector<8x128xf32>
    %435 = vector.extract_strided_slice %428 {offsets = [0, 256], sizes = [8, 128], strides = [1, 1]} : vector<8x384xf32> to vector<8x128xf32>
    %436 = vector.extract_strided_slice %432 {offsets = [0, 0], sizes = [8, 128], strides = [1, 1]} : vector<8x384xf32> to vector<8x128xf32>
    %437 = vector.extract_strided_slice %432 {offsets = [0, 128], sizes = [8, 128], strides = [1, 1]} : vector<8x384xf32> to vector<8x128xf32>
    %438 = vector.extract_strided_slice %432 {offsets = [0, 256], sizes = [8, 128], strides = [1, 1]} : vector<8x384xf32> to vector<8x128xf32>
    %439 = arith.addf %433, %436 : vector<8x128xf32>
    %440 = arith.negf %439 : vector<8x128xf32>
    %441 = math.exp %440 : vector<8x128xf32>
    %cst_106 = arith.constant 1.000000e+00 : f32
    %442 = vector.broadcast %cst_106 : f32 to vector<8x128xf32>
    %443 = arith.addf %442, %441 : vector<8x128xf32>
    %444 = arith.divf %442, %443 : vector<8x128xf32>
    %445 = arith.addf %434, %437 : vector<8x128xf32>
    %446 = arith.negf %445 : vector<8x128xf32>
    %447 = math.exp %446 : vector<8x128xf32>
    %cst_107 = arith.constant 1.000000e+00 : f32
    %448 = vector.broadcast %cst_107 : f32 to vector<8x128xf32>
    %449 = arith.addf %448, %447 : vector<8x128xf32>
    %450 = arith.divf %448, %449 : vector<8x128xf32>
    %451 = arith.mulf %444, %438 : vector<8x128xf32>
    %452 = arith.addf %435, %451 : vector<8x128xf32>
    %453 = math.tanh %452 : vector<8x128xf32>
    %cst_108 = arith.constant 1.000000e+00 : f32
    %454 = vector.broadcast %cst_108 : f32 to vector<8x128xf32>
    %455 = arith.subf %454, %450 : vector<8x128xf32>
    %456 = arith.mulf %455, %453 : vector<8x128xf32>
    %457 = arith.mulf %450, %424 : vector<8x128xf32>
    %458 = arith.addf %456, %457 : vector<8x128xf32>
    %c4 = arith.constant 4 : index
    %c0_109 = arith.constant 0 : index
    %c0_110 = arith.constant 0 : index
    %459 = vector.load %arg7[%c4, %c0_109, %c0_110] : memref<8x8x128xf32, #tpu.memory_space<vmem>>, vector<1x8x128xf32>
    %460 = vector.shape_cast %459 : vector<1x8x128xf32> to vector<8x128xf32>
    %461 = vector.shape_cast %458 : vector<8x128xf32> to vector<1x8x128xf32>
    tpu.vector_store %arg7[%c4, %c0_109, %c0_110], %461 {strides = array<i32>} : memref<8x8x128xf32, #tpu.memory_space<vmem>>, vector<1x8x128xf32>,
    %462 = vector.extract_strided_slice %285 {offsets = [40, 0], sizes = [8, 384], strides = [1, 1]} : vector<64x384xf32> to vector<8x384xf32>
    %463 = arith.truncf %458 : vector<8x128xf32> to vector<8x128xbf16>
    %cst_111 = arith.constant dense<0.000000e+00> : vector<8x384xf32>
    %464 = tpu.matmul %463, %289, %cst_111 {dimension_numbers = #tpu.dot_dimension_numbers<[1], [0], [0], [1], [0, 0, 1, 1], [], []>} : vector<8x128xbf16>, vector<128x384xbf16>, vector<8x384xf32> -> vector<8x384xf32>
    %465 = vector.broadcast %291 : vector<1x384xf32> to vector<8x384xf32>
    %466 = arith.addf %464, %465 : vector<8x384xf32>
    %467 = vector.extract_strided_slice %462 {offsets = [0, 0], sizes = [8, 128], strides = [1, 1]} : vector<8x384xf32> to vector<8x128xf32>
    %468 = vector.extract_strided_slice %462 {offsets = [0, 128], sizes = [8, 128], strides = [1, 1]} : vector<8x384xf32> to vector<8x128xf32>
    %469 = vector.extract_strided_slice %462 {offsets = [0, 256], sizes = [8, 128], strides = [1, 1]} : vector<8x384xf32> to vector<8x128xf32>
    %470 = vector.extract_strided_slice %466 {offsets = [0, 0], sizes = [8, 128], strides = [1, 1]} : vector<8x384xf32> to vector<8x128xf32>
    %471 = vector.extract_strided_slice %466 {offsets = [0, 128], sizes = [8, 128], strides = [1, 1]} : vector<8x384xf32> to vector<8x128xf32>
    %472 = vector.extract_strided_slice %466 {offsets = [0, 256], sizes = [8, 128], strides = [1, 1]} : vector<8x384xf32> to vector<8x128xf32>
    %473 = arith.addf %467, %470 : vector<8x128xf32>
    %474 = arith.negf %473 : vector<8x128xf32>
    %475 = math.exp %474 : vector<8x128xf32>
    %cst_112 = arith.constant 1.000000e+00 : f32
    %476 = vector.broadcast %cst_112 : f32 to vector<8x128xf32>
    %477 = arith.addf %476, %475 : vector<8x128xf32>
    %478 = arith.divf %476, %477 : vector<8x128xf32>
    %479 = arith.addf %468, %471 : vector<8x128xf32>
    %480 = arith.negf %479 : vector<8x128xf32>
    %481 = math.exp %480 : vector<8x128xf32>
    %cst_113 = arith.constant 1.000000e+00 : f32
    %482 = vector.broadcast %cst_113 : f32 to vector<8x128xf32>
    %483 = arith.addf %482, %481 : vector<8x128xf32>
    %484 = arith.divf %482, %483 : vector<8x128xf32>
    %485 = arith.mulf %478, %472 : vector<8x128xf32>
    %486 = arith.addf %469, %485 : vector<8x128xf32>
    %487 = math.tanh %486 : vector<8x128xf32>
    %cst_114 = arith.constant 1.000000e+00 : f32
    %488 = vector.broadcast %cst_114 : f32 to vector<8x128xf32>
    %489 = arith.subf %488, %484 : vector<8x128xf32>
    %490 = arith.mulf %489, %487 : vector<8x128xf32>
    %491 = arith.mulf %484, %458 : vector<8x128xf32>
    %492 = arith.addf %490, %491 : vector<8x128xf32>
    %c5 = arith.constant 5 : index
    %c0_115 = arith.constant 0 : index
    %c0_116 = arith.constant 0 : index
    %493 = vector.load %arg7[%c5, %c0_115, %c0_116] : memref<8x8x128xf32, #tpu.memory_space<vmem>>, vector<1x8x128xf32>
    %494 = vector.shape_cast %493 : vector<1x8x128xf32> to vector<8x128xf32>
    %495 = vector.shape_cast %492 : vector<8x128xf32> to vector<1x8x128xf32>
    tpu.vector_store %arg7[%c5, %c0_115, %c0_116], %495 {strides = array<i32>} : memref<8x8x128xf32, #tpu.memory_space<vmem>>, vector<1x8x128xf32>,
    %496 = vector.extract_strided_slice %285 {offsets = [48, 0], sizes = [8, 384], strides = [1, 1]} : vector<64x384xf32> to vector<8x384xf32>
    %497 = arith.truncf %492 : vector<8x128xf32> to vector<8x128xbf16>
    %cst_117 = arith.constant dense<0.000000e+00> : vector<8x384xf32>
    %498 = tpu.matmul %497, %289, %cst_117 {dimension_numbers = #tpu.dot_dimension_numbers<[1], [0], [0], [1], [0, 0, 1, 1], [], []>} : vector<8x128xbf16>, vector<128x384xbf16>, vector<8x384xf32> -> vector<8x384xf32>
    %499 = vector.broadcast %291 : vector<1x384xf32> to vector<8x384xf32>
    %500 = arith.addf %498, %499 : vector<8x384xf32>
    %501 = vector.extract_strided_slice %496 {offsets = [0, 0], sizes = [8, 128], strides = [1, 1]} : vector<8x384xf32> to vector<8x128xf32>
    %502 = vector.extract_strided_slice %496 {offsets = [0, 128], sizes = [8, 128], strides = [1, 1]} : vector<8x384xf32> to vector<8x128xf32>
    %503 = vector.extract_strided_slice %496 {offsets = [0, 256], sizes = [8, 128], strides = [1, 1]} : vector<8x384xf32> to vector<8x128xf32>
    %504 = vector.extract_strided_slice %500 {offsets = [0, 0], sizes = [8, 128], strides = [1, 1]} : vector<8x384xf32> to vector<8x128xf32>
    %505 = vector.extract_strided_slice %500 {offsets = [0, 128], sizes = [8, 128], strides = [1, 1]} : vector<8x384xf32> to vector<8x128xf32>
    %506 = vector.extract_strided_slice %500 {offsets = [0, 256], sizes = [8, 128], strides = [1, 1]} : vector<8x384xf32> to vector<8x128xf32>
    %507 = arith.addf %501, %504 : vector<8x128xf32>
    %508 = arith.negf %507 : vector<8x128xf32>
    %509 = math.exp %508 : vector<8x128xf32>
    %cst_118 = arith.constant 1.000000e+00 : f32
    %510 = vector.broadcast %cst_118 : f32 to vector<8x128xf32>
    %511 = arith.addf %510, %509 : vector<8x128xf32>
    %512 = arith.divf %510, %511 : vector<8x128xf32>
    %513 = arith.addf %502, %505 : vector<8x128xf32>
    %514 = arith.negf %513 : vector<8x128xf32>
    %515 = math.exp %514 : vector<8x128xf32>
    %cst_119 = arith.constant 1.000000e+00 : f32
    %516 = vector.broadcast %cst_119 : f32 to vector<8x128xf32>
    %517 = arith.addf %516, %515 : vector<8x128xf32>
    %518 = arith.divf %516, %517 : vector<8x128xf32>
    %519 = arith.mulf %512, %506 : vector<8x128xf32>
    %520 = arith.addf %503, %519 : vector<8x128xf32>
    %521 = math.tanh %520 : vector<8x128xf32>
    %cst_120 = arith.constant 1.000000e+00 : f32
    %522 = vector.broadcast %cst_120 : f32 to vector<8x128xf32>
    %523 = arith.subf %522, %518 : vector<8x128xf32>
    %524 = arith.mulf %523, %521 : vector<8x128xf32>
    %525 = arith.mulf %518, %492 : vector<8x128xf32>
    %526 = arith.addf %524, %525 : vector<8x128xf32>
    %c6 = arith.constant 6 : index
    %c0_121 = arith.constant 0 : index
    %c0_122 = arith.constant 0 : index
    %527 = vector.load %arg7[%c6, %c0_121, %c0_122] : memref<8x8x128xf32, #tpu.memory_space<vmem>>, vector<1x8x128xf32>
    %528 = vector.shape_cast %527 : vector<1x8x128xf32> to vector<8x128xf32>
    %529 = vector.shape_cast %526 : vector<8x128xf32> to vector<1x8x128xf32>
    tpu.vector_store %arg7[%c6, %c0_121, %c0_122], %529 {strides = array<i32>} : memref<8x8x128xf32, #tpu.memory_space<vmem>>, vector<1x8x128xf32>,
    %530 = vector.extract_strided_slice %285 {offsets = [56, 0], sizes = [8, 384], strides = [1, 1]} : vector<64x384xf32> to vector<8x384xf32>
    %531 = arith.truncf %526 : vector<8x128xf32> to vector<8x128xbf16>
    %cst_123 = arith.constant dense<0.000000e+00> : vector<8x384xf32>
    %532 = tpu.matmul %531, %289, %cst_123 {dimension_numbers = #tpu.dot_dimension_numbers<[1], [0], [0], [1], [0, 0, 1, 1], [], []>} : vector<8x128xbf16>, vector<128x384xbf16>, vector<8x384xf32> -> vector<8x384xf32>
    %533 = vector.broadcast %291 : vector<1x384xf32> to vector<8x384xf32>
    %534 = arith.addf %532, %533 : vector<8x384xf32>
    %535 = vector.extract_strided_slice %530 {offsets = [0, 0], sizes = [8, 128], strides = [1, 1]} : vector<8x384xf32> to vector<8x128xf32>
    %536 = vector.extract_strided_slice %530 {offsets = [0, 128], sizes = [8, 128], strides = [1, 1]} : vector<8x384xf32> to vector<8x128xf32>
    %537 = vector.extract_strided_slice %530 {offsets = [0, 256], sizes = [8, 128], strides = [1, 1]} : vector<8x384xf32> to vector<8x128xf32>
    %538 = vector.extract_strided_slice %534 {offsets = [0, 0], sizes = [8, 128], strides = [1, 1]} : vector<8x384xf32> to vector<8x128xf32>
    %539 = vector.extract_strided_slice %534 {offsets = [0, 128], sizes = [8, 128], strides = [1, 1]} : vector<8x384xf32> to vector<8x128xf32>
    %540 = vector.extract_strided_slice %534 {offsets = [0, 256], sizes = [8, 128], strides = [1, 1]} : vector<8x384xf32> to vector<8x128xf32>
    %541 = arith.addf %535, %538 : vector<8x128xf32>
    %542 = arith.negf %541 : vector<8x128xf32>
    %543 = math.exp %542 : vector<8x128xf32>
    %cst_124 = arith.constant 1.000000e+00 : f32
    %544 = vector.broadcast %cst_124 : f32 to vector<8x128xf32>
    %545 = arith.addf %544, %543 : vector<8x128xf32>
    %546 = arith.divf %544, %545 : vector<8x128xf32>
    %547 = arith.addf %536, %539 : vector<8x128xf32>
    %548 = arith.negf %547 : vector<8x128xf32>
    %549 = math.exp %548 : vector<8x128xf32>
    %cst_125 = arith.constant 1.000000e+00 : f32
    %550 = vector.broadcast %cst_125 : f32 to vector<8x128xf32>
    %551 = arith.addf %550, %549 : vector<8x128xf32>
    %552 = arith.divf %550, %551 : vector<8x128xf32>
    %553 = arith.mulf %546, %540 : vector<8x128xf32>
    %554 = arith.addf %537, %553 : vector<8x128xf32>
    %555 = math.tanh %554 : vector<8x128xf32>
    %cst_126 = arith.constant 1.000000e+00 : f32
    %556 = vector.broadcast %cst_126 : f32 to vector<8x128xf32>
    %557 = arith.subf %556, %552 : vector<8x128xf32>
    %558 = arith.mulf %557, %555 : vector<8x128xf32>
    %559 = arith.mulf %552, %526 : vector<8x128xf32>
    %560 = arith.addf %558, %559 : vector<8x128xf32>
    %c7 = arith.constant 7 : index
    %c0_127 = arith.constant 0 : index
    %c0_128 = arith.constant 0 : index
    %561 = vector.load %arg7[%c7, %c0_127, %c0_128] : memref<8x8x128xf32, #tpu.memory_space<vmem>>, vector<1x8x128xf32>
    %562 = vector.shape_cast %561 : vector<1x8x128xf32> to vector<8x128xf32>
    %563 = vector.shape_cast %560 : vector<8x128xf32> to vector<1x8x128xf32>
    tpu.vector_store %arg7[%c7, %c0_127, %c0_128], %563 {strides = array<i32>} : memref<8x8x128xf32, #tpu.memory_space<vmem>>, vector<1x8x128xf32>,
    %c1_129 = arith.constant 1 : index
    %c0_130 = arith.constant 0 : index
    %c0_131 = arith.constant 0 : index
    %564 = vector.load %arg9[%c1_129, %c0_130, %c0_131] : memref<2x8x128xf32, #tpu.memory_space<vmem>>, vector<1x8x128xf32>
    %565 = vector.shape_cast %564 : vector<1x8x128xf32> to vector<8x128xf32>
    %566 = vector.shape_cast %560 : vector<8x128xf32> to vector<1x8x128xf32>
    tpu.vector_store %arg9[%c1_129, %c0_130, %c0_131], %566 {strides = array<i32>} : memref<2x8x128xf32, #tpu.memory_space<vmem>>, vector<1x8x128xf32>,
    %c3_i32 = arith.constant 3 : i32
    %567 = arith.cmpi eq, %arg0, %c3_i32 : i32
    %568 = arith.extui %567 : i1 to i32
    %c0_i32_132 = arith.constant 0 : i32
    %569 = arith.cmpi ne, %568, %c0_i32_132 : i32
    scf.if %569 {
      %c0_133 = arith.constant 0 : index
      %c0_134 = arith.constant 0 : index
      %c0_135 = arith.constant 0 : index
      %570 = vector.load %arg9[%c0_133, %c0_134, %c0_135] : memref<2x8x128xf32, #tpu.memory_space<vmem>>, vector<2x8x128xf32>
      %c0_136 = arith.constant 0 : index
      %c0_137 = arith.constant 0 : index
      %c0_138 = arith.constant 0 : index
      %571 = vector.load %arg8[%c0_136, %c0_137, %c0_138] : memref<2x8x128xf32, #tpu.memory_space<vmem>>, vector<2x8x128xf32>
      tpu.vector_store %arg8[%c0_136, %c0_137, %c0_138], %570 {strides = array<i32>} : memref<2x8x128xf32, #tpu.memory_space<vmem>>, vector<2x8x128xf32>,
    } else {
    }
    return
  }
  func.func @transform_0(%arg0: i32) -> (i32, i32, i32) {
    %c0_i32 = arith.constant 0 : i32
    %c0_i32_0 = arith.constant 0 : i32
    %c0_i32_1 = arith.constant 0 : i32
    return %arg0, %c0_i32, %c0_i32_0 : i32, i32, i32
  }
  func.func @transform_1(%arg0: i32) -> (i32, i32, i32) {
    %c0_i32 = arith.constant 0 : i32
    %c0_i32_0 = arith.constant 0 : i32
    %c0_i32_1 = arith.constant 0 : i32
    %c0_i32_2 = arith.constant 0 : i32
    return %c0_i32, %c0_i32_0, %c0_i32_1 : i32, i32, i32
  }
  func.func @transform_2(%arg0: i32) -> (i32, i32, i32) {
    %c0_i32 = arith.constant 0 : i32
    %c0_i32_0 = arith.constant 0 : i32
    %c0_i32_1 = arith.constant 0 : i32
    %c0_i32_2 = arith.constant 0 : i32
    return %c0_i32, %c0_i32_0, %c0_i32_1 : i32, i32, i32
  }
  func.func @transform_3(%arg0: i32) -> (i32, i32, i32) {
    %c0_i32 = arith.constant 0 : i32
    %c0_i32_0 = arith.constant 0 : i32
    %c0_i32_1 = arith.constant 0 : i32
    %c0_i32_2 = arith.constant 0 : i32
    return %c0_i32, %c0_i32_0, %c0_i32_1 : i32, i32, i32
  }
  func.func @transform_4(%arg0: i32) -> (i32, i32, i32) {
    %c0_i32 = arith.constant 0 : i32
    %c0_i32_0 = arith.constant 0 : i32
    %c0_i32_1 = arith.constant 0 : i32
    %c0_i32_2 = arith.constant 0 : i32
    return %c0_i32, %c0_i32_0, %c0_i32_1 : i32, i32, i32
  }
  func.func @transform_5(%arg0: i32) -> (i32, i32, i32) {
    %c0_i32 = arith.constant 0 : i32
    %c0_i32_0 = arith.constant 0 : i32
    %c0_i32_1 = arith.constant 0 : i32
    %c0_i32_2 = arith.constant 0 : i32
    return %c0_i32, %c0_i32_0, %c0_i32_1 : i32, i32, i32
  }
  func.func @transform_6(%arg0: i32) -> (i32, i32, i32) {
    %c0_i32 = arith.constant 0 : i32
    %c0_i32_0 = arith.constant 0 : i32
    %c0_i32_1 = arith.constant 0 : i32
    return %arg0, %c0_i32, %c0_i32_0 : i32, i32, i32
  }
  func.func @transform_7(%arg0: i32) -> (i32, i32, i32) {
    %c0_i32 = arith.constant 0 : i32
    %c0_i32_0 = arith.constant 0 : i32
    %c0_i32_1 = arith.constant 0 : i32
    %c0_i32_2 = arith.constant 0 : i32
    return %c0_i32, %c0_i32_0, %c0_i32_1 : i32, i32, i32
  }
}

</mosaic_0001>

<llo_original>
// kernel: rnnlm_forward.3
$region0: #{rnnlm_forward.3}
  #allocation0 [shape = 'u32[]', space=smem, size = 0x4, offset = 0x4, fixed_abs, tag = 'smem constant byte address 0x4 - core index']
  #allocation1 [shape = 'u32[144,128]{1,0:T(1,128)}', space=vmem, size = 0x12000, scoped, tag = 'internal scratch']
  %s0 = inlined_call_operand.vmem [shape: f32[256,128], index: 0, kind: input, shape index: {}]
  %s1 = inlined_call_operand.vmem [shape: bf16[512,128], index: 1, kind: input, shape index: {}]
  %s2 = inlined_call_operand.vmem [shape: f32[1,512], index: 2, kind: input, shape index: {}]
  %s3 = inlined_call_operand.hbm [shape: f32[256,512], index: 3, kind: output, shape index: {}]
  %s4 = sld [smem:[#allocation0]]
  $region45: #{rnnlm_forward.3} parent=0
    _
  %s6 = ssub.s32 1, %s4
  %s7 = scalar_select 0, %s6, %s4
  $region1: #{rnnlm_forward.3} parent=0
    #allocation2 [shape = 'u8[131072]{0}', space=vmem, size = 0x20000, scoped, tag = 'output window, operand 0']
    #allocation3 [shape = 's32[2]{0}', space=sflag, size = 0x8, scoped, tag = 'scoped memory for rnnlm_forward.3']
    %8 = vsyncpa [#allocation3], 0
    %s9 = scalar_lea.sflag [#allocation3], 1
    %10 = vsyncpa %s9, 0
    loop: start=0, step=1, limit=10
    $region2: #{rnnlm_forward.3} parent=1 // loop_pre_header
      _
    $region3: #{rnnlm_forward.3} parent=1 // loop_header
      %s12 = sphi 0, %s16
      %p13 = scmp.ge.s32.totalorder %s12, 10
      %s19 = sphi 0, %s31
      %s20 = sphi 0, %s27
      %s21 = sphi 0, %s19
      %s22 = sphi 0, %s20
      %s23 = sphi 0, %s21
      %s24 = sphi 0, %s22
      %s34 = sphi 0, %s36
      %s37 = sphi 0, %s34
      %s38 = sphi 0, %s37
      %s54 = sphi 0, %s38
      %s60 = sphi 0, %s62
      %s63 = sphi 0, %s60
      %s64 = sphi 0, %s63
      %s80 = sphi 0, %s64
      %s86 = sphi 0, %s88
      %s89 = sphi 0, %s86
      %s90 = sphi 0, %s89
      %s106 = sphi 0, %s90
      %s114 = sphi 0, %s116
      %s117 = sphi 0, %s114
      %s118 = sphi 0, %s117
      %s134 = sphi 0, %s118
    $region4: #{rnnlm_forward.3} parent=1 // loop_header_branch
      %15 = sbr.rel (%p13) target = $region8
    $region5: #{rnnlm_forward.3} parent=1 // loop_body
      %s17 = ssub.s32 %s12, 1
      %s18 = ssub.s32 %s12, 2
      %s25 = sadd.s32 1, %s20
      %p26 = scmp.ge.s32.totalorder %s25, 4
      %s27 = scalar_select %p26, 0, %s25
      %s28 = sadd.s32 1, %s19
      %s29 = scalar_select %p26, %s28, %s19
      %p30 = scmp.ge.s32.totalorder %s29, 2
      %s31 = scalar_select %p30, 0, %s29
      %s32 = ssub.s32 %s19, %s31
      %p33 = scmp.eq.s32.totalorder %s32, 0
      %s35 = sadd.s32 %s34, 1
      %s36 = scalar_select %p33, %s34, %s35
      %p39 = pneg %p33
      %p40 = scmp.eq.s32.totalorder %s12, 7
      %p41 = por %p39, %p40
      %p42 = scmp.ne.s32.totalorder %s34, %s37
      %p43 = scmp.eq.s32.totalorder %s12, 0
      %p44 = por %p42, %p43
      %p45 = scmp.ne.s32.totalorder %s34, %s37
      %p46 = scmp.eq.s32.totalorder %s17, 7
      %p47 = por %p45, %p46
      %p48 = scmp.ne.s32.totalorder %s37, %s38
      %p49 = scmp.eq.s32.totalorder %s17, 0
      %p50 = por %p48, %p49
      %p51 = scmp.ne.s32.totalorder %s37, %s38
      %p52 = scmp.eq.s32.totalorder %s18, 7
      %p53 = por %p51, %p52
      %p55 = scmp.ne.s32.totalorder %s38, %s54
      %p56 = scmp.eq.s32.totalorder %s18, 0
      %p57 = por %p55, %p56
      %s58 = ssub.s32 %s20, %s27
      %p59 = scmp.eq.s32.totalorder %s58, 0
      %s61 = sadd.s32 %s60, 1
      %s62 = scalar_select %p59, %s60, %s61
      %p65 = pneg %p59
      %p66 = scmp.eq.s32.totalorder %s12, 7
      %p67 = por %p65, %p66
      %p68 = scmp.ne.s32.totalorder %s60, %s63
      %p69 = scmp.eq.s32.totalorder %s12, 0
      %p70 = por %p68, %p69
      %p71 = scmp.ne.s32.totalorder %s60, %s63
      %p72 = scmp.eq.s32.totalorder %s17, 7
      %p73 = por %p71, %p72
      %p74 = scmp.ne.s32.totalorder %s63, %s64
      %p75 = scmp.eq.s32.totalorder %s17, 0
      %p76 = por %p74, %p75
      %p77 = scmp.ne.s32.totalorder %s63, %s64
      %p78 = scmp.eq.s32.totalorder %s18, 7
      %p79 = por %p77, %p78
      %p81 = scmp.ne.s32.totalorder %s64, %s80
      %p82 = scmp.eq.s32.totalorder %s18, 0
      %p83 = por %p81, %p82
      %s84 = ssub.s32 %s20, %s27
      %p85 = scmp.eq.s32.totalorder %s84, 0
      %s87 = sadd.s32 %s86, 1
      %s88 = scalar_select %p85, %s86, %s87
      %p91 = pneg %p85
      %p92 = scmp.eq.s32.totalorder %s12, 7
      %p93 = por %p91, %p92
      %p94 = scmp.ne.s32.totalorder %s86, %s89
      %p95 = scmp.eq.s32.totalorder %s12, 0
      %p96 = por %p94, %p95
      %p97 = scmp.ne.s32.totalorder %s86, %s89
      %p98 = scmp.eq.s32.totalorder %s17, 7
      %p99 = por %p97, %p98
      %p100 = scmp.ne.s32.totalorder %s89, %s90
      %p101 = scmp.eq.s32.totalorder %s17, 0
      %p102 = por %p100, %p101
      %p103 = scmp.ne.s32.totalorder %s89, %s90
      %p104 = scmp.eq.s32.totalorder %s18, 7
      %p105 = por %p103, %p104
      %p107 = scmp.ne.s32.totalorder %s90, %s106
      %p108 = scmp.eq.s32.totalorder %s18, 0
      %p109 = por %p107, %p108
      %s110 = ssub.s32 %s19, %s31
      %s111 = ssub.s32 %s20, %s27
      %s112 = sor.u32 %s110, %s111
      %p113 = scmp.eq.s32.totalorder %s112, 0
      %s115 = sadd.s32 %s114, 1
      %s116 = scalar_select %p113, %s114, %s115
      %p119 = pneg %p113
      %p120 = scmp.eq.s32.totalorder %s12, 7
      %p121 = por %p119, %p120
      %p122 = scmp.ne.s32.totalorder %s114, %s117
      %p123 = scmp.eq.s32.totalorder %s12, 0
      %p124 = por %p122, %p123
      %p125 = scmp.ne.s32.totalorder %s114, %s117
      %p126 = scmp.eq.s32.totalorder %s17, 7
      %p127 = por %p125, %p126
      %p128 = scmp.ne.s32.totalorder %s117, %s118
      %p129 = scmp.eq.s32.totalorder %s17, 0
      %p130 = por %p128, %p129
      %p131 = scmp.ne.s32.totalorder %s117, %s118
      %p132 = scmp.eq.s32.totalorder %s18, 7
      %p133 = por %p131, %p132
      %p135 = scmp.ne.s32.totalorder %s118, %s134
      %p136 = scmp.eq.s32.totalorder %s18, 0
      %p137 = por %p135, %p136
      %p138 = scmp.le.s32.totalorder 1, %s12
      %p139 = scmp.lt.s32.totalorder %s12, 9
      %p140 = pnand %p138, %p139
      %p141 = pneg %p140
      // Predicated region
      $region9: #{rnnlm_forward.3} parent=5 // pred_check
        _
      $region10: #{rnnlm_forward.3} parent=5 // pred_check_branch
        %143 = sbr.rel (%p140) target = $region12
      $region11: #{rnnlm_forward.3} parent=5 // pred_region
        %s144 = ssub.s32 %s12, 1
      $region12: #{rnnlm_forward.3} parent=5 // pred_fallthru
        _
      %p145 = scmp.lt.s32.totalorder %s12, 8
      // Predicated region
      $region13: #{rnnlm_forward.3} parent=5 // pred_check
        %p146 = pneg %p145
      $region14: #{rnnlm_forward.3} parent=5 // pred_check_branch
        %148 = sbr.rel (%p146) target = $region16
      $region15: #{rnnlm_forward.3} parent=5 // pred_region
        // Predicated region
        $region17: #{rnnlm_forward.3} parent=15 // pred_check
          %p149 = pneg %p44
        $region18: #{rnnlm_forward.3} parent=15 // pred_check_branch
          %151 = sbr.rel (%p149) target = $region20
        $region19: #{rnnlm_forward.3} parent=15 // pred_region
          %s152 = smul.u32 16, %s19
          %p153 = scmp.lt.s32.totalorder %s152, 31
          %s154 = scalar_select %p153, %s152, 31
          %s155 = smul.addr %s154, 8
          %s156 = scalar_lea.vmem %s0, %s155
          %s157 = smul.u32 16, %s19
        $region20: #{rnnlm_forward.3} parent=15 // pred_fallthru
          _
        // Predicated region
        $region21: #{rnnlm_forward.3} parent=15 // pred_check
          %p158 = pneg %p70
        $region22: #{rnnlm_forward.3} parent=15 // pred_check_branch
          %160 = sbr.rel (%p158) target = $region24
        $region23: #{rnnlm_forward.3} parent=15 // pred_region
          %s161 = smul.u32 16, %s20
          %p162 = scmp.lt.s32.totalorder %s161, 63
          %s163 = scalar_select %p162, %s161, 63
          %s164 = smul.addr %s163, 4
          %s165 = scalar_lea.vmem %s1, %s164
          %s166 = smul.u32 16, %s20
        $region24: #{rnnlm_forward.3} parent=15 // pred_fallthru
          _
        // Predicated region
        $region25: #{rnnlm_forward.3} parent=15 // pred_check
          %p167 = pneg %p96
        $region26: #{rnnlm_forward.3} parent=15 // pred_check_branch
          %169 = sbr.rel (%p167) target = $region28
        $region27: #{rnnlm_forward.3} parent=15 // pred_region
          %p170 = scmp.lt.s32.totalorder %s20, 3
          %s171 = scalar_select %p170, %s20, 3
          %s172 = scalar_lea.vmem %s2, %s171
        $region28: #{rnnlm_forward.3} parent=15 // pred_fallthru
          _
      $region16: #{rnnlm_forward.3} parent=5 // pred_fallthru
        _
      %p173 = scmp.le.s32.totalorder 1, %s12
      %p174 = scmp.lt.s32.totalorder %s12, 9
      %p175 = pnand %p173, %p174
      %p176 = pneg %p175
      // Predicated region
      $region29: #{rnnlm_forward.3} parent=5 // pred_check
        _
      $region30: #{rnnlm_forward.3} parent=5 // pred_check_branch
        %178 = sbr.rel (%p175) target = $region32
      $region31: #{rnnlm_forward.3} parent=5 // pred_region
        %s179 = ssub.s32 %s12, 1
        %s180 = smul.u32 16, %s21
        %p181 = scmp.lt.s32.totalorder %s180, 31
        %s182 = scalar_select %p181, %s180, 31
        %s183 = smul.addr %s182, 8
        %s184 = scalar_lea.vmem %s0, %s183
        %p185 = pneg %p50
        %p186 = pneg %p47
        %s187 = smul.u32 16, %s22
        %p188 = scmp.lt.s32.totalorder %s187, 63
        %s189 = scalar_select %p188, %s187, 63
        %s190 = smul.addr %s189, 4
        %s191 = scalar_lea.vmem %s1, %s190
        %p192 = pneg %p76
        %p193 = pneg %p73
        %p194 = scmp.lt.s32.totalorder %s22, 3
        %s195 = scalar_select %p194, %s22, 3
        %s196 = scalar_lea.vmem %s2, %s195
        %p197 = pneg %p102
        %p198 = pneg %p99
        %p199 = pneg %p130
        %p200 = pneg %p127
        %s201 = sand.u32 %s117, 1
        %s202 = scalar_lea.sflag [#allocation3], %s201
        %s203 = sand.u32 %s117, 1
        %s204 = smul.addr %s203, 128
        %s205 = scalar_lea.vmem [#allocation2], %s204
        %s206 = smul.u32 16, %s21
        %p207 = scmp.lt.s32.totalorder %s206, 31
        %s208 = scalar_select %p207, %s206, 31
        %s209 = smul.addr %s208, 8
        %s210 = scalar_lea.vmem %s0, %s209
        %s211 = smul.u32 16, %s21
        %s212 = smul.u32 16, %s22
        %p213 = scmp.lt.s32.totalorder %s212, 63
        %s214 = scalar_select %p213, %s212, 63
        %s215 = smul.addr %s214, 4
        %s216 = scalar_lea.vmem %s1, %s215
        %s217 = smul.u32 16, %s22
        %p218 = scmp.lt.s32.totalorder %s22, 3
        %s219 = scalar_select %p218, %s22, 3
        %s220 = scalar_lea.vmem %s2, %s219
        %s221 = smul.u32 16, %s21
        %v223 = vld [vmem:[%s210] sm:$0xff]
        %v224 = vld [vmem:[%s210 + $0x8] sm:$0xff]
        %v225 = vld [vmem:[%s210 + $0x10] sm:$0xff]
        %v226 = vld [vmem:[%s210 + $0x18] sm:$0xff]
        %v227 = vld [vmem:[%s210 + $0x20] sm:$0xff]
        %v228 = vld [vmem:[%s210 + $0x28] sm:$0xff]
        %v229 = vld [vmem:[%s210 + $0x30] sm:$0xff]
        %v230 = vld [vmem:[%s210 + $0x38] sm:$0xff]
        %v231 = vld [vmem:[%s210 + $0x40] sm:$0xff]
        %v232 = vld [vmem:[%s210 + $0x48] sm:$0xff]
        %v233 = vld [vmem:[%s210 + $0x50] sm:$0xff]
        %v234 = vld [vmem:[%s210 + $0x58] sm:$0xff]
        %v235 = vld [vmem:[%s210 + $0x60] sm:$0xff]
        %v236 = vld [vmem:[%s210 + $0x68] sm:$0xff]
        %v237 = vld [vmem:[%s210 + $0x70] sm:$0xff]
        %v238 = vld [vmem:[%s210 + $0x78] sm:$0xff]
        %v239 = vpack.c.bf16 %v224, %v223
        %v240 = vpack.c.bf16 %v226, %v225
        %v241 = vpack.c.bf16 %v228, %v227
        %v242 = vpack.c.bf16 %v230, %v229
        %v243 = vpack.c.bf16 %v232, %v231
        %v244 = vpack.c.bf16 %v234, %v233
        %v245 = vpack.c.bf16 %v236, %v235
        %v246 = vpack.c.bf16 %v238, %v237
        %v247 = vld [vmem:[%s216] sm:$0xf]
        %v248 = vld [vmem:[%s216 + $0x4] sm:$0xf]
        %v249 = vld [vmem:[%s216 + $0x8] sm:$0xf]
        %v250 = vld [vmem:[%s216 + $0xc] sm:$0xf]
        %v251 = vld [vmem:[%s216 + $0x10] sm:$0xf]
        %v252 = vld [vmem:[%s216 + $0x14] sm:$0xf]
        %v253 = vld [vmem:[%s216 + $0x18] sm:$0xf]
        %v254 = vld [vmem:[%s216 + $0x1c] sm:$0xf]
        %v255 = vld [vmem:[%s216 + $0x20] sm:$0xf]
        %v256 = vld [vmem:[%s216 + $0x24] sm:$0xf]
        %v257 = vld [vmem:[%s216 + $0x28] sm:$0xf]
        %v258 = vld [vmem:[%s216 + $0x2c] sm:$0xf]
        %v259 = vld [vmem:[%s216 + $0x30] sm:$0xf]
        %v260 = vld [vmem:[%s216 + $0x34] sm:$0xf]
        %v261 = vld [vmem:[%s216 + $0x38] sm:$0xf]
        %v262 = vld [vmem:[%s216 + $0x3c] sm:$0xf]
        %v263 = vld [vmem:[%s220] sm:$0x1]
        %v265 = vlaneseq
        %v266 = vshrl.u32 %v265, 7
        %v267 = vsub.s32 0, %v266
        %v268 = vrot.slane %v263, %v267
        %v286 = vunpack.c.l.b16 %v247
        %v287 = vunpack.c.l.b16 %v248
        %v288 = vunpack.c.l.b16 %v249
        %v289 = vunpack.c.l.b16 %v250
        %v290 = vunpack.c.l.b16 %v251
        %v291 = vunpack.c.l.b16 %v252
        %v292 = vunpack.c.l.b16 %v253
        %v293 = vunpack.c.l.b16 %v254
        %v294 = vunpack.c.l.b16 %v255
        %v295 = vunpack.c.l.b16 %v256
        %v296 = vunpack.c.l.b16 %v257
        %v297 = vunpack.c.l.b16 %v258
        %v298 = vunpack.c.l.b16 %v259
        %v299 = vunpack.c.l.b16 %v260
        %v300 = vunpack.c.l.b16 %v261
        %v301 = vunpack.c.l.b16 %v262
        %v302 = vpack.c.b16 %v287, %v286
        %v303 = vpack.c.b16 %v289, %v288
        %v304 = vpack.c.b16 %v291, %v290
        %v305 = vpack.c.b16 %v293, %v292
        %v306 = vpack.c.b16 %v295, %v294
        %v307 = vpack.c.b16 %v297, %v296
        %v308 = vpack.c.b16 %v299, %v298
        %v309 = vpack.c.b16 %v301, %v300
        %318 = vmatprep.subr.bf16.mxu0 0
        %319 = vmatpush1.bf16.xpose.msra.mxu0 %v309
        %320 = vmatprep.subr.bf16.mxu0 0
        %321 = vmatpush1.bf16.xpose.msra.mxu0 %v308
        %322 = vmatprep.subr.bf16.mxu0 0
        %323 = vmatpush1.bf16.xpose.msra.mxu0 %v307
        %324 = vmatprep.subr.bf16.mxu0 0
        %325 = vmatpush1.bf16.xpose.msra.mxu0 %v306
        %326 = vmatprep.subr.bf16.mxu0 0
        %327 = vmatpush1.bf16.xpose.msra.mxu0 %v305
        %328 = vmatprep.subr.bf16.mxu0 0
        %329 = vmatpush1.bf16.xpose.msra.mxu0 %v304
        %330 = vmatprep.subr.bf16.mxu0 0
        %331 = vmatpush1.bf16.xpose.msra.mxu0 %v303
        %332 = vmatprep.subr.bf16.mxu0 0
        %333 = vmatpush1.bf16.xpose.msra.mxu0 %v302
        %334 = vmatprep.subr.bf16.mxu0 0
        %335 = vmatpush2.bf16.xpose.msra.mxu0 0
        %336 = vmatprep.subr.bf16.mxu0 0
        %337 = vmatpush2.bf16.xpose.msra.mxu0 0
        %338 = vmatprep.subr.bf16.mxu0 0
        %339 = vmatpush2.bf16.xpose.msra.mxu0 0
        %340 = vmatprep.subr.bf16.mxu0 0
        %341 = vmatpush2.bf16.xpose.msra.mxu0 0
        %342 = vmatprep.subr.bf16.mxu0 0
        %343 = vmatpush2.bf16.xpose.msra.mxu0 0
        %344 = vmatprep.subr.bf16.mxu0 0
        %345 = vmatpush2.bf16.xpose.msra.mxu0 0
        %346 = vmatprep.subr.bf16.mxu0 0
        %347 = vmatpush2.bf16.xpose.msra.mxu0 0
        %348 = vmatprep.subr.bf16.mxu0 0
        %349 = vmatpush2.bf16.xpose.msra.mxu0 0
        %350 = vmatprep.mubr.bf16.mxu0 0
        %351 = vmatmul.mubr.bf16.gmra.mxu0 %v239
        %v352 = vpop.f32.mrf.mxu0
        %v353 = vadd.f32 %v268, %v352
        %v354 = vpop.f32.mrf.mxu0
        %v355 = vpop.f32.mrf.mxu0
        %v356 = vadd.f32 %v268, %v355
        %v357 = vpop.f32.mrf.mxu0
        %358 = vmatprep.mubr.bf16.mxu0 0
        %359 = vmatmul.mubr.bf16.gmra.mxu0 %v240
        %v360 = vpop.f32.mrf.mxu0
        %v361 = vadd.f32 %v268, %v360
        %v362 = vpop.f32.mrf.mxu0
        %v363 = vpop.f32.mrf.mxu0
        %v364 = vadd.f32 %v268, %v363
        %v365 = vpop.f32.mrf.mxu0
        %366 = vmatprep.mubr.bf16.mxu0 0
        %367 = vmatmul.mubr.bf16.gmra.mxu0 %v241
        %v368 = vpop.f32.mrf.mxu0
        %v369 = vadd.f32 %v268, %v368
        %v370 = vpop.f32.mrf.mxu0
        %v371 = vpop.f32.mrf.mxu0
        %v372 = vadd.f32 %v268, %v371
        %v373 = vpop.f32.mrf.mxu0
        %374 = vmatprep.mubr.bf16.mxu0 0
        %375 = vmatmul.mubr.bf16.gmra.mxu0 %v242
        %v376 = vpop.f32.mrf.mxu0
        %v377 = vadd.f32 %v268, %v376
        %v378 = vpop.f32.mrf.mxu0
        %v379 = vpop.f32.mrf.mxu0
        %v380 = vadd.f32 %v268, %v379
        %v381 = vpop.f32.mrf.mxu0
        %382 = vmatprep.mubr.bf16.mxu0 0
        %383 = vmatmul.mubr.bf16.gmra.mxu0 %v243
        %v384 = vpop.f32.mrf.mxu0
        %v385 = vadd.f32 %v268, %v384
        %v386 = vpop.f32.mrf.mxu0
        %v387 = vpop.f32.mrf.mxu0
        %v388 = vadd.f32 %v268, %v387
        %v389 = vpop.f32.mrf.mxu0
        %390 = vmatprep.mubr.bf16.mxu0 0
        %391 = vmatmul.mubr.bf16.gmra.mxu0 %v244
        %v392 = vpop.f32.mrf.mxu0
        %v393 = vadd.f32 %v268, %v392
        %v394 = vpop.f32.mrf.mxu0
        %v395 = vpop.f32.mrf.mxu0
        %v396 = vadd.f32 %v268, %v395
        %v397 = vpop.f32.mrf.mxu0
        %398 = vmatprep.mubr.bf16.mxu0 0
        %399 = vmatmul.mubr.bf16.gmra.mxu0 %v245
        %v400 = vpop.f32.mrf.mxu0
        %v401 = vadd.f32 %v268, %v400
        %v402 = vpop.f32.mrf.mxu0
        %v403 = vpop.f32.mrf.mxu0
        %v404 = vadd.f32 %v268, %v403
        %v405 = vpop.f32.mrf.mxu0
        %406 = vmatprep.mubr.bf16.mxu0 0
        %407 = vmatmul.mubr.bf16.gmra.mxu0 %v246
        %v408 = vpop.f32.mrf.mxu0
        %v409 = vadd.f32 %v268, %v408
        %v410 = vpop.f32.mrf.mxu0
        %v411 = vpop.f32.mrf.mxu0
        %v412 = vadd.f32 %v268, %v411
        %v413 = vpop.f32.mrf.mxu0
        %414 = vdwg.mxu0
        %415 = vst [vmem:[%s205] sm:$0xff] %v353
        %416 = vst [vmem:[%s205 + $0x8] sm:$0xff] %v356
        %417 = vst [vmem:[%s205 + $0x10] sm:$0xff] %v361
        %418 = vst [vmem:[%s205 + $0x18] sm:$0xff] %v364
        %419 = vst [vmem:[%s205 + $0x20] sm:$0xff] %v369
        %420 = vst [vmem:[%s205 + $0x28] sm:$0xff] %v372
        %421 = vst [vmem:[%s205 + $0x30] sm:$0xff] %v377
        %422 = vst [vmem:[%s205 + $0x38] sm:$0xff] %v380
        %423 = vst [vmem:[%s205 + $0x40] sm:$0xff] %v385
        %424 = vst [vmem:[%s205 + $0x48] sm:$0xff] %v388
        %425 = vst [vmem:[%s205 + $0x50] sm:$0xff] %v393
        %426 = vst [vmem:[%s205 + $0x58] sm:$0xff] %v396
        %427 = vst [vmem:[%s205 + $0x60] sm:$0xff] %v401
        %428 = vst [vmem:[%s205 + $0x68] sm:$0xff] %v404
        %429 = vst [vmem:[%s205 + $0x70] sm:$0xff] %v409
        %430 = vst [vmem:[%s205 + $0x78] sm:$0xff] %v412
        %s431 = sand.u32 %s117, 1
        %s432 = scalar_lea.sflag [#allocation3], %s431
        %s433 = sand.u32 %s117, 1
        %s434 = smul.addr %s433, 128
        %s435 = scalar_lea.vmem [#allocation2], %s434
        // Predicated region
        $region33: #{rnnlm_forward.3} parent=31 // pred_check
          %p436 = pneg %p127
        $region34: #{rnnlm_forward.3} parent=31 // pred_check_branch
          %438 = sbr.rel (%p436) target = $region36
        $region35: #{rnnlm_forward.3} parent=31 // pred_region
          %s439 = smul.u32 16, %s21
          %s441 = ssub.s32 2048, 2048
          %442 = vsyncadd %s432, %s441
          %s443 = smul.addr %s439, 4
          %s444 = sadd.s32 %s22, %s443
          %s445 = smul.addr %s444, 128
          %s446 = scalar_lea.hbm %s3, %s445
          %s447 = sshll.u32 %s435, 4
          %s448 = int_to_ptr.vmem [resolvable:$true] %s447
          %453 = dma.vmem_to_hbm [thread:$0]  %s448, 2048, %s446, %s432, 128, 512, 8
        $region36: #{rnnlm_forward.3} parent=31 // pred_fallthru
          _
      $region32: #{rnnlm_forward.3} parent=5 // pred_fallthru
        _
      %p454 = scmp.le.s32.totalorder 2, %s12
      // Predicated region
      $region37: #{rnnlm_forward.3} parent=5 // pred_check
        %p455 = pneg %p454
      $region38: #{rnnlm_forward.3} parent=5 // pred_check_branch
        %457 = sbr.rel (%p455) target = $region40
      $region39: #{rnnlm_forward.3} parent=5 // pred_region
        %s458 = ssub.s32 %s12, 2
        // Predicated region
        $region41: #{rnnlm_forward.3} parent=39 // pred_check
          %p459 = pneg %p133
        $region42: #{rnnlm_forward.3} parent=39 // pred_check_branch
          %461 = sbr.rel (%p459) target = $region44
        $region43: #{rnnlm_forward.3} parent=39 // pred_region
          %s462 = sand.u32 %s118, 1
          %s463 = scalar_lea.sflag [#allocation3], %s462
          %s464 = sand.u32 %s118, 1
          %s465 = smul.addr %s464, 128
          %s466 = scalar_lea.vmem [#allocation2], %s465
          %467 = dma.done %s463, 2048
        $region44: #{rnnlm_forward.3} parent=39 // pred_fallthru
          _
      $region40: #{rnnlm_forward.3} parent=5 // pred_fallthru
        _
    $region6: #{rnnlm_forward.3} parent=1 // loop_footer
      %s16 = sadd.s32 1, %s12
    $region7: #{rnnlm_forward.3} parent=1 // loop_footer_branch
      %11 = sbr.rel target = $region3
    $region8: #{rnnlm_forward.3} parent=1 // loop_exit
      _
    %468 = vsyncpa [#allocation3], 1
    %s469 = scalar_lea.sflag [#allocation3], 1
    %470 = vsyncpa %s469, 1

// kernel: rnnlm_forward.2
$region0: #{rnnlm_forward.2}
  #allocation0 [shape = 'u32[]', space=smem, size = 0x4, offset = 0x4, fixed_abs, tag = 'smem constant byte address 0x4 - core index']
  #allocation1 [shape = 'u32[144,128]{1,0:T(1,128)}', space=vmem, size = 0x12000, scoped, tag = 'internal scratch']
  #allocation2 [shape = 'f32[2,8,128]{2,1,0:T(8,128)}', space=vmem, size = 0x2000, scoped, tag = 'scratch operand']
  #allocation3 [shape = 'f32[64,128]{1,0:T(8,128)}', space=vmem, size = 0x8000, scoped, tag = 'scratch operand']
  %s0 = inlined_call_operand.vmem [shape: bf16[32,8,128], index: 0, kind: input, shape index: {}]
  %s1 = inlined_call_operand.vmem [shape: f32[2,8,128], index: 1, kind: input, shape index: {}]
  %s2 = inlined_call_operand.vmem [shape: bf16[2,128,384], index: 2, kind: input, shape index: {}]
  %s3 = inlined_call_operand.vmem [shape: bf16[2,128,384], index: 3, kind: input, shape index: {}]
  %s4 = inlined_call_operand.vmem [shape: f32[2,1,384], index: 4, kind: input, shape index: {}]
  %s5 = inlined_call_operand.vmem [shape: f32[2,1,384], index: 5, kind: input, shape index: {}]
  %s6 = inlined_call_operand.vmem [shape: f32[32,8,128], index: 6, kind: output, shape index: {0}]
  %s7 = inlined_call_operand.hbm [shape: f32[2,8,128], index: 7, kind: output, shape index: {1}]
  %8 = xla_tuple %s6, %s7
  %s9 = sld [smem:[#allocation0]]
  $region73: #{rnnlm_forward.2} parent=0
    _
  %s11 = ssub.s32 1, %s9
  %s12 = scalar_select 0, %s11, %s9
  $region1: #{rnnlm_forward.2} parent=0
    #allocation4 [shape = 'u8[8192]{0}', space=vmem, size = 0x2000, scoped, tag = 'output window, operand 1, single buffered']
    #allocation5 [shape = 's32[2]{0}', space=sflag, size = 0x8, scoped, tag = 'scoped memory for rnnlm_forward.2']
    %13 = vsyncpa [#allocation5], 0
    loop: start=0, step=1, limit=6
    $region2: #{rnnlm_forward.2} parent=1 // loop_pre_header
      _
    $region3: #{rnnlm_forward.2} parent=1 // loop_header
      %s15 = sphi 0, %s19
      %p16 = scmp.ge.s32.totalorder %s15, 6
      %s25 = sphi 0, %s27
      %s28 = sphi 0, %s25
      %s29 = sphi 0, %s28
      %s45 = sphi 0, %s29
      %s49 = sphi 0, %s49
      %s51 = sphi 0, %s49
      %s52 = sphi 0, %s51
      %s66 = sphi 0, %s52
      %s70 = sphi 0, %s70
      %s72 = sphi 0, %s70
      %s73 = sphi 0, %s72
      %s87 = sphi 0, %s73
      %s91 = sphi 0, %s91
      %s93 = sphi 0, %s91
      %s94 = sphi 0, %s93
      %s108 = sphi 0, %s94
      %s112 = sphi 0, %s112
      %s114 = sphi 0, %s112
      %s115 = sphi 0, %s114
      %s129 = sphi 0, %s115
      %s133 = sphi 0, %s133
      %s135 = sphi 0, %s133
      %s136 = sphi 0, %s135
      %s150 = sphi 0, %s136
      %s156 = sphi 0, %s158
      %s159 = sphi 0, %s156
      %s160 = sphi 0, %s159
      %s176 = sphi 0, %s160
      %s180 = sphi 0, %s180
      %s182 = sphi 0, %s180
      %s183 = sphi 0, %s182
      %s197 = sphi 0, %s183
    $region4: #{rnnlm_forward.2} parent=1 // loop_header_branch
      %18 = sbr.rel (%p16) target = $region8
    $region5: #{rnnlm_forward.2} parent=1 // loop_body
      %s20 = ssub.s32 %s15, 1
      %s21 = ssub.s32 %s15, 2
      %s22 = sadd.s32 %s15, 1
      %s23 = ssub.s32 %s15, %s22
      %p24 = scmp.eq.s32.totalorder %s23, 0
      %s26 = sadd.s32 %s25, 1
      %s27 = scalar_select %p24, %s25, %s26
      %p30 = pneg %p24
      %p31 = scmp.eq.s32.totalorder %s15, 3
      %p32 = por %p30, %p31
      %p33 = scmp.ne.s32.totalorder %s25, %s28
      %p34 = scmp.eq.s32.totalorder %s15, 0
      %p35 = por %p33, %p34
      %p36 = scmp.ne.s32.totalorder %s25, %s28
      %p37 = scmp.eq.s32.totalorder %s20, 3
      %p38 = por %p36, %p37
      %p39 = scmp.ne.s32.totalorder %s28, %s29
      %p40 = scmp.eq.s32.totalorder %s20, 0
      %p41 = por %p39, %p40
      %p42 = scmp.ne.s32.totalorder %s28, %s29
      %p43 = scmp.eq.s32.totalorder %s21, 3
      %p44 = por %p42, %p43
      %p46 = scmp.ne.s32.totalorder %s29, %s45
      %p47 = scmp.eq.s32.totalorder %s21, 0
      %p48 = por %p46, %p47
      %s50 = sadd.s32 %s49, 1
      %p53 = scmp.eq.s32.totalorder %s15, 3
      %p54 = scmp.ne.s32.totalorder %s49, %s51
      %p55 = scmp.eq.s32.totalorder %s15, 0
      %p56 = por %p54, %p55
      %p57 = scmp.ne.s32.totalorder %s49, %s51
      %p58 = scmp.eq.s32.totalorder %s20, 3
      %p59 = por %p57, %p58
      %p60 = scmp.ne.s32.totalorder %s51, %s52
      %p61 = scmp.eq.s32.totalorder %s20, 0
      %p62 = por %p60, %p61
      %p63 = scmp.ne.s32.totalorder %s51, %s52
      %p64 = scmp.eq.s32.totalorder %s21, 3
      %p65 = por %p63, %p64
      %p67 = scmp.ne.s32.totalorder %s52, %s66
      %p68 = scmp.eq.s32.totalorder %s21, 0
      %p69 = por %p67, %p68
      %s71 = sadd.s32 %s70, 1
      %p74 = scmp.eq.s32.totalorder %s15, 3
      %p75 = scmp.ne.s32.totalorder %s70, %s72
      %p76 = scmp.eq.s32.totalorder %s15, 0
      %p77 = por %p75, %p76
      %p78 = scmp.ne.s32.totalorder %s70, %s72
      %p79 = scmp.eq.s32.totalorder %s20, 3
      %p80 = por %p78, %p79
      %p81 = scmp.ne.s32.totalorder %s72, %s73
      %p82 = scmp.eq.s32.totalorder %s20, 0
      %p83 = por %p81, %p82
      %p84 = scmp.ne.s32.totalorder %s72, %s73
      %p85 = scmp.eq.s32.totalorder %s21, 3
      %p86 = por %p84, %p85
      %p88 = scmp.ne.s32.totalorder %s73, %s87
      %p89 = scmp.eq.s32.totalorder %s21, 0
      %p90 = por %p88, %p89
      %s92 = sadd.s32 %s91, 1
      %p95 = scmp.eq.s32.totalorder %s15, 3
      %p96 = scmp.ne.s32.totalorder %s91, %s93
      %p97 = scmp.eq.s32.totalorder %s15, 0
      %p98 = por %p96, %p97
      %p99 = scmp.ne.s32.totalorder %s91, %s93
      %p100 = scmp.eq.s32.totalorder %s20, 3
      %p101 = por %p99, %p100
      %p102 = scmp.ne.s32.totalorder %s93, %s94
      %p103 = scmp.eq.s32.totalorder %s20, 0
      %p104 = por %p102, %p103
      %p105 = scmp.ne.s32.totalorder %s93, %s94
      %p106 = scmp.eq.s32.totalorder %s21, 3
      %p107 = por %p105, %p106
      %p109 = scmp.ne.s32.totalorder %s94, %s108
      %p110 = scmp.eq.s32.totalorder %s21, 0
      %p111 = por %p109, %p110
      %s113 = sadd.s32 %s112, 1
      %p116 = scmp.eq.s32.totalorder %s15, 3
      %p117 = scmp.ne.s32.totalorder %s112, %s114
      %p118 = scmp.eq.s32.totalorder %s15, 0
      %p119 = por %p117, %p118
      %p120 = scmp.ne.s32.totalorder %s112, %s114
      %p121 = scmp.eq.s32.totalorder %s20, 3
      %p122 = por %p120, %p121
      %p123 = scmp.ne.s32.totalorder %s114, %s115
      %p124 = scmp.eq.s32.totalorder %s20, 0
      %p125 = por %p123, %p124
      %p126 = scmp.ne.s32.totalorder %s114, %s115
      %p127 = scmp.eq.s32.totalorder %s21, 3
      %p128 = por %p126, %p127
      %p130 = scmp.ne.s32.totalorder %s115, %s129
      %p131 = scmp.eq.s32.totalorder %s21, 0
      %p132 = por %p130, %p131
      %s134 = sadd.s32 %s133, 1
      %p137 = scmp.eq.s32.totalorder %s15, 3
      %p138 = scmp.ne.s32.totalorder %s133, %s135
      %p139 = scmp.eq.s32.totalorder %s15, 0
      %p140 = por %p138, %p139
      %p141 = scmp.ne.s32.totalorder %s133, %s135
      %p142 = scmp.eq.s32.totalorder %s20, 3
      %p143 = por %p141, %p142
      %p144 = scmp.ne.s32.totalorder %s135, %s136
      %p145 = scmp.eq.s32.totalorder %s20, 0
      %p146 = por %p144, %p145
      %p147 = scmp.ne.s32.totalorder %s135, %s136
      %p148 = scmp.eq.s32.totalorder %s21, 3
      %p149 = por %p147, %p148
      %p151 = scmp.ne.s32.totalorder %s136, %s150
      %p152 = scmp.eq.s32.totalorder %s21, 0
      %p153 = por %p151, %p152
      %s154 = ssub.s32 %s15, %s22
      %p155 = scmp.eq.s32.totalorder %s154, 0
      %s157 = sadd.s32 %s156, 1
      %s158 = scalar_select %p155, %s156, %s157
      %p161 = pneg %p155
      %p162 = scmp.eq.s32.totalorder %s15, 3
      %p163 = por %p161, %p162
      %p164 = scmp.ne.s32.totalorder %s156, %s159
      %p165 = scmp.eq.s32.totalorder %s15, 0
      %p166 = por %p164, %p165
      %p167 = scmp.ne.s32.totalorder %s156, %s159
      %p168 = scmp.eq.s32.totalorder %s20, 3
      %p169 = por %p167, %p168
      %p170 = scmp.ne.s32.totalorder %s159, %s160
      %p171 = scmp.eq.s32.totalorder %s20, 0
      %p172 = por %p170, %p171
      %p173 = scmp.ne.s32.totalorder %s159, %s160
      %p174 = scmp.eq.s32.totalorder %s21, 3
      %p175 = por %p173, %p174
      %p177 = scmp.ne.s32.totalorder %s160, %s176
      %p178 = scmp.eq.s32.totalorder %s21, 0
      %p179 = por %p177, %p178
      %s181 = sadd.s32 %s180, 1
      %p184 = scmp.eq.s32.totalorder %s15, 3
      %p185 = scmp.ne.s32.totalorder %s180, %s182
      %p186 = scmp.eq.s32.totalorder %s15, 0
      %p187 = por %p185, %p186
      %p188 = scmp.ne.s32.totalorder %s180, %s182
      %p189 = scmp.eq.s32.totalorder %s20, 3
      %p190 = por %p188, %p189
      %p191 = scmp.ne.s32.totalorder %s182, %s183
      %p192 = scmp.eq.s32.totalorder %s20, 0
      %p193 = por %p191, %p192
      %p194 = scmp.ne.s32.totalorder %s182, %s183
      %p195 = scmp.eq.s32.totalorder %s21, 3
      %p196 = por %p194, %p195
      %p198 = scmp.ne.s32.totalorder %s183, %s197
      %p199 = scmp.eq.s32.totalorder %s21, 0
      %p200 = por %p198, %p199
      %p201 = scmp.le.s32.totalorder 1, %s15
      %p202 = scmp.lt.s32.totalorder %s15, 5
      %p203 = pnand %p201, %p202
      %p204 = pneg %p203
      // Predicated region
      $region9: #{rnnlm_forward.2} parent=5 // pred_check
        _
      $region10: #{rnnlm_forward.2} parent=5 // pred_check_branch
        %206 = sbr.rel (%p203) target = $region12
      $region11: #{rnnlm_forward.2} parent=5 // pred_region
        %s207 = ssub.s32 %s15, 1
        // Predicated region
        $region13: #{rnnlm_forward.2} parent=11 // pred_check
          %p208 = pneg %p62
        $region14: #{rnnlm_forward.2} parent=11 // pred_check_branch
          %210 = sbr.rel (%p208) target = $region16
        $region15: #{rnnlm_forward.2} parent=11 // pred_region
          _
        $region16: #{rnnlm_forward.2} parent=11 // pred_fallthru
          _
        // Predicated region
        $region17: #{rnnlm_forward.2} parent=11 // pred_check
          %p211 = pneg %p83
        $region18: #{rnnlm_forward.2} parent=11 // pred_check_branch
          %213 = sbr.rel (%p211) target = $region20
        $region19: #{rnnlm_forward.2} parent=11 // pred_region
          _
        $region20: #{rnnlm_forward.2} parent=11 // pred_fallthru
          _
        // Predicated region
        $region21: #{rnnlm_forward.2} parent=11 // pred_check
          %p214 = pneg %p104
        $region22: #{rnnlm_forward.2} parent=11 // pred_check_branch
          %216 = sbr.rel (%p214) target = $region24
        $region23: #{rnnlm_forward.2} parent=11 // pred_region
          _
        $region24: #{rnnlm_forward.2} parent=11 // pred_fallthru
          _
        // Predicated region
        $region25: #{rnnlm_forward.2} parent=11 // pred_check
          %p217 = pneg %p125
        $region26: #{rnnlm_forward.2} parent=11 // pred_check_branch
          %219 = sbr.rel (%p217) target = $region28
        $region27: #{rnnlm_forward.2} parent=11 // pred_region
          _
        $region28: #{rnnlm_forward.2} parent=11 // pred_fallthru
          _
        // Predicated region
        $region29: #{rnnlm_forward.2} parent=11 // pred_check
          %p220 = pneg %p146
        $region30: #{rnnlm_forward.2} parent=11 // pred_check_branch
          %222 = sbr.rel (%p220) target = $region32
        $region31: #{rnnlm_forward.2} parent=11 // pred_region
          _
        $region32: #{rnnlm_forward.2} parent=11 // pred_fallthru
          _
      $region12: #{rnnlm_forward.2} parent=5 // pred_fallthru
        _
      %p223 = scmp.lt.s32.totalorder %s15, 4
      // Predicated region
      $region33: #{rnnlm_forward.2} parent=5 // pred_check
        %p224 = pneg %p223
      $region34: #{rnnlm_forward.2} parent=5 // pred_check_branch
        %226 = sbr.rel (%p224) target = $region36
      $region35: #{rnnlm_forward.2} parent=5 // pred_region
        // Predicated region
        $region37: #{rnnlm_forward.2} parent=35 // pred_check
          %p227 = pneg %p35
        $region38: #{rnnlm_forward.2} parent=35 // pred_check_branch
          %229 = sbr.rel (%p227) target = $region40
        $region39: #{rnnlm_forward.2} parent=35 // pred_region
          %s230 = smul.u32 8, %s15
          %p231 = scmp.lt.s32.totalorder %s230, 31
          %s232 = scalar_select %p231, %s230, 31
          %s233 = smul.addr %s232, 4
          %s234 = scalar_lea.vmem %s0, %s233
          %s235 = smul.u32 8, %s15
        $region40: #{rnnlm_forward.2} parent=35 // pred_fallthru
          _
      $region36: #{rnnlm_forward.2} parent=5 // pred_fallthru
        _
      %p236 = scmp.le.s32.totalorder 1, %s15
      %p237 = scmp.lt.s32.totalorder %s15, 5
      %p238 = pnand %p236, %p237
      %p239 = pneg %p238
      // Predicated region
      $region41: #{rnnlm_forward.2} parent=5 // pred_check
        _
      $region42: #{rnnlm_forward.2} parent=5 // pred_check_branch
        %241 = sbr.rel (%p238) target = $region44
      $region43: #{rnnlm_forward.2} parent=5 // pred_region
        %s242 = ssub.s32 %s15, 1
        %s243 = smul.u32 8, %s20
        %p244 = scmp.lt.s32.totalorder %s243, 31
        %s245 = scalar_select %p244, %s243, 31
        %s246 = smul.addr %s245, 4
        %s247 = scalar_lea.vmem %s0, %s246
        %p248 = pneg %p41
        %p249 = pneg %p38
        %p250 = pneg %p62
        %p251 = pneg %p59
        %p252 = pneg %p83
        %p253 = pneg %p80
        %p254 = pneg %p104
        %p255 = pneg %p101
        %p256 = pneg %p125
        %p257 = pneg %p122
        %p258 = pneg %p146
        %p259 = pneg %p143
        %p260 = pneg %p172
        %p261 = pneg %p169
        %s262 = smul.u32 8, %s20
        %p263 = scmp.lt.s32.totalorder %s262, 31
        %s264 = scalar_select %p263, %s262, 31
        %s265 = smul.addr %s264, 8
        %s266 = scalar_lea.vmem %s6, %s265
        %p267 = pneg %p193
        %p268 = pneg %p190
        %s269 = smul.u32 8, %s20
        %p270 = scmp.lt.s32.totalorder %s269, 31
        %s271 = scalar_select %p270, %s269, 31
        %s272 = smul.addr %s271, 4
        %s273 = scalar_lea.vmem %s0, %s272
        %s274 = smul.u32 8, %s20
        %s275 = smul.u32 8, %s20
        %p276 = scmp.lt.s32.totalorder %s275, 31
        %s277 = scalar_select %p276, %s275, 31
        %s278 = smul.addr %s277, 8
        %s279 = scalar_lea.vmem %s6, %s278
        %s280 = smul.u32 8, %s20
        %p282 = scmp.eq.s32.totalorder %s20, 0
        // Predicated region
        $region45: #{rnnlm_forward.2} parent=43 // pred_check
          %p283 = pneg %p282
        $region46: #{rnnlm_forward.2} parent=43 // pred_check_branch
          %285 = sbr.rel (%p283) target = $region48
        $region47: #{rnnlm_forward.2} parent=43 // pred_region
          %v286 = vld [vmem:[%s1] sm:$0xff]
          %v287 = vld [vmem:[%s1 + $0x8] sm:$0xff]
          %288 = vst [vmem:[#allocation2] sm:$0xff] %v286
          %289 = vst [vmem:[#allocation2 + $0x8] sm:$0xff] %v287
        $region48: #{rnnlm_forward.2} parent=43 // pred_fallthru
          _
        %v290 = vld [vmem:[%s273] sm:$0xf]
        %v291 = vld [vmem:[%s273 + $0x4] sm:$0xf]
        %v292 = vld [vmem:[%s273 + $0x8] sm:$0xf]
        %v293 = vld [vmem:[%s273 + $0xc] sm:$0xf]
        %v294 = vld [vmem:[%s273 + $0x10] sm:$0xf]
        %v295 = vld [vmem:[%s273 + $0x14] sm:$0xf]
        %v296 = vld [vmem:[%s273 + $0x18] sm:$0xf]
        %v297 = vld [vmem:[%s273 + $0x1c] sm:$0xf]
        %v298 = vld [vmem:[%s2] sm:$0xff]
        %v299 = vld [vmem:[%s2 + $0x8] sm:$0xf]
        %v300 = vld [vmem:[%s2 + $0xc] sm:$0xff]
        %v301 = vld [vmem:[%s2 + $0x14] sm:$0xf]
        %v302 = vld [vmem:[%s2 + $0x18] sm:$0xff]
        %v303 = vld [vmem:[%s2 + $0x20] sm:$0xf]
        %v304 = vld [vmem:[%s2 + $0x24] sm:$0xff]
        %v305 = vld [vmem:[%s2 + $0x2c] sm:$0xf]
        %v306 = vld [vmem:[%s2 + $0x30] sm:$0xff]
        %v307 = vld [vmem:[%s2 + $0x38] sm:$0xf]
        %v308 = vld [vmem:[%s2 + $0x3c] sm:$0xff]
        %v309 = vld [vmem:[%s2 + $0x44] sm:$0xf]
        %v310 = vld [vmem:[%s2 + $0x48] sm:$0xff]
        %v311 = vld [vmem:[%s2 + $0x50] sm:$0xf]
        %v312 = vld [vmem:[%s2 + $0x54] sm:$0xff]
        %v313 = vld [vmem:[%s2 + $0x5c] sm:$0xf]
        %v314 = vld [vmem:[%s2 + $0x60] sm:$0xff]
        %v315 = vld [vmem:[%s2 + $0x68] sm:$0xf]
        %v316 = vld [vmem:[%s2 + $0x6c] sm:$0xff]
        %v317 = vld [vmem:[%s2 + $0x74] sm:$0xf]
        %v318 = vld [vmem:[%s2 + $0x78] sm:$0xff]
        %v319 = vld [vmem:[%s2 + $0x80] sm:$0xf]
        %v320 = vld [vmem:[%s2 + $0x84] sm:$0xff]
        %v321 = vld [vmem:[%s2 + $0x8c] sm:$0xf]
        %v322 = vld [vmem:[%s2 + $0x90] sm:$0xff]
        %v323 = vld [vmem:[%s2 + $0x98] sm:$0xf]
        %v324 = vld [vmem:[%s2 + $0x9c] sm:$0xff]
        %v325 = vld [vmem:[%s2 + $0xa4] sm:$0xf]
        %v326 = vld [vmem:[%s2 + $0xa8] sm:$0xff]
        %v327 = vld [vmem:[%s2 + $0xb0] sm:$0xf]
        %v328 = vld [vmem:[%s2 + $0xb4] sm:$0xff]
        %v329 = vld [vmem:[%s2 + $0xbc] sm:$0xf]
        %v330 = vld [vmem:[%s4] sm:$0x7]
        %v332 = vlaneseq
        %v333 = vshrl.u32 %v332, 7
        %v334 = vsub.s32 0, %v333
        %v335 = vrot.slane %v330, %v334
        %v336 = vlaneseq
        %v337 = vshrl.u32 %v336, 7
        %v338 = vsub.s32 1, %v337
        %v339 = vrot.slane %v330, %v338
        %v340 = vlaneseq
        %v341 = vshrl.u32 %v340, 7
        %v342 = vsub.s32 2, %v341
        %v343 = vrot.slane %v330, %v342
        %v355 = vunpack.c.l.b16 %v290
        %v356 = vunpack.c.l.b16 %v291
        %v357 = vunpack.c.l.b16 %v292
        %v358 = vunpack.c.l.b16 %v293
        %v359 = vunpack.c.l.b16 %v294
        %v360 = vunpack.c.l.b16 %v295
        %v361 = vunpack.c.l.b16 %v296
        %v362 = vunpack.c.l.b16 %v297
        %v363 = vpack.c.b16 %v356, %v355
        %v364 = vpack.c.b16 %v358, %v357
        %v365 = vpack.c.b16 %v360, %v359
        %v366 = vpack.c.b16 %v362, %v361
        %v403 = vunpack.c.l.b16 %v298
        %v404 = vunpack.c.h.b16 %v298
        %v405 = vunpack.c.l.b16 %v299
        %v406 = vunpack.c.l.b16 %v300
        %v407 = vunpack.c.h.b16 %v300
        %v408 = vunpack.c.l.b16 %v301
        %v409 = vunpack.c.l.b16 %v302
        %v410 = vunpack.c.h.b16 %v302
        %v411 = vunpack.c.l.b16 %v303
        %v412 = vunpack.c.l.b16 %v304
        %v413 = vunpack.c.h.b16 %v304
        %v414 = vunpack.c.l.b16 %v305
        %v415 = vunpack.c.l.b16 %v306
        %v416 = vunpack.c.h.b16 %v306
        %v417 = vunpack.c.l.b16 %v307
        %v418 = vunpack.c.l.b16 %v308
        %v419 = vunpack.c.h.b16 %v308
        %v420 = vunpack.c.l.b16 %v309
        %v421 = vunpack.c.l.b16 %v310
        %v422 = vunpack.c.h.b16 %v310
        %v423 = vunpack.c.l.b16 %v311
        %v424 = vunpack.c.l.b16 %v312
        %v425 = vunpack.c.h.b16 %v312
        %v426 = vunpack.c.l.b16 %v313
        %v427 = vunpack.c.l.b16 %v314
        %v428 = vunpack.c.h.b16 %v314
        %v429 = vunpack.c.l.b16 %v315
        %v430 = vunpack.c.l.b16 %v316
        %v431 = vunpack.c.h.b16 %v316
        %v432 = vunpack.c.l.b16 %v317
        %v433 = vunpack.c.l.b16 %v318
        %v434 = vunpack.c.h.b16 %v318
        %v435 = vunpack.c.l.b16 %v319
        %v436 = vunpack.c.l.b16 %v320
        %v437 = vunpack.c.h.b16 %v320
        %v438 = vunpack.c.l.b16 %v321
        %v439 = vunpack.c.l.b16 %v322
        %v440 = vunpack.c.h.b16 %v322
        %v441 = vunpack.c.l.b16 %v323
        %v442 = vunpack.c.l.b16 %v324
        %v443 = vunpack.c.h.b16 %v324
        %v444 = vunpack.c.l.b16 %v325
        %v445 = vunpack.c.l.b16 %v326
        %v446 = vunpack.c.h.b16 %v326
        %v447 = vunpack.c.l.b16 %v327
        %v448 = vunpack.c.l.b16 %v328
        %v449 = vunpack.c.h.b16 %v328
        %v450 = vunpack.c.l.b16 %v329
        %v451 = vpack.c.b16 %v406, %v403
        %v452 = vpack.c.b16 %v407, %v404
        %v453 = vpack.c.b16 %v408, %v405
        %v454 = vpack.c.b16 %v412, %v409
        %v455 = vpack.c.b16 %v413, %v410
        %v456 = vpack.c.b16 %v414, %v411
        %v457 = vpack.c.b16 %v418, %v415
        %v458 = vpack.c.b16 %v419, %v416
        %v459 = vpack.c.b16 %v420, %v417
        %v460 = vpack.c.b16 %v424, %v421
        %v461 = vpack.c.b16 %v425, %v422
        %v462 = vpack.c.b16 %v426, %v423
        %v463 = vpack.c.b16 %v430, %v427
        %v464 = vpack.c.b16 %v431, %v428
        %v465 = vpack.c.b16 %v432, %v429
        %v466 = vpack.c.b16 %v436, %v433
        %v467 = vpack.c.b16 %v437, %v434
        %v468 = vpack.c.b16 %v438, %v435
        %v469 = vpack.c.b16 %v442, %v439
        %v470 = vpack.c.b16 %v443, %v440
        %v471 = vpack.c.b16 %v444, %v441
        %v472 = vpack.c.b16 %v448, %v445
        %v473 = vpack.c.b16 %v449, %v446
        %v474 = vpack.c.b16 %v450, %v447
        %499 = vmatprep.subr.bf16.mxu0 %v473
        %500 = vmatpush1.bf16.msra.mxu0 %v472
        %501 = vmatprep.subr.bf16.mxu0 %v470
        %502 = vmatpush1.bf16.msra.mxu0 %v469
        %503 = vmatprep.subr.bf16.mxu0 %v467
        %504 = vmatpush1.bf16.msra.mxu0 %v466
        %505 = vmatprep.subr.bf16.mxu0 %v464
        %506 = vmatpush1.bf16.msra.mxu0 %v463
        %507 = vmatprep.subr.bf16.mxu0 %v461
        %508 = vmatpush1.bf16.msra.mxu0 %v460
        %509 = vmatprep.subr.bf16.mxu0 %v458
        %510 = vmatpush1.bf16.msra.mxu0 %v457
        %511 = vmatprep.subr.bf16.mxu0 %v455
        %512 = vmatpush1.bf16.msra.mxu0 %v454
        %513 = vmatprep.subr.bf16.mxu0 %v452
        %514 = vmatpush1.bf16.msra.mxu0 %v451
        %515 = vmatprep.subr.bf16.mxu0 0
        %516 = vmatpush2.bf16.msra.mxu0 0
        %517 = vmatprep.subr.bf16.mxu0 0
        %518 = vmatpush2.bf16.msra.mxu0 0
        %519 = vmatprep.subr.bf16.mxu0 0
        %520 = vmatpush2.bf16.msra.mxu0 0
        %521 = vmatprep.subr.bf16.mxu0 0
        %522 = vmatpush2.bf16.msra.mxu0 0
        %523 = vmatprep.subr.bf16.mxu0 0
        %524 = vmatpush2.bf16.msra.mxu0 0
        %525 = vmatprep.subr.bf16.mxu0 0
        %526 = vmatpush2.bf16.msra.mxu0 0
        %527 = vmatprep.subr.bf16.mxu0 0
        %528 = vmatpush2.bf16.msra.mxu0 0
        %529 = vmatprep.subr.bf16.mxu0 0
        %530 = vmatpush2.bf16.msra.mxu0 0
        %531 = vmatprep.mubr.bf16.mxu0 0
        %532 = vmatmul.mubr.bf16.gmra.mxu0 %v363
        %v533 = vpop.f32.mrf.mxu0
        %v534 = vadd.f32 %v335, %v533
        %v535 = vpop.f32.mrf.mxu0
        %v536 = vadd.f32 %v339, %v535
        %v537 = vpop.f32.mrf.mxu0
        %v538 = vadd.f32 %v335, %v537
        %v539 = vpop.f32.mrf.mxu0
        %v540 = vadd.f32 %v339, %v539
        %541 = vmatprep.mubr.bf16.mxu0 0
        %542 = vmatmul.mubr.bf16.gmra.mxu0 %v364
        %v543 = vpop.f32.mrf.mxu0
        %v544 = vadd.f32 %v335, %v543
        %v545 = vpop.f32.mrf.mxu0
        %v546 = vadd.f32 %v339, %v545
        %v547 = vpop.f32.mrf.mxu0
        %v548 = vadd.f32 %v335, %v547
        %v549 = vpop.f32.mrf.mxu0
        %v550 = vadd.f32 %v339, %v549
        %551 = vmatprep.mubr.bf16.mxu0 0
        %552 = vmatmul.mubr.bf16.gmra.mxu0 %v365
        %v553 = vpop.f32.mrf.mxu0
        %v554 = vadd.f32 %v335, %v553
        %v555 = vpop.f32.mrf.mxu0
        %v556 = vadd.f32 %v339, %v555
        %v557 = vpop.f32.mrf.mxu0
        %v558 = vadd.f32 %v335, %v557
        %v559 = vpop.f32.mrf.mxu0
        %v560 = vadd.f32 %v339, %v559
        %561 = vmatprep.mubr.bf16.mxu0 0
        %562 = vmatmul.mubr.bf16.gmra.mxu0 %v366
        %v563 = vpop.f32.mrf.mxu0
        %v564 = vadd.f32 %v335, %v563
        %v565 = vpop.f32.mrf.mxu0
        %v566 = vadd.f32 %v339, %v565
        %v567 = vpop.f32.mrf.mxu0
        %v568 = vadd.f32 %v335, %v567
        %v569 = vpop.f32.mrf.mxu0
        %v570 = vadd.f32 %v339, %v569
        %571 = vdwg.mxu0
        %572 = vmatprep.subr.bf16.mxu0 0
        %573 = vmatpush1.bf16.msra.mxu0 %v474
        %574 = vmatprep.subr.bf16.mxu0 0
        %575 = vmatpush1.bf16.msra.mxu0 %v471
        %576 = vmatprep.subr.bf16.mxu0 0
        %577 = vmatpush1.bf16.msra.mxu0 %v468
        %578 = vmatprep.subr.bf16.mxu0 0
        %579 = vmatpush1.bf16.msra.mxu0 %v465
        %580 = vmatprep.subr.bf16.mxu0 0
        %581 = vmatpush1.bf16.msra.mxu0 %v462
        %582 = vmatprep.subr.bf16.mxu0 0
        %583 = vmatpush1.bf16.msra.mxu0 %v459
        %584 = vmatprep.subr.bf16.mxu0 0
        %585 = vmatpush1.bf16.msra.mxu0 %v456
        %586 = vmatprep.subr.bf16.mxu0 0
        %587 = vmatpush1.bf16.msra.mxu0 %v453
        %588 = vmatprep.subr.bf16.mxu0 0
        %589 = vmatpush2.bf16.msra.mxu0 0
        %590 = vmatprep.subr.bf16.mxu0 0
        %591 = vmatpush2.bf16.msra.mxu0 0
        %592 = vmatprep.subr.bf16.mxu0 0
        %593 = vmatpush2.bf16.msra.mxu0 0
        %594 = vmatprep.subr.bf16.mxu0 0
        %595 = vmatpush2.bf16.msra.mxu0 0
        %596 = vmatprep.subr.bf16.mxu0 0
        %597 = vmatpush2.bf16.msra.mxu0 0
        %598 = vmatprep.subr.bf16.mxu0 0
        %599 = vmatpush2.bf16.msra.mxu0 0
        %600 = vmatprep.subr.bf16.mxu0 0
        %601 = vmatpush2.bf16.msra.mxu0 0
        %602 = vmatprep.subr.bf16.mxu0 0
        %603 = vmatpush2.bf16.msra.mxu0 0
        %604 = vmatprep.mubr.bf16.mxu0 0
        %605 = vmatmul.mubr.bf16.gmra.mxu0 %v363
        %v606 = vpop.f32.mrf.mxu0
        %v607 = vadd.f32 %v343, %v606
        %v608 = vpop.f32.mrf.mxu0
        %v609 = vpop.f32.mrf.mxu0
        %v610 = vadd.f32 %v343, %v609
        %v611 = vpop.f32.mrf.mxu0
        %612 = vmatprep.mubr.bf16.mxu0 0
        %613 = vmatmul.mubr.bf16.gmra.mxu0 %v364
        %v614 = vpop.f32.mrf.mxu0
        %v615 = vadd.f32 %v343, %v614
        %v616 = vpop.f32.mrf.mxu0
        %v617 = vpop.f32.mrf.mxu0
        %v618 = vadd.f32 %v343, %v617
        %v619 = vpop.f32.mrf.mxu0
        %620 = vmatprep.mubr.bf16.mxu0 0
        %621 = vmatmul.mubr.bf16.gmra.mxu0 %v365
        %v622 = vpop.f32.mrf.mxu0
        %v623 = vadd.f32 %v343, %v622
        %v624 = vpop.f32.mrf.mxu0
        %v625 = vpop.f32.mrf.mxu0
        %v626 = vadd.f32 %v343, %v625
        %v627 = vpop.f32.mrf.mxu0
        %628 = vmatprep.mubr.bf16.mxu0 0
        %629 = vmatmul.mubr.bf16.gmra.mxu0 %v366
        %v630 = vpop.f32.mrf.mxu0
        %v631 = vadd.f32 %v343, %v630
        %v632 = vpop.f32.mrf.mxu0
        %v633 = vpop.f32.mrf.mxu0
        %v634 = vadd.f32 %v343, %v633
        %v635 = vpop.f32.mrf.mxu0
        %636 = vdwg.mxu0
        %v637 = vld [vmem:[#allocation2] sm:$0xff]
        %v638 = vld [vmem:[%s3] sm:$0xff]
        %v639 = vld [vmem:[%s3 + $0x8] sm:$0xf]
        %v640 = vld [vmem:[%s3 + $0xc] sm:$0xff]
        %v641 = vld [vmem:[%s3 + $0x14] sm:$0xf]
        %v642 = vld [vmem:[%s3 + $0x18] sm:$0xff]
        %v643 = vld [vmem:[%s3 + $0x20] sm:$0xf]
        %v644 = vld [vmem:[%s3 + $0x24] sm:$0xff]
        %v645 = vld [vmem:[%s3 + $0x2c] sm:$0xf]
        %v646 = vld [vmem:[%s3 + $0x30] sm:$0xff]
        %v647 = vld [vmem:[%s3 + $0x38] sm:$0xf]
        %v648 = vld [vmem:[%s3 + $0x3c] sm:$0xff]
        %v649 = vld [vmem:[%s3 + $0x44] sm:$0xf]
        %v650 = vld [vmem:[%s3 + $0x48] sm:$0xff]
        %v651 = vld [vmem:[%s3 + $0x50] sm:$0xf]
        %v652 = vld [vmem:[%s3 + $0x54] sm:$0xff]
        %v653 = vld [vmem:[%s3 + $0x5c] sm:$0xf]
        %v654 = vld [vmem:[%s3 + $0x60] sm:$0xff]
        %v655 = vld [vmem:[%s3 + $0x68] sm:$0xf]
        %v656 = vld [vmem:[%s3 + $0x6c] sm:$0xff]
        %v657 = vld [vmem:[%s3 + $0x74] sm:$0xf]
        %v658 = vld [vmem:[%s3 + $0x78] sm:$0xff]
        %v659 = vld [vmem:[%s3 + $0x80] sm:$0xf]
        %v660 = vld [vmem:[%s3 + $0x84] sm:$0xff]
        %v661 = vld [vmem:[%s3 + $0x8c] sm:$0xf]
        %v662 = vld [vmem:[%s3 + $0x90] sm:$0xff]
        %v663 = vld [vmem:[%s3 + $0x98] sm:$0xf]
        %v664 = vld [vmem:[%s3 + $0x9c] sm:$0xff]
        %v665 = vld [vmem:[%s3 + $0xa4] sm:$0xf]
        %v666 = vld [vmem:[%s3 + $0xa8] sm:$0xff]
        %v667 = vld [vmem:[%s3 + $0xb0] sm:$0xf]
        %v668 = vld [vmem:[%s3 + $0xb4] sm:$0xff]
        %v669 = vld [vmem:[%s3 + $0xbc] sm:$0xf]
        %v670 = vld [vmem:[%s5] sm:$0x7]
        %v671 = vpack.c.bf16 %v637, %v637
        %v673 = vlaneseq
        %v674 = vshrl.u32 %v673, 7
        %v675 = vsub.s32 0, %v674
        %v676 = vrot.slane %v670, %v675
        %v677 = vlaneseq
        %v678 = vshrl.u32 %v677, 7
        %v679 = vsub.s32 1, %v678
        %v680 = vrot.slane %v670, %v679
        %v681 = vlaneseq
        %v682 = vshrl.u32 %v681, 7
        %v683 = vsub.s32 2, %v682
        %v684 = vrot.slane %v670, %v683
        %v720 = vunpack.c.l.b16 %v638
        %v721 = vunpack.c.h.b16 %v638
        %v722 = vunpack.c.l.b16 %v639
        %v723 = vunpack.c.l.b16 %v640
        %v724 = vunpack.c.h.b16 %v640
        %v725 = vunpack.c.l.b16 %v641
        %v726 = vunpack.c.l.b16 %v642
        %v727 = vunpack.c.h.b16 %v642
        %v728 = vunpack.c.l.b16 %v643
        %v729 = vunpack.c.l.b16 %v644
        %v730 = vunpack.c.h.b16 %v644
        %v731 = vunpack.c.l.b16 %v645
        %v732 = vunpack.c.l.b16 %v646
        %v733 = vunpack.c.h.b16 %v646
        %v734 = vunpack.c.l.b16 %v647
        %v735 = vunpack.c.l.b16 %v648
        %v736 = vunpack.c.h.b16 %v648
        %v737 = vunpack.c.l.b16 %v649
        %v738 = vunpack.c.l.b16 %v650
        %v739 = vunpack.c.h.b16 %v650
        %v740 = vunpack.c.l.b16 %v651
        %v741 = vunpack.c.l.b16 %v652
        %v742 = vunpack.c.h.b16 %v652
        %v743 = vunpack.c.l.b16 %v653
        %v744 = vunpack.c.l.b16 %v654
        %v745 = vunpack.c.h.b16 %v654
        %v746 = vunpack.c.l.b16 %v655
        %v747 = vunpack.c.l.b16 %v656
        %v748 = vunpack.c.h.b16 %v656
        %v749 = vunpack.c.l.b16 %v657
        %v750 = vunpack.c.l.b16 %v658
        %v751 = vunpack.c.h.b16 %v658
        %v752 = vunpack.c.l.b16 %v659
        %v753 = vunpack.c.l.b16 %v660
        %v754 = vunpack.c.h.b16 %v660
        %v755 = vunpack.c.l.b16 %v661
        %v756 = vunpack.c.l.b16 %v662
        %v757 = vunpack.c.h.b16 %v662
        %v758 = vunpack.c.l.b16 %v663
        %v759 = vunpack.c.l.b16 %v664
        %v760 = vunpack.c.h.b16 %v664
        %v761 = vunpack.c.l.b16 %v665
        %v762 = vunpack.c.l.b16 %v666
        %v763 = vunpack.c.h.b16 %v666
        %v764 = vunpack.c.l.b16 %v667
        %v765 = vunpack.c.l.b16 %v668
        %v766 = vunpack.c.h.b16 %v668
        %v767 = vunpack.c.l.b16 %v669
        %v768 = vpack.c.b16 %v723, %v720
        %v769 = vpack.c.b16 %v724, %v721
        %v770 = vpack.c.b16 %v725, %v722
        %v771 = vpack.c.b16 %v729, %v726
        %v772 = vpack.c.b16 %v730, %v727
        %v773 = vpack.c.b16 %v731, %v728
        %v774 = vpack.c.b16 %v735, %v732
        %v775 = vpack.c.b16 %v736, %v733
        %v776 = vpack.c.b16 %v737, %v734
        %v777 = vpack.c.b16 %v741, %v738
        %v778 = vpack.c.b16 %v742, %v739
        %v779 = vpack.c.b16 %v743, %v740
        %v780 = vpack.c.b16 %v747, %v744
        %v781 = vpack.c.b16 %v748, %v745
        %v782 = vpack.c.b16 %v749, %v746
        %v783 = vpack.c.b16 %v753, %v750
        %v784 = vpack.c.b16 %v754, %v751
        %v785 = vpack.c.b16 %v755, %v752
        %v786 = vpack.c.b16 %v759, %v756
        %v787 = vpack.c.b16 %v760, %v757
        %v788 = vpack.c.b16 %v761, %v758
        %v789 = vpack.c.b16 %v765, %v762
        %v790 = vpack.c.b16 %v766, %v763
        %v791 = vpack.c.b16 %v767, %v764
        %816 = vmatprep.subr.bf16.mxu0 %v790
        %817 = vmatpush1.bf16.msra.mxu0 %v789
        %818 = vmatprep.subr.bf16.mxu0 %v787
        %819 = vmatpush1.bf16.msra.mxu0 %v786
        %820 = vmatprep.subr.bf16.mxu0 %v784
        %821 = vmatpush1.bf16.msra.mxu0 %v783
        %822 = vmatprep.subr.bf16.mxu0 %v781
        %823 = vmatpush1.bf16.msra.mxu0 %v780
        %824 = vmatprep.subr.bf16.mxu0 %v778
        %825 = vmatpush1.bf16.msra.mxu0 %v777
        %826 = vmatprep.subr.bf16.mxu0 %v775
        %827 = vmatpush1.bf16.msra.mxu0 %v774
        %828 = vmatprep.subr.bf16.mxu0 %v772
        %829 = vmatpush1.bf16.msra.mxu0 %v771
        %830 = vmatprep.subr.bf16.mxu0 %v769
        %831 = vmatpush1.bf16.msra.mxu0 %v768
        %832 = vmatprep.subr.bf16.mxu0 0
        %833 = vmatpush2.bf16.msra.mxu0 0
        %834 = vmatprep.subr.bf16.mxu0 0
        %835 = vmatpush2.bf16.msra.mxu0 0
        %836 = vmatprep.subr.bf16.mxu0 0
        %837 = vmatpush2.bf16.msra.mxu0 0
        %838 = vmatprep.subr.bf16.mxu0 0
        %839 = vmatpush2.bf16.msra.mxu0 0
        %840 = vmatprep.subr.bf16.mxu0 0
        %841 = vmatpush2.bf16.msra.mxu0 0
        %842 = vmatprep.subr.bf16.mxu0 0
        %843 = vmatpush2.bf16.msra.mxu0 0
        %844 = vmatprep.subr.bf16.mxu0 0
        %845 = vmatpush2.bf16.msra.mxu0 0
        %846 = vmatprep.subr.bf16.mxu0 0
        %847 = vmatpush2.bf16.msra.mxu0 0
        %848 = vmatprep.mubr.bf16.mxu0 0
        %849 = vmatmul.mubr.bf16.gmra.mxu0 %v671
        %v850 = vpop.f32.mrf.mxu0
        %v851 = vadd.f32 %v676, %v850
        %v852 = vpop.f32.mrf.mxu0
        %v853 = vadd.f32 %v680, %v852
        %v854 = vpop.f32.mrf.mxu0
        %v855 = vpop.f32.mrf.mxu0
        %856 = vdwg.mxu0
        %857 = vmatprep.subr.bf16.mxu0 0
        %858 = vmatpush1.bf16.msra.mxu0 %v791
        %859 = vmatprep.subr.bf16.mxu0 0
        %860 = vmatpush1.bf16.msra.mxu0 %v788
        %861 = vmatprep.subr.bf16.mxu0 0
        %862 = vmatpush1.bf16.msra.mxu0 %v785
        %863 = vmatprep.subr.bf16.mxu0 0
        %864 = vmatpush1.bf16.msra.mxu0 %v782
        %865 = vmatprep.subr.bf16.mxu0 0
        %866 = vmatpush1.bf16.msra.mxu0 %v779
        %867 = vmatprep.subr.bf16.mxu0 0
        %868 = vmatpush1.bf16.msra.mxu0 %v776
        %869 = vmatprep.subr.bf16.mxu0 0
        %870 = vmatpush1.bf16.msra.mxu0 %v773
        %871 = vmatprep.subr.bf16.mxu0 0
        %872 = vmatpush1.bf16.msra.mxu0 %v770
        %873 = vmatprep.subr.bf16.mxu0 0
        %874 = vmatpush2.bf16.msra.mxu0 0
        %875 = vmatprep.subr.bf16.mxu0 0
        %876 = vmatpush2.bf16.msra.mxu0 0
        %877 = vmatprep.subr.bf16.mxu0 0
        %878 = vmatpush2.bf16.msra.mxu0 0
        %879 = vmatprep.subr.bf16.mxu0 0
        %880 = vmatpush2.bf16.msra.mxu0 0
        %881 = vmatprep.subr.bf16.mxu0 0
        %882 = vmatpush2.bf16.msra.mxu0 0
        %883 = vmatprep.subr.bf16.mxu0 0
        %884 = vmatpush2.bf16.msra.mxu0 0
        %885 = vmatprep.subr.bf16.mxu0 0
        %886 = vmatpush2.bf16.msra.mxu0 0
        %887 = vmatprep.subr.bf16.mxu0 0
        %888 = vmatpush2.bf16.msra.mxu0 0
        %889 = vmatprep.mubr.bf16.mxu0 0
        %890 = vmatmul.mubr.bf16.gmra.mxu0 %v671
        %v891 = vpop.f32.mrf.mxu0
        %v892 = vadd.f32 %v684, %v891
        %v893 = vpop.f32.mrf.mxu0
        %v894 = vpop.f32.mrf.mxu0
        %v895 = vpop.f32.mrf.mxu0
        %896 = vdwg.mxu0
        %v897 = vadd.f32 %v534, %v851
        %v898 = vxor.u32 %v897, 2147483648
        %v899 = vmul.f32 %v898, 1.442695
        %v900 = vpow.pop %v899
        %v901 = vadd.f32 %v900, 1.0
        %v902 = vrcp.pop %v901
        %v903 = vmul.f32 1.0, %v902
        %v904 = vadd.f32 %v536, %v853
        %v905 = vxor.u32 %v904, 2147483648
        %v906 = vmul.f32 %v905, 1.442695
        %v907 = vpow.pop %v906
        %v908 = vadd.f32 %v907, 1.0
        %v909 = vrcp.pop %v908
        %v910 = vmul.f32 1.0, %v909
        %v911 = vmul.f32 %v903, %v892
        %v912 = vadd.f32 %v607, %v911
        %v913 = vtanh.pop %v912
        %v914 = vsub.f32 1.0, %v910
        %v915 = vmul.f32 %v914, %v913
        %v916 = vmul.f32 %v910, %v637
        %v917 = vadd.f32 %v915, %v916
        %918 = vst [vmem:[#allocation3] sm:$0xff] %v917
        %v919 = vpack.c.bf16 %v917, %v917
        %920 = vmatprep.subr.bf16.mxu0 %v790
        %921 = vmatpush1.bf16.msra.mxu0 %v789
        %922 = vmatprep.subr.bf16.mxu0 %v787
        %923 = vmatpush1.bf16.msra.mxu0 %v786
        %924 = vmatprep.subr.bf16.mxu0 %v784
        %925 = vmatpush1.bf16.msra.mxu0 %v783
        %926 = vmatprep.subr.bf16.mxu0 %v781
        %927 = vmatpush1.bf16.msra.mxu0 %v780
        %928 = vmatprep.subr.bf16.mxu0 %v778
        %929 = vmatpush1.bf16.msra.mxu0 %v777
        %930 = vmatprep.subr.bf16.mxu0 %v775
        %931 = vmatpush1.bf16.msra.mxu0 %v774
        %932 = vmatprep.subr.bf16.mxu0 %v772
        %933 = vmatpush1.bf16.msra.mxu0 %v771
        %934 = vmatprep.subr.bf16.mxu0 %v769
        %935 = vmatpush1.bf16.msra.mxu0 %v768
        %936 = vmatprep.subr.bf16.mxu0 0
        %937 = vmatpush2.bf16.msra.mxu0 0
        %938 = vmatprep.subr.bf16.mxu0 0
        %939 = vmatpush2.bf16.msra.mxu0 0
        %940 = vmatprep.subr.bf16.mxu0 0
        %941 = vmatpush2.bf16.msra.mxu0 0
        %942 = vmatprep.subr.bf16.mxu0 0
        %943 = vmatpush2.bf16.msra.mxu0 0
        %944 = vmatprep.subr.bf16.mxu0 0
        %945 = vmatpush2.bf16.msra.mxu0 0
        %946 = vmatprep.subr.bf16.mxu0 0
        %947 = vmatpush2.bf16.msra.mxu0 0
        %948 = vmatprep.subr.bf16.mxu0 0
        %949 = vmatpush2.bf16.msra.mxu0 0
        %950 = vmatprep.subr.bf16.mxu0 0
        %951 = vmatpush2.bf16.msra.mxu0 0
        %952 = vmatprep.mubr.bf16.mxu0 0
        %953 = vmatmul.mubr.bf16.gmra.mxu0 %v919
        %v954 = vpop.f32.mrf.mxu0
        %v955 = vadd.f32 %v676, %v954
        %v956 = vpop.f32.mrf.mxu0
        %v957 = vadd.f32 %v680, %v956
        %v958 = vpop.f32.mrf.mxu0
        %v959 = vpop.f32.mrf.mxu0
        %960 = vdwg.mxu0
        %961 = vmatprep.subr.bf16.mxu0 0
        %962 = vmatpush1.bf16.msra.mxu0 %v791
        %963 = vmatprep.subr.bf16.mxu0 0
        %964 = vmatpush1.bf16.msra.mxu0 %v788
        %965 = vmatprep.subr.bf16.mxu0 0
        %966 = vmatpush1.bf16.msra.mxu0 %v785
        %967 = vmatprep.subr.bf16.mxu0 0
        %968 = vmatpush1.bf16.msra.mxu0 %v782
        %969 = vmatprep.subr.bf16.mxu0 0
        %970 = vmatpush1.bf16.msra.mxu0 %v779
        %971 = vmatprep.subr.bf16.mxu0 0
        %972 = vmatpush1.bf16.msra.mxu0 %v776
        %973 = vmatprep.subr.bf16.mxu0 0
        %974 = vmatpush1.bf16.msra.mxu0 %v773
        %975 = vmatprep.subr.bf16.mxu0 0
        %976 = vmatpush1.bf16.msra.mxu0 %v770
        %977 = vmatprep.subr.bf16.mxu0 0
        %978 = vmatpush2.bf16.msra.mxu0 0
        %979 = vmatprep.subr.bf16.mxu0 0
        %980 = vmatpush2.bf16.msra.mxu0 0
        %981 = vmatprep.subr.bf16.mxu0 0
        %982 = vmatpush2.bf16.msra.mxu0 0
        %983 = vmatprep.subr.bf16.mxu0 0
        %984 = vmatpush2.bf16.msra.mxu0 0
        %985 = vmatprep.subr.bf16.mxu0 0
        %986 = vmatpush2.bf16.msra.mxu0 0
        %987 = vmatprep.subr.bf16.mxu0 0
        %988 = vmatpush2.bf16.msra.mxu0 0
        %989 = vmatprep.subr.bf16.mxu0 0
        %990 = vmatpush2.bf16.msra.mxu0 0
        %991 = vmatprep.subr.bf16.mxu0 0
        %992 = vmatpush2.bf16.msra.mxu0 0
        %993 = vmatprep.mubr.bf16.mxu0 0
        %994 = vmatmul.mubr.bf16.gmra.mxu0 %v919
        %v995 = vpop.f32.mrf.mxu0
        %v996 = vadd.f32 %v684, %v995
        %v997 = vpop.f32.mrf.mxu0
        %v998 = vpop.f32.mrf.mxu0
        %v999 = vpop.f32.mrf.mxu0
        %1000 = vdwg.mxu0
        %v1001 = vadd.f32 %v538, %v955
        %v1002 = vxor.u32 %v1001, 2147483648
        %v1003 = vmul.f32 %v1002, 1.442695
        %v1004 = vpow.pop %v1003
        %v1005 = vadd.f32 %v1004, 1.0
        %v1006 = vrcp.pop %v1005
        %v1007 = vmul.f32 1.0, %v1006
        %v1008 = vadd.f32 %v540, %v957
        %v1009 = vxor.u32 %v1008, 2147483648
        %v1010 = vmul.f32 %v1009, 1.442695
        %v1011 = vpow.pop %v1010
        %v1012 = vadd.f32 %v1011, 1.0
        %v1013 = vrcp.pop %v1012
        %v1014 = vmul.f32 1.0, %v1013
        %v1015 = vmul.f32 %v1007, %v996
        %v1016 = vadd.f32 %v610, %v1015
        %v1017 = vtanh.pop %v1016
        %v1018 = vsub.f32 1.0, %v1014
        %v1019 = vmul.f32 %v1018, %v1017
        %v1020 = vmul.f32 %v1014, %v917
        %v1021 = vadd.f32 %v1019, %v1020
        %1022 = vst [vmem:[#allocation3 + $0x8] sm:$0xff] %v1021
        %v1023 = vpack.c.bf16 %v1021, %v1021
        %1024 = vmatprep.subr.bf16.mxu0 %v790
        %1025 = vmatpush1.bf16.msra.mxu0 %v789
        %1026 = vmatprep.subr.bf16.mxu0 %v787
        %1027 = vmatpush1.bf16.msra.mxu0 %v786
        %1028 = vmatprep.subr.bf16.mxu0 %v784
        %1029 = vmatpush1.bf16.msra.mxu0 %v783
        %1030 = vmatprep.subr.bf16.mxu0 %v781
        %1031 = vmatpush1.bf16.msra.mxu0 %v780
        %1032 = vmatprep.subr.bf16.mxu0 %v778
        %1033 = vmatpush1.bf16.msra.mxu0 %v777
        %1034 = vmatprep.subr.bf16.mxu0 %v775
        %1035 = vmatpush1.bf16.msra.mxu0 %v774
        %1036 = vmatprep.subr.bf16.mxu0 %v772
        %1037 = vmatpush1.bf16.msra.mxu0 %v771
        %1038 = vmatprep.subr.bf16.mxu0 %v769
        %1039 = vmatpush1.bf16.msra.mxu0 %v768
        %1040 = vmatprep.subr.bf16.mxu0 0
        %1041 = vmatpush2.bf16.msra.mxu0 0
        %1042 = vmatprep.subr.bf16.mxu0 0
        %1043 = vmatpush2.bf16.msra.mxu0 0
        %1044 = vmatprep.subr.bf16.mxu0 0
        %1045 = vmatpush2.bf16.msra.mxu0 0
        %1046 = vmatprep.subr.bf16.mxu0 0
        %1047 = vmatpush2.bf16.msra.mxu0 0
        %1048 = vmatprep.subr.bf16.mxu0 0
        %1049 = vmatpush2.bf16.msra.mxu0 0
        %1050 = vmatprep.subr.bf16.mxu0 0
        %1051 = vmatpush2.bf16.msra.mxu0 0
        %1052 = vmatprep.subr.bf16.mxu0 0
        %1053 = vmatpush2.bf16.msra.mxu0 0
        %1054 = vmatprep.subr.bf16.mxu0 0
        %1055 = vmatpush2.bf16.msra.mxu0 0
        %1056 = vmatprep.mubr.bf16.mxu0 0
        %1057 = vmatmul.mubr.bf16.gmra.mxu0 %v1023
        %v1058 = vpop.f32.mrf.mxu0
        %v1059 = vadd.f32 %v676, %v1058
        %v1060 = vpop.f32.mrf.mxu0
        %v1061 = vadd.f32 %v680, %v1060
        %v1062 = vpop.f32.mrf.mxu0
        %v1063 = vpop.f32.mrf.mxu0
        %1064 = vdwg.mxu0
        %1065 = vmatprep.subr.bf16.mxu0 0
        %1066 = vmatpush1.bf16.msra.mxu0 %v791
        %1067 = vmatprep.subr.bf16.mxu0 0
        %1068 = vmatpush1.bf16.msra.mxu0 %v788
        %1069 = vmatprep.subr.bf16.mxu0 0
        %1070 = vmatpush1.bf16.msra.mxu0 %v785
        %1071 = vmatprep.subr.bf16.mxu0 0
        %1072 = vmatpush1.bf16.msra.mxu0 %v782
        %1073 = vmatprep.subr.bf16.mxu0 0
        %1074 = vmatpush1.bf16.msra.mxu0 %v779
        %1075 = vmatprep.subr.bf16.mxu0 0
        %1076 = vmatpush1.bf16.msra.mxu0 %v776
        %1077 = vmatprep.subr.bf16.mxu0 0
        %1078 = vmatpush1.bf16.msra.mxu0 %v773
        %1079 = vmatprep.subr.bf16.mxu0 0
        %1080 = vmatpush1.bf16.msra.mxu0 %v770
        %1081 = vmatprep.subr.bf16.mxu0 0
        %1082 = vmatpush2.bf16.msra.mxu0 0
        %1083 = vmatprep.subr.bf16.mxu0 0
        %1084 = vmatpush2.bf16.msra.mxu0 0
        %1085 = vmatprep.subr.bf16.mxu0 0
        %1086 = vmatpush2.bf16.msra.mxu0 0
        %1087 = vmatprep.subr.bf16.mxu0 0
        %1088 = vmatpush2.bf16.msra.mxu0 0
        %1089 = vmatprep.subr.bf16.mxu0 0
        %1090 = vmatpush2.bf16.msra.mxu0 0
        %1091 = vmatprep.subr.bf16.mxu0 0
        %1092 = vmatpush2.bf16.msra.mxu0 0
        %1093 = vmatprep.subr.bf16.mxu0 0
        %1094 = vmatpush2.bf16.msra.mxu0 0
        %1095 = vmatprep.subr.bf16.mxu0 0
        %1096 = vmatpush2.bf16.msra.mxu0 0
        %1097 = vmatprep.mubr.bf16.mxu0 0
        %1098 = vmatmul.mubr.bf16.gmra.mxu0 %v1023
        %v1099 = vpop.f32.mrf.mxu0
        %v1100 = vadd.f32 %v684, %v1099
        %v1101 = vpop.f32.mrf.mxu0
        %v1102 = vpop.f32.mrf.mxu0
        %v1103 = vpop.f32.mrf.mxu0
        %1104 = vdwg.mxu0
        %v1105 = vadd.f32 %v544, %v1059
        %v1106 = vxor.u32 %v1105, 2147483648
        %v1107 = vmul.f32 %v1106, 1.442695
        %v1108 = vpow.pop %v1107
        %v1109 = vadd.f32 %v1108, 1.0
        %v1110 = vrcp.pop %v1109
        %v1111 = vmul.f32 1.0, %v1110
        %v1112 = vadd.f32 %v546, %v1061
        %v1113 = vxor.u32 %v1112, 2147483648
        %v1114 = vmul.f32 %v1113, 1.442695
        %v1115 = vpow.pop %v1114
        %v1116 = vadd.f32 %v1115, 1.0
        %v1117 = vrcp.pop %v1116
        %v1118 = vmul.f32 1.0, %v1117
        %v1119 = vmul.f32 %v1111, %v1100
        %v1120 = vadd.f32 %v615, %v1119
        %v1121 = vtanh.pop %v1120
        %v1122 = vsub.f32 1.0, %v1118
        %v1123 = vmul.f32 %v1122, %v1121
        %v1124 = vmul.f32 %v1118, %v1021
        %v1125 = vadd.f32 %v1123, %v1124
        %1126 = vst [vmem:[#allocation3 + $0x10] sm:$0xff] %v1125
        %v1127 = vpack.c.bf16 %v1125, %v1125
        %1128 = vmatprep.subr.bf16.mxu0 %v790
        %1129 = vmatpush1.bf16.msra.mxu0 %v789
        %1130 = vmatprep.subr.bf16.mxu0 %v787
        %1131 = vmatpush1.bf16.msra.mxu0 %v786
        %1132 = vmatprep.subr.bf16.mxu0 %v784
        %1133 = vmatpush1.bf16.msra.mxu0 %v783
        %1134 = vmatprep.subr.bf16.mxu0 %v781
        %1135 = vmatpush1.bf16.msra.mxu0 %v780
        %1136 = vmatprep.subr.bf16.mxu0 %v778
        %1137 = vmatpush1.bf16.msra.mxu0 %v777
        %1138 = vmatprep.subr.bf16.mxu0 %v775
        %1139 = vmatpush1.bf16.msra.mxu0 %v774
        %1140 = vmatprep.subr.bf16.mxu0 %v772
        %1141 = vmatpush1.bf16.msra.mxu0 %v771
        %1142 = vmatprep.subr.bf16.mxu0 %v769
        %1143 = vmatpush1.bf16.msra.mxu0 %v768
        %1144 = vmatprep.subr.bf16.mxu0 0
        %1145 = vmatpush2.bf16.msra.mxu0 0
        %1146 = vmatprep.subr.bf16.mxu0 0
        %1147 = vmatpush2.bf16.msra.mxu0 0
        %1148 = vmatprep.subr.bf16.mxu0 0
        %1149 = vmatpush2.bf16.msra.mxu0 0
        %1150 = vmatprep.subr.bf16.mxu0 0
        %1151 = vmatpush2.bf16.msra.mxu0 0
        %1152 = vmatprep.subr.bf16.mxu0 0
        %1153 = vmatpush2.bf16.msra.mxu0 0
        %1154 = vmatprep.subr.bf16.mxu0 0
        %1155 = vmatpush2.bf16.msra.mxu0 0
        %1156 = vmatprep.subr.bf16.mxu0 0
        %1157 = vmatpush2.bf16.msra.mxu0 0
        %1158 = vmatprep.subr.bf16.mxu0 0
        %1159 = vmatpush2.bf16.msra.mxu0 0
        %1160 = vmatprep.mubr.bf16.mxu0 0
        %1161 = vmatmul.mubr.bf16.gmra.mxu0 %v1127
        %v1162 = vpop.f32.mrf.mxu0
        %v1163 = vadd.f32 %v676, %v1162
        %v1164 = vpop.f32.mrf.mxu0
        %v1165 = vadd.f32 %v680, %v1164
        %v1166 = vpop.f32.mrf.mxu0
        %v1167 = vpop.f32.mrf.mxu0
        %1168 = vdwg.mxu0
        %1169 = vmatprep.subr.bf16.mxu0 0
        %1170 = vmatpush1.bf16.msra.mxu0 %v791
        %1171 = vmatprep.subr.bf16.mxu0 0
        %1172 = vmatpush1.bf16.msra.mxu0 %v788
        %1173 = vmatprep.subr.bf16.mxu0 0
        %1174 = vmatpush1.bf16.msra.mxu0 %v785
        %1175 = vmatprep.subr.bf16.mxu0 0
        %1176 = vmatpush1.bf16.msra.mxu0 %v782
        %1177 = vmatprep.subr.bf16.mxu0 0
        %1178 = vmatpush1.bf16.msra.mxu0 %v779
        %1179 = vmatprep.subr.bf16.mxu0 0
        %1180 = vmatpush1.bf16.msra.mxu0 %v776
        %1181 = vmatprep.subr.bf16.mxu0 0
        %1182 = vmatpush1.bf16.msra.mxu0 %v773
        %1183 = vmatprep.subr.bf16.mxu0 0
        %1184 = vmatpush1.bf16.msra.mxu0 %v770
        %1185 = vmatprep.subr.bf16.mxu0 0
        %1186 = vmatpush2.bf16.msra.mxu0 0
        %1187 = vmatprep.subr.bf16.mxu0 0
        %1188 = vmatpush2.bf16.msra.mxu0 0
        %1189 = vmatprep.subr.bf16.mxu0 0
        %1190 = vmatpush2.bf16.msra.mxu0 0
        %1191 = vmatprep.subr.bf16.mxu0 0
        %1192 = vmatpush2.bf16.msra.mxu0 0
        %1193 = vmatprep.subr.bf16.mxu0 0
        %1194 = vmatpush2.bf16.msra.mxu0 0
        %1195 = vmatprep.subr.bf16.mxu0 0
        %1196 = vmatpush2.bf16.msra.mxu0 0
        %1197 = vmatprep.subr.bf16.mxu0 0
        %1198 = vmatpush2.bf16.msra.mxu0 0
        %1199 = vmatprep.subr.bf16.mxu0 0
        %1200 = vmatpush2.bf16.msra.mxu0 0
        %1201 = vmatprep.mubr.bf16.mxu0 0
        %1202 = vmatmul.mubr.bf16.gmra.mxu0 %v1127
        %v1203 = vpop.f32.mrf.mxu0
        %v1204 = vadd.f32 %v684, %v1203
        %v1205 = vpop.f32.mrf.mxu0
        %v1206 = vpop.f32.mrf.mxu0
        %v1207 = vpop.f32.mrf.mxu0
        %1208 = vdwg.mxu0
        %v1209 = vadd.f32 %v548, %v1163
        %v1210 = vxor.u32 %v1209, 2147483648
        %v1211 = vmul.f32 %v1210, 1.442695
        %v1212 = vpow.pop %v1211
        %v1213 = vadd.f32 %v1212, 1.0
        %v1214 = vrcp.pop %v1213
        %v1215 = vmul.f32 1.0, %v1214
        %v1216 = vadd.f32 %v550, %v1165
        %v1217 = vxor.u32 %v1216, 2147483648
        %v1218 = vmul.f32 %v1217, 1.442695
        %v1219 = vpow.pop %v1218
        %v1220 = vadd.f32 %v1219, 1.0
        %v1221 = vrcp.pop %v1220
        %v1222 = vmul.f32 1.0, %v1221
        %v1223 = vmul.f32 %v1215, %v1204
        %v1224 = vadd.f32 %v618, %v1223
        %v1225 = vtanh.pop %v1224
        %v1226 = vsub.f32 1.0, %v1222
        %v1227 = vmul.f32 %v1226, %v1225
        %v1228 = vmul.f32 %v1222, %v1125
        %v1229 = vadd.f32 %v1227, %v1228
        %1230 = vst [vmem:[#allocation3 + $0x18] sm:$0xff] %v1229
        %v1231 = vpack.c.bf16 %v1229, %v1229
        %1232 = vmatprep.subr.bf16.mxu0 %v790
        %1233 = vmatpush1.bf16.msra.mxu0 %v789
        %1234 = vmatprep.subr.bf16.mxu0 %v787
        %1235 = vmatpush1.bf16.msra.mxu0 %v786
        %1236 = vmatprep.subr.bf16.mxu0 %v784
        %1237 = vmatpush1.bf16.msra.mxu0 %v783
        %1238 = vmatprep.subr.bf16.mxu0 %v781
        %1239 = vmatpush1.bf16.msra.mxu0 %v780
        %1240 = vmatprep.subr.bf16.mxu0 %v778
        %1241 = vmatpush1.bf16.msra.mxu0 %v777
        %1242 = vmatprep.subr.bf16.mxu0 %v775
        %1243 = vmatpush1.bf16.msra.mxu0 %v774
        %1244 = vmatprep.subr.bf16.mxu0 %v772
        %1245 = vmatpush1.bf16.msra.mxu0 %v771
        %1246 = vmatprep.subr.bf16.mxu0 %v769
        %1247 = vmatpush1.bf16.msra.mxu0 %v768
        %1248 = vmatprep.subr.bf16.mxu0 0
        %1249 = vmatpush2.bf16.msra.mxu0 0
        %1250 = vmatprep.subr.bf16.mxu0 0
        %1251 = vmatpush2.bf16.msra.mxu0 0
        %1252 = vmatprep.subr.bf16.mxu0 0
        %1253 = vmatpush2.bf16.msra.mxu0 0
        %1254 = vmatprep.subr.bf16.mxu0 0
        %1255 = vmatpush2.bf16.msra.mxu0 0
        %1256 = vmatprep.subr.bf16.mxu0 0
        %1257 = vmatpush2.bf16.msra.mxu0 0
        %1258 = vmatprep.subr.bf16.mxu0 0
        %1259 = vmatpush2.bf16.msra.mxu0 0
        %1260 = vmatprep.subr.bf16.mxu0 0
        %1261 = vmatpush2.bf16.msra.mxu0 0
        %1262 = vmatprep.subr.bf16.mxu0 0
        %1263 = vmatpush2.bf16.msra.mxu0 0
        %1264 = vmatprep.mubr.bf16.mxu0 0
        %1265 = vmatmul.mubr.bf16.gmra.mxu0 %v1231
        %v1266 = vpop.f32.mrf.mxu0
        %v1267 = vadd.f32 %v676, %v1266
        %v1268 = vpop.f32.mrf.mxu0
        %v1269 = vadd.f32 %v680, %v1268
        %v1270 = vpop.f32.mrf.mxu0
        %v1271 = vpop.f32.mrf.mxu0
        %1272 = vdwg.mxu0
        %1273 = vmatprep.subr.bf16.mxu0 0
        %1274 = vmatpush1.bf16.msra.mxu0 %v791
        %1275 = vmatprep.subr.bf16.mxu0 0
        %1276 = vmatpush1.bf16.msra.mxu0 %v788
        %1277 = vmatprep.subr.bf16.mxu0 0
        %1278 = vmatpush1.bf16.msra.mxu0 %v785
        %1279 = vmatprep.subr.bf16.mxu0 0
        %1280 = vmatpush1.bf16.msra.mxu0 %v782
        %1281 = vmatprep.subr.bf16.mxu0 0
        %1282 = vmatpush1.bf16.msra.mxu0 %v779
        %1283 = vmatprep.subr.bf16.mxu0 0
        %1284 = vmatpush1.bf16.msra.mxu0 %v776
        %1285 = vmatprep.subr.bf16.mxu0 0
        %1286 = vmatpush1.bf16.msra.mxu0 %v773
        %1287 = vmatprep.subr.bf16.mxu0 0
        %1288 = vmatpush1.bf16.msra.mxu0 %v770
        %1289 = vmatprep.subr.bf16.mxu0 0
        %1290 = vmatpush2.bf16.msra.mxu0 0
        %1291 = vmatprep.subr.bf16.mxu0 0
        %1292 = vmatpush2.bf16.msra.mxu0 0
        %1293 = vmatprep.subr.bf16.mxu0 0
        %1294 = vmatpush2.bf16.msra.mxu0 0
        %1295 = vmatprep.subr.bf16.mxu0 0
        %1296 = vmatpush2.bf16.msra.mxu0 0
        %1297 = vmatprep.subr.bf16.mxu0 0
        %1298 = vmatpush2.bf16.msra.mxu0 0
        %1299 = vmatprep.subr.bf16.mxu0 0
        %1300 = vmatpush2.bf16.msra.mxu0 0
        %1301 = vmatprep.subr.bf16.mxu0 0
        %1302 = vmatpush2.bf16.msra.mxu0 0
        %1303 = vmatprep.subr.bf16.mxu0 0
        %1304 = vmatpush2.bf16.msra.mxu0 0
        %1305 = vmatprep.mubr.bf16.mxu0 0
        %1306 = vmatmul.mubr.bf16.gmra.mxu0 %v1231
        %v1307 = vpop.f32.mrf.mxu0
        %v1308 = vadd.f32 %v684, %v1307
        %v1309 = vpop.f32.mrf.mxu0
        %v1310 = vpop.f32.mrf.mxu0
        %v1311 = vpop.f32.mrf.mxu0
        %1312 = vdwg.mxu0
        %v1313 = vadd.f32 %v554, %v1267
        %v1314 = vxor.u32 %v1313, 2147483648
        %v1315 = vmul.f32 %v1314, 1.442695
        %v1316 = vpow.pop %v1315
        %v1317 = vadd.f32 %v1316, 1.0
        %v1318 = vrcp.pop %v1317
        %v1319 = vmul.f32 1.0, %v1318
        %v1320 = vadd.f32 %v556, %v1269
        %v1321 = vxor.u32 %v1320, 2147483648
        %v1322 = vmul.f32 %v1321, 1.442695
        %v1323 = vpow.pop %v1322
        %v1324 = vadd.f32 %v1323, 1.0
        %v1325 = vrcp.pop %v1324
        %v1326 = vmul.f32 1.0, %v1325
        %v1327 = vmul.f32 %v1319, %v1308
        %v1328 = vadd.f32 %v623, %v1327
        %v1329 = vtanh.pop %v1328
        %v1330 = vsub.f32 1.0, %v1326
        %v1331 = vmul.f32 %v1330, %v1329
        %v1332 = vmul.f32 %v1326, %v1229
        %v1333 = vadd.f32 %v1331, %v1332
        %1334 = vst [vmem:[#allocation3 + $0x20] sm:$0xff] %v1333
        %v1335 = vpack.c.bf16 %v1333, %v1333
        %1336 = vmatprep.subr.bf16.mxu0 %v790
        %1337 = vmatpush1.bf16.msra.mxu0 %v789
        %1338 = vmatprep.subr.bf16.mxu0 %v787
        %1339 = vmatpush1.bf16.msra.mxu0 %v786
        %1340 = vmatprep.subr.bf16.mxu0 %v784
        %1341 = vmatpush1.bf16.msra.mxu0 %v783
        %1342 = vmatprep.subr.bf16.mxu0 %v781
        %1343 = vmatpush1.bf16.msra.mxu0 %v780
        %1344 = vmatprep.subr.bf16.mxu0 %v778
        %1345 = vmatpush1.bf16.msra.mxu0 %v777
        %1346 = vmatprep.subr.bf16.mxu0 %v775
        %1347 = vmatpush1.bf16.msra.mxu0 %v774
        %1348 = vmatprep.subr.bf16.mxu0 %v772
        %1349 = vmatpush1.bf16.msra.mxu0 %v771
        %1350 = vmatprep.subr.bf16.mxu0 %v769
        %1351 = vmatpush1.bf16.msra.mxu0 %v768
        %1352 = vmatprep.subr.bf16.mxu0 0
        %1353 = vmatpush2.bf16.msra.mxu0 0
        %1354 = vmatprep.subr.bf16.mxu0 0
        %1355 = vmatpush2.bf16.msra.mxu0 0
        %1356 = vmatprep.subr.bf16.mxu0 0
        %1357 = vmatpush2.bf16.msra.mxu0 0
        %1358 = vmatprep.subr.bf16.mxu0 0
        %1359 = vmatpush2.bf16.msra.mxu0 0
        %1360 = vmatprep.subr.bf16.mxu0 0
        %1361 = vmatpush2.bf16.msra.mxu0 0
        %1362 = vmatprep.subr.bf16.mxu0 0
        %1363 = vmatpush2.bf16.msra.mxu0 0
        %1364 = vmatprep.subr.bf16.mxu0 0
        %1365 = vmatpush2.bf16.msra.mxu0 0
        %1366 = vmatprep.subr.bf16.mxu0 0
        %1367 = vmatpush2.bf16.msra.mxu0 0
        %1368 = vmatprep.mubr.bf16.mxu0 0
        %1369 = vmatmul.mubr.bf16.gmra.mxu0 %v1335
        %v1370 = vpop.f32.mrf.mxu0
        %v1371 = vadd.f32 %v676, %v1370
        %v1372 = vpop.f32.mrf.mxu0
        %v1373 = vadd.f32 %v680, %v1372
        %v1374 = vpop.f32.mrf.mxu0
        %v1375 = vpop.f32.mrf.mxu0
        %1376 = vdwg.mxu0
        %1377 = vmatprep.subr.bf16.mxu0 0
        %1378 = vmatpush1.bf16.msra.mxu0 %v791
        %1379 = vmatprep.subr.bf16.mxu0 0
        %1380 = vmatpush1.bf16.msra.mxu0 %v788
        %1381 = vmatprep.subr.bf16.mxu0 0
        %1382 = vmatpush1.bf16.msra.mxu0 %v785
        %1383 = vmatprep.subr.bf16.mxu0 0
        %1384 = vmatpush1.bf16.msra.mxu0 %v782
        %1385 = vmatprep.subr.bf16.mxu0 0
        %1386 = vmatpush1.bf16.msra.mxu0 %v779
        %1387 = vmatprep.subr.bf16.mxu0 0
        %1388 = vmatpush1.bf16.msra.mxu0 %v776
        %1389 = vmatprep.subr.bf16.mxu0 0
        %1390 = vmatpush1.bf16.msra.mxu0 %v773
        %1391 = vmatprep.subr.bf16.mxu0 0
        %1392 = vmatpush1.bf16.msra.mxu0 %v770
        %1393 = vmatprep.subr.bf16.mxu0 0
        %1394 = vmatpush2.bf16.msra.mxu0 0
        %1395 = vmatprep.subr.bf16.mxu0 0
        %1396 = vmatpush2.bf16.msra.mxu0 0
        %1397 = vmatprep.subr.bf16.mxu0 0
        %1398 = vmatpush2.bf16.msra.mxu0 0
        %1399 = vmatprep.subr.bf16.mxu0 0
        %1400 = vmatpush2.bf16.msra.mxu0 0
        %1401 = vmatprep.subr.bf16.mxu0 0
        %1402 = vmatpush2.bf16.msra.mxu0 0
        %1403 = vmatprep.subr.bf16.mxu0 0
        %1404 = vmatpush2.bf16.msra.mxu0 0
        %1405 = vmatprep.subr.bf16.mxu0 0
        %1406 = vmatpush2.bf16.msra.mxu0 0
        %1407 = vmatprep.subr.bf16.mxu0 0
        %1408 = vmatpush2.bf16.msra.mxu0 0
        %1409 = vmatprep.mubr.bf16.mxu0 0
        %1410 = vmatmul.mubr.bf16.gmra.mxu0 %v1335
        %v1411 = vpop.f32.mrf.mxu0
        %v1412 = vadd.f32 %v684, %v1411
        %v1413 = vpop.f32.mrf.mxu0
        %v1414 = vpop.f32.mrf.mxu0
        %v1415 = vpop.f32.mrf.mxu0
        %1416 = vdwg.mxu0
        %v1417 = vadd.f32 %v558, %v1371
        %v1418 = vxor.u32 %v1417, 2147483648
        %v1419 = vmul.f32 %v1418, 1.442695
        %v1420 = vpow.pop %v1419
        %v1421 = vadd.f32 %v1420, 1.0
        %v1422 = vrcp.pop %v1421
        %v1423 = vmul.f32 1.0, %v1422
        %v1424 = vadd.f32 %v560, %v1373
        %v1425 = vxor.u32 %v1424, 2147483648
        %v1426 = vmul.f32 %v1425, 1.442695
        %v1427 = vpow.pop %v1426
        %v1428 = vadd.f32 %v1427, 1.0
        %v1429 = vrcp.pop %v1428
        %v1430 = vmul.f32 1.0, %v1429
        %v1431 = vmul.f32 %v1423, %v1412
        %v1432 = vadd.f32 %v626, %v1431
        %v1433 = vtanh.pop %v1432
        %v1434 = vsub.f32 1.0, %v1430
        %v1435 = vmul.f32 %v1434, %v1433
        %v1436 = vmul.f32 %v1430, %v1333
        %v1437 = vadd.f32 %v1435, %v1436
        %1438 = vst [vmem:[#allocation3 + $0x28] sm:$0xff] %v1437
        %v1439 = vpack.c.bf16 %v1437, %v1437
        %1440 = vmatprep.subr.bf16.mxu0 %v790
        %1441 = vmatpush1.bf16.msra.mxu0 %v789
        %1442 = vmatprep.subr.bf16.mxu0 %v787
        %1443 = vmatpush1.bf16.msra.mxu0 %v786
        %1444 = vmatprep.subr.bf16.mxu0 %v784
        %1445 = vmatpush1.bf16.msra.mxu0 %v783
        %1446 = vmatprep.subr.bf16.mxu0 %v781
        %1447 = vmatpush1.bf16.msra.mxu0 %v780
        %1448 = vmatprep.subr.bf16.mxu0 %v778
        %1449 = vmatpush1.bf16.msra.mxu0 %v777
        %1450 = vmatprep.subr.bf16.mxu0 %v775
        %1451 = vmatpush1.bf16.msra.mxu0 %v774
        %1452 = vmatprep.subr.bf16.mxu0 %v772
        %1453 = vmatpush1.bf16.msra.mxu0 %v771
        %1454 = vmatprep.subr.bf16.mxu0 %v769
        %1455 = vmatpush1.bf16.msra.mxu0 %v768
        %1456 = vmatprep.subr.bf16.mxu0 0
        %1457 = vmatpush2.bf16.msra.mxu0 0
        %1458 = vmatprep.subr.bf16.mxu0 0
        %1459 = vmatpush2.bf16.msra.mxu0 0
        %1460 = vmatprep.subr.bf16.mxu0 0
        %1461 = vmatpush2.bf16.msra.mxu0 0
        %1462 = vmatprep.subr.bf16.mxu0 0
        %1463 = vmatpush2.bf16.msra.mxu0 0
        %1464 = vmatprep.subr.bf16.mxu0 0
        %1465 = vmatpush2.bf16.msra.mxu0 0
        %1466 = vmatprep.subr.bf16.mxu0 0
        %1467 = vmatpush2.bf16.msra.mxu0 0
        %1468 = vmatprep.subr.bf16.mxu0 0
        %1469 = vmatpush2.bf16.msra.mxu0 0
        %1470 = vmatprep.subr.bf16.mxu0 0
        %1471 = vmatpush2.bf16.msra.mxu0 0
        %1472 = vmatprep.mubr.bf16.mxu0 0
        %1473 = vmatmul.mubr.bf16.gmra.mxu0 %v1439
        %v1474 = vpop.f32.mrf.mxu0
        %v1475 = vadd.f32 %v676, %v1474
        %v1476 = vpop.f32.mrf.mxu0
        %v1477 = vadd.f32 %v680, %v1476
        %v1478 = vpop.f32.mrf.mxu0
        %v1479 = vpop.f32.mrf.mxu0
        %1480 = vdwg.mxu0
        %1481 = vmatprep.subr.bf16.mxu0 0
        %1482 = vmatpush1.bf16.msra.mxu0 %v791
        %1483 = vmatprep.subr.bf16.mxu0 0
        %1484 = vmatpush1.bf16.msra.mxu0 %v788
        %1485 = vmatprep.subr.bf16.mxu0 0
        %1486 = vmatpush1.bf16.msra.mxu0 %v785
        %1487 = vmatprep.subr.bf16.mxu0 0
        %1488 = vmatpush1.bf16.msra.mxu0 %v782
        %1489 = vmatprep.subr.bf16.mxu0 0
        %1490 = vmatpush1.bf16.msra.mxu0 %v779
        %1491 = vmatprep.subr.bf16.mxu0 0
        %1492 = vmatpush1.bf16.msra.mxu0 %v776
        %1493 = vmatprep.subr.bf16.mxu0 0
        %1494 = vmatpush1.bf16.msra.mxu0 %v773
        %1495 = vmatprep.subr.bf16.mxu0 0
        %1496 = vmatpush1.bf16.msra.mxu0 %v770
        %1497 = vmatprep.subr.bf16.mxu0 0
        %1498 = vmatpush2.bf16.msra.mxu0 0
        %1499 = vmatprep.subr.bf16.mxu0 0
        %1500 = vmatpush2.bf16.msra.mxu0 0
        %1501 = vmatprep.subr.bf16.mxu0 0
        %1502 = vmatpush2.bf16.msra.mxu0 0
        %1503 = vmatprep.subr.bf16.mxu0 0
        %1504 = vmatpush2.bf16.msra.mxu0 0
        %1505 = vmatprep.subr.bf16.mxu0 0
        %1506 = vmatpush2.bf16.msra.mxu0 0
        %1507 = vmatprep.subr.bf16.mxu0 0
        %1508 = vmatpush2.bf16.msra.mxu0 0
        %1509 = vmatprep.subr.bf16.mxu0 0
        %1510 = vmatpush2.bf16.msra.mxu0 0
        %1511 = vmatprep.subr.bf16.mxu0 0
        %1512 = vmatpush2.bf16.msra.mxu0 0
        %1513 = vmatprep.mubr.bf16.mxu0 0
        %1514 = vmatmul.mubr.bf16.gmra.mxu0 %v1439
        %v1515 = vpop.f32.mrf.mxu0
        %v1516 = vadd.f32 %v684, %v1515
        %v1517 = vpop.f32.mrf.mxu0
        %v1518 = vpop.f32.mrf.mxu0
        %v1519 = vpop.f32.mrf.mxu0
        %1520 = vdwg.mxu0
        %v1521 = vadd.f32 %v564, %v1475
        %v1522 = vxor.u32 %v1521, 2147483648
        %v1523 = vmul.f32 %v1522, 1.442695
        %v1524 = vpow.pop %v1523
        %v1525 = vadd.f32 %v1524, 1.0
        %v1526 = vrcp.pop %v1525
        %v1527 = vmul.f32 1.0, %v1526
        %v1528 = vadd.f32 %v566, %v1477
        %v1529 = vxor.u32 %v1528, 2147483648
        %v1530 = vmul.f32 %v1529, 1.442695
        %v1531 = vpow.pop %v1530
        %v1532 = vadd.f32 %v1531, 1.0
        %v1533 = vrcp.pop %v1532
        %v1534 = vmul.f32 1.0, %v1533
        %v1535 = vmul.f32 %v1527, %v1516
        %v1536 = vadd.f32 %v631, %v1535
        %v1537 = vtanh.pop %v1536
        %v1538 = vsub.f32 1.0, %v1534
        %v1539 = vmul.f32 %v1538, %v1537
        %v1540 = vmul.f32 %v1534, %v1437
        %v1541 = vadd.f32 %v1539, %v1540
        %1542 = vst [vmem:[#allocation3 + $0x30] sm:$0xff] %v1541
        %v1543 = vpack.c.bf16 %v1541, %v1541
        %1544 = vmatprep.subr.bf16.mxu0 %v790
        %1545 = vmatpush1.bf16.msra.mxu0 %v789
        %1546 = vmatprep.subr.bf16.mxu0 %v787
        %1547 = vmatpush1.bf16.msra.mxu0 %v786
        %1548 = vmatprep.subr.bf16.mxu0 %v784
        %1549 = vmatpush1.bf16.msra.mxu0 %v783
        %1550 = vmatprep.subr.bf16.mxu0 %v781
        %1551 = vmatpush1.bf16.msra.mxu0 %v780
        %1552 = vmatprep.subr.bf16.mxu0 %v778
        %1553 = vmatpush1.bf16.msra.mxu0 %v777
        %1554 = vmatprep.subr.bf16.mxu0 %v775
        %1555 = vmatpush1.bf16.msra.mxu0 %v774
        %1556 = vmatprep.subr.bf16.mxu0 %v772
        %1557 = vmatpush1.bf16.msra.mxu0 %v771
        %1558 = vmatprep.subr.bf16.mxu0 %v769
        %1559 = vmatpush1.bf16.msra.mxu0 %v768
        %1560 = vmatprep.subr.bf16.mxu0 0
        %1561 = vmatpush2.bf16.msra.mxu0 0
        %1562 = vmatprep.subr.bf16.mxu0 0
        %1563 = vmatpush2.bf16.msra.mxu0 0
        %1564 = vmatprep.subr.bf16.mxu0 0
        %1565 = vmatpush2.bf16.msra.mxu0 0
        %1566 = vmatprep.subr.bf16.mxu0 0
        %1567 = vmatpush2.bf16.msra.mxu0 0
        %1568 = vmatprep.subr.bf16.mxu0 0
        %1569 = vmatpush2.bf16.msra.mxu0 0
        %1570 = vmatprep.subr.bf16.mxu0 0
        %1571 = vmatpush2.bf16.msra.mxu0 0
        %1572 = vmatprep.subr.bf16.mxu0 0
        %1573 = vmatpush2.bf16.msra.mxu0 0
        %1574 = vmatprep.subr.bf16.mxu0 0
        %1575 = vmatpush2.bf16.msra.mxu0 0
        %1576 = vmatprep.mubr.bf16.mxu0 0
        %1577 = vmatmul.mubr.bf16.gmra.mxu0 %v1543
        %v1578 = vpop.f32.mrf.mxu0
        %v1579 = vadd.f32 %v676, %v1578
        %v1580 = vpop.f32.mrf.mxu0
        %v1581 = vadd.f32 %v680, %v1580
        %v1582 = vpop.f32.mrf.mxu0
        %v1583 = vpop.f32.mrf.mxu0
        %1584 = vdwg.mxu0
        %1585 = vmatprep.subr.bf16.mxu0 0
        %1586 = vmatpush1.bf16.msra.mxu0 %v791
        %1587 = vmatprep.subr.bf16.mxu0 0
        %1588 = vmatpush1.bf16.msra.mxu0 %v788
        %1589 = vmatprep.subr.bf16.mxu0 0
        %1590 = vmatpush1.bf16.msra.mxu0 %v785
        %1591 = vmatprep.subr.bf16.mxu0 0
        %1592 = vmatpush1.bf16.msra.mxu0 %v782
        %1593 = vmatprep.subr.bf16.mxu0 0
        %1594 = vmatpush1.bf16.msra.mxu0 %v779
        %1595 = vmatprep.subr.bf16.mxu0 0
        %1596 = vmatpush1.bf16.msra.mxu0 %v776
        %1597 = vmatprep.subr.bf16.mxu0 0
        %1598 = vmatpush1.bf16.msra.mxu0 %v773
        %1599 = vmatprep.subr.bf16.mxu0 0
        %1600 = vmatpush1.bf16.msra.mxu0 %v770
        %1601 = vmatprep.subr.bf16.mxu0 0
        %1602 = vmatpush2.bf16.msra.mxu0 0
        %1603 = vmatprep.subr.bf16.mxu0 0
        %1604 = vmatpush2.bf16.msra.mxu0 0
        %1605 = vmatprep.subr.bf16.mxu0 0
        %1606 = vmatpush2.bf16.msra.mxu0 0
        %1607 = vmatprep.subr.bf16.mxu0 0
        %1608 = vmatpush2.bf16.msra.mxu0 0
        %1609 = vmatprep.subr.bf16.mxu0 0
        %1610 = vmatpush2.bf16.msra.mxu0 0
        %1611 = vmatprep.subr.bf16.mxu0 0
        %1612 = vmatpush2.bf16.msra.mxu0 0
        %1613 = vmatprep.subr.bf16.mxu0 0
        %1614 = vmatpush2.bf16.msra.mxu0 0
        %1615 = vmatprep.subr.bf16.mxu0 0
        %1616 = vmatpush2.bf16.msra.mxu0 0
        %1617 = vmatprep.mubr.bf16.mxu0 0
        %1618 = vmatmul.mubr.bf16.gmra.mxu0 %v1543
        %v1619 = vpop.f32.mrf.mxu0
        %v1620 = vadd.f32 %v684, %v1619
        %v1621 = vpop.f32.mrf.mxu0
        %v1622 = vpop.f32.mrf.mxu0
        %v1623 = vpop.f32.mrf.mxu0
        %1624 = vdwg.mxu0
        %v1625 = vadd.f32 %v568, %v1579
        %v1626 = vxor.u32 %v1625, 2147483648
        %v1627 = vmul.f32 %v1626, 1.442695
        %v1628 = vpow.pop %v1627
        %v1629 = vadd.f32 %v1628, 1.0
        %v1630 = vrcp.pop %v1629
        %v1631 = vmul.f32 1.0, %v1630
        %v1632 = vadd.f32 %v570, %v1581
        %v1633 = vxor.u32 %v1632, 2147483648
        %v1634 = vmul.f32 %v1633, 1.442695
        %v1635 = vpow.pop %v1634
        %v1636 = vadd.f32 %v1635, 1.0
        %v1637 = vrcp.pop %v1636
        %v1638 = vmul.f32 1.0, %v1637
        %v1639 = vmul.f32 %v1631, %v1620
        %v1640 = vadd.f32 %v634, %v1639
        %v1641 = vtanh.pop %v1640
        %v1642 = vsub.f32 1.0, %v1638
        %v1643 = vmul.f32 %v1642, %v1641
        %v1644 = vmul.f32 %v1638, %v1541
        %v1645 = vadd.f32 %v1643, %v1644
        %1646 = vst [vmem:[#allocation3 + $0x38] sm:$0xff] %v1645
        %1647 = vst [vmem:[#allocation2] sm:$0xff] %v1645
        %v1648 = vld [vmem:[#allocation3] sm:$0xff]
        %v1649 = vld [vmem:[#allocation3 + $0x8] sm:$0xff]
        %v1650 = vld [vmem:[#allocation3 + $0x10] sm:$0xff]
        %v1651 = vld [vmem:[#allocation3 + $0x18] sm:$0xff]
        %v1652 = vld [vmem:[#allocation3 + $0x20] sm:$0xff]
        %v1653 = vld [vmem:[#allocation3 + $0x28] sm:$0xff]
        %v1654 = vld [vmem:[#allocation3 + $0x30] sm:$0xff]
        %v1655 = vld [vmem:[#allocation3 + $0x38] sm:$0xff]
        %v1656 = vpack.c.bf16 %v1649, %v1648
        %v1657 = vpack.c.bf16 %v1651, %v1650
        %v1658 = vpack.c.bf16 %v1653, %v1652
        %v1659 = vpack.c.bf16 %v1655, %v1654
        %s1660 = scalar_lea.vmem %s2, 192
        %v1661 = vld [vmem:[%s1660] sm:$0xff]
        %v1662 = vld [vmem:[%s1660 + $0x8] sm:$0xf]
        %v1663 = vld [vmem:[%s1660 + $0xc] sm:$0xff]
        %v1664 = vld [vmem:[%s1660 + $0x14] sm:$0xf]
        %v1665 = vld [vmem:[%s1660 + $0x18] sm:$0xff]
        %v1666 = vld [vmem:[%s1660 + $0x20] sm:$0xf]
        %v1667 = vld [vmem:[%s1660 + $0x24] sm:$0xff]
        %v1668 = vld [vmem:[%s1660 + $0x2c] sm:$0xf]
        %v1669 = vld [vmem:[%s1660 + $0x30] sm:$0xff]
        %v1670 = vld [vmem:[%s1660 + $0x38] sm:$0xf]
        %v1671 = vld [vmem:[%s1660 + $0x3c] sm:$0xff]
        %v1672 = vld [vmem:[%s1660 + $0x44] sm:$0xf]
        %v1673 = vld [vmem:[%s1660 + $0x48] sm:$0xff]
        %v1674 = vld [vmem:[%s1660 + $0x50] sm:$0xf]
        %v1675 = vld [vmem:[%s1660 + $0x54] sm:$0xff]
        %v1676 = vld [vmem:[%s1660 + $0x5c] sm:$0xf]
        %v1677 = vld [vmem:[%s1660 + $0x60] sm:$0xff]
        %v1678 = vld [vmem:[%s1660 + $0x68] sm:$0xf]
        %v1679 = vld [vmem:[%s1660 + $0x6c] sm:$0xff]
        %v1680 = vld [vmem:[%s1660 + $0x74] sm:$0xf]
        %v1681 = vld [vmem:[%s1660 + $0x78] sm:$0xff]
        %v1682 = vld [vmem:[%s1660 + $0x80] sm:$0xf]
        %v1683 = vld [vmem:[%s1660 + $0x84] sm:$0xff]
        %v1684 = vld [vmem:[%s1660 + $0x8c] sm:$0xf]
        %v1685 = vld [vmem:[%s1660 + $0x90] sm:$0xff]
        %v1686 = vld [vmem:[%s1660 + $0x98] sm:$0xf]
        %v1687 = vld [vmem:[%s1660 + $0x9c] sm:$0xff]
        %v1688 = vld [vmem:[%s1660 + $0xa4] sm:$0xf]
        %v1689 = vld [vmem:[%s1660 + $0xa8] sm:$0xff]
        %v1690 = vld [vmem:[%s1660 + $0xb0] sm:$0xf]
        %v1691 = vld [vmem:[%s1660 + $0xb4] sm:$0xff]
        %v1692 = vld [vmem:[%s1660 + $0xbc] sm:$0xf]
        %s1693 = scalar_lea.vmem %s4, 3
        %v1694 = vld [vmem:[%s1693] sm:$0x7]
        %v1696 = vlaneseq
        %v1697 = vshrl.u32 %v1696, 7
        %v1698 = vsub.s32 0, %v1697
        %v1699 = vrot.slane %v1694, %v1698
        %v1700 = vlaneseq
        %v1701 = vshrl.u32 %v1700, 7
        %v1702 = vsub.s32 1, %v1701
        %v1703 = vrot.slane %v1694, %v1702
        %v1704 = vlaneseq
        %v1705 = vshrl.u32 %v1704, 7
        %v1706 = vsub.s32 2, %v1705
        %v1707 = vrot.slane %v1694, %v1706
        %v1743 = vunpack.c.l.b16 %v1661
        %v1744 = vunpack.c.h.b16 %v1661
        %v1745 = vunpack.c.l.b16 %v1662
        %v1746 = vunpack.c.l.b16 %v1663
        %v1747 = vunpack.c.h.b16 %v1663
        %v1748 = vunpack.c.l.b16 %v1664
        %v1749 = vunpack.c.l.b16 %v1665
        %v1750 = vunpack.c.h.b16 %v1665
        %v1751 = vunpack.c.l.b16 %v1666
        %v1752 = vunpack.c.l.b16 %v1667
        %v1753 = vunpack.c.h.b16 %v1667
        %v1754 = vunpack.c.l.b16 %v1668
        %v1755 = vunpack.c.l.b16 %v1669
        %v1756 = vunpack.c.h.b16 %v1669
        %v1757 = vunpack.c.l.b16 %v1670
        %v1758 = vunpack.c.l.b16 %v1671
        %v1759 = vunpack.c.h.b16 %v1671
        %v1760 = vunpack.c.l.b16 %v1672
        %v1761 = vunpack.c.l.b16 %v1673
        %v1762 = vunpack.c.h.b16 %v1673
        %v1763 = vunpack.c.l.b16 %v1674
        %v1764 = vunpack.c.l.b16 %v1675
        %v1765 = vunpack.c.h.b16 %v1675
        %v1766 = vunpack.c.l.b16 %v1676
        %v1767 = vunpack.c.l.b16 %v1677
        %v1768 = vunpack.c.h.b16 %v1677
        %v1769 = vunpack.c.l.b16 %v1678
        %v1770 = vunpack.c.l.b16 %v1679
        %v1771 = vunpack.c.h.b16 %v1679
        %v1772 = vunpack.c.l.b16 %v1680
        %v1773 = vunpack.c.l.b16 %v1681
        %v1774 = vunpack.c.h.b16 %v1681
        %v1775 = vunpack.c.l.b16 %v1682
        %v1776 = vunpack.c.l.b16 %v1683
        %v1777 = vunpack.c.h.b16 %v1683
        %v1778 = vunpack.c.l.b16 %v1684
        %v1779 = vunpack.c.l.b16 %v1685
        %v1780 = vunpack.c.h.b16 %v1685
        %v1781 = vunpack.c.l.b16 %v1686
        %v1782 = vunpack.c.l.b16 %v1687
        %v1783 = vunpack.c.h.b16 %v1687
        %v1784 = vunpack.c.l.b16 %v1688
        %v1785 = vunpack.c.l.b16 %v1689
        %v1786 = vunpack.c.h.b16 %v1689
        %v1787 = vunpack.c.l.b16 %v1690
        %v1788 = vunpack.c.l.b16 %v1691
        %v1789 = vunpack.c.h.b16 %v1691
        %v1790 = vunpack.c.l.b16 %v1692
        %v1791 = vpack.c.b16 %v1746, %v1743
        %v1792 = vpack.c.b16 %v1747, %v1744
        %v1793 = vpack.c.b16 %v1748, %v1745
        %v1794 = vpack.c.b16 %v1752, %v1749
        %v1795 = vpack.c.b16 %v1753, %v1750
        %v1796 = vpack.c.b16 %v1754, %v1751
        %v1797 = vpack.c.b16 %v1758, %v1755
        %v1798 = vpack.c.b16 %v1759, %v1756
        %v1799 = vpack.c.b16 %v1760, %v1757
        %v1800 = vpack.c.b16 %v1764, %v1761
        %v1801 = vpack.c.b16 %v1765, %v1762
        %v1802 = vpack.c.b16 %v1766, %v1763
        %v1803 = vpack.c.b16 %v1770, %v1767
        %v1804 = vpack.c.b16 %v1771, %v1768
        %v1805 = vpack.c.b16 %v1772, %v1769
        %v1806 = vpack.c.b16 %v1776, %v1773
        %v1807 = vpack.c.b16 %v1777, %v1774
        %v1808 = vpack.c.b16 %v1778, %v1775
        %v1809 = vpack.c.b16 %v1782, %v1779
        %v1810 = vpack.c.b16 %v1783, %v1780
        %v1811 = vpack.c.b16 %v1784, %v1781
        %v1812 = vpack.c.b16 %v1788, %v1785
        %v1813 = vpack.c.b16 %v1789, %v1786
        %v1814 = vpack.c.b16 %v1790, %v1787
        %1839 = vmatprep.subr.bf16.mxu0 %v1813
        %1840 = vmatpush1.bf16.msra.mxu0 %v1812
        %1841 = vmatprep.subr.bf16.mxu0 %v1810
        %1842 = vmatpush1.bf16.msra.mxu0 %v1809
        %1843 = vmatprep.subr.bf16.mxu0 %v1807
        %1844 = vmatpush1.bf16.msra.mxu0 %v1806
        %1845 = vmatprep.subr.bf16.mxu0 %v1804
        %1846 = vmatpush1.bf16.msra.mxu0 %v1803
        %1847 = vmatprep.subr.bf16.mxu0 %v1801
        %1848 = vmatpush1.bf16.msra.mxu0 %v1800
        %1849 = vmatprep.subr.bf16.mxu0 %v1798
        %1850 = vmatpush1.bf16.msra.mxu0 %v1797
        %1851 = vmatprep.subr.bf16.mxu0 %v1795
        %1852 = vmatpush1.bf16.msra.mxu0 %v1794
        %1853 = vmatprep.subr.bf16.mxu0 %v1792
        %1854 = vmatpush1.bf16.msra.mxu0 %v1791
        %1855 = vmatprep.subr.bf16.mxu0 0
        %1856 = vmatpush2.bf16.msra.mxu0 0
        %1857 = vmatprep.subr.bf16.mxu0 0
        %1858 = vmatpush2.bf16.msra.mxu0 0
        %1859 = vmatprep.subr.bf16.mxu0 0
        %1860 = vmatpush2.bf16.msra.mxu0 0
        %1861 = vmatprep.subr.bf16.mxu0 0
        %1862 = vmatpush2.bf16.msra.mxu0 0
        %1863 = vmatprep.subr.bf16.mxu0 0
        %1864 = vmatpush2.bf16.msra.mxu0 0
        %1865 = vmatprep.subr.bf16.mxu0 0
        %1866 = vmatpush2.bf16.msra.mxu0 0
        %1867 = vmatprep.subr.bf16.mxu0 0
        %1868 = vmatpush2.bf16.msra.mxu0 0
        %1869 = vmatprep.subr.bf16.mxu0 0
        %1870 = vmatpush2.bf16.msra.mxu0 0
        %1871 = vmatprep.mubr.bf16.mxu0 0
        %1872 = vmatmul.mubr.bf16.gmra.mxu0 %v1656
        %v1873 = vpop.f32.mrf.mxu0
        %v1874 = vadd.f32 %v1699, %v1873
        %v1875 = vpop.f32.mrf.mxu0
        %v1876 = vadd.f32 %v1703, %v1875
        %v1877 = vpop.f32.mrf.mxu0
        %v1878 = vadd.f32 %v1699, %v1877
        %v1879 = vpop.f32.mrf.mxu0
        %v1880 = vadd.f32 %v1703, %v1879
        %1881 = vmatprep.mubr.bf16.mxu0 0
        %1882 = vmatmul.mubr.bf16.gmra.mxu0 %v1657
        %v1883 = vpop.f32.mrf.mxu0
        %v1884 = vadd.f32 %v1699, %v1883
        %v1885 = vpop.f32.mrf.mxu0
        %v1886 = vadd.f32 %v1703, %v1885
        %v1887 = vpop.f32.mrf.mxu0
        %v1888 = vadd.f32 %v1699, %v1887
        %v1889 = vpop.f32.mrf.mxu0
        %v1890 = vadd.f32 %v1703, %v1889
        %1891 = vmatprep.mubr.bf16.mxu0 0
        %1892 = vmatmul.mubr.bf16.gmra.mxu0 %v1658
        %v1893 = vpop.f32.mrf.mxu0
        %v1894 = vadd.f32 %v1699, %v1893
        %v1895 = vpop.f32.mrf.mxu0
        %v1896 = vadd.f32 %v1703, %v1895
        %v1897 = vpop.f32.mrf.mxu0
        %v1898 = vadd.f32 %v1699, %v1897
        %v1899 = vpop.f32.mrf.mxu0
        %v1900 = vadd.f32 %v1703, %v1899
        %1901 = vmatprep.mubr.bf16.mxu0 0
        %1902 = vmatmul.mubr.bf16.gmra.mxu0 %v1659
        %v1903 = vpop.f32.mrf.mxu0
        %v1904 = vadd.f32 %v1699, %v1903
        %v1905 = vpop.f32.mrf.mxu0
        %v1906 = vadd.f32 %v1703, %v1905
        %v1907 = vpop.f32.mrf.mxu0
        %v1908 = vadd.f32 %v1699, %v1907
        %v1909 = vpop.f32.mrf.mxu0
        %v1910 = vadd.f32 %v1703, %v1909
        %1911 = vdwg.mxu0
        %1912 = vmatprep.subr.bf16.mxu0 0
        %1913 = vmatpush1.bf16.msra.mxu0 %v1814
        %1914 = vmatprep.subr.bf16.mxu0 0
        %1915 = vmatpush1.bf16.msra.mxu0 %v1811
        %1916 = vmatprep.subr.bf16.mxu0 0
        %1917 = vmatpush1.bf16.msra.mxu0 %v1808
        %1918 = vmatprep.subr.bf16.mxu0 0
        %1919 = vmatpush1.bf16.msra.mxu0 %v1805
        %1920 = vmatprep.subr.bf16.mxu0 0
        %1921 = vmatpush1.bf16.msra.mxu0 %v1802
        %1922 = vmatprep.subr.bf16.mxu0 0
        %1923 = vmatpush1.bf16.msra.mxu0 %v1799
        %1924 = vmatprep.subr.bf16.mxu0 0
        %1925 = vmatpush1.bf16.msra.mxu0 %v1796
        %1926 = vmatprep.subr.bf16.mxu0 0
        %1927 = vmatpush1.bf16.msra.mxu0 %v1793
        %1928 = vmatprep.subr.bf16.mxu0 0
        %1929 = vmatpush2.bf16.msra.mxu0 0
        %1930 = vmatprep.subr.bf16.mxu0 0
        %1931 = vmatpush2.bf16.msra.mxu0 0
        %1932 = vmatprep.subr.bf16.mxu0 0
        %1933 = vmatpush2.bf16.msra.mxu0 0
        %1934 = vmatprep.subr.bf16.mxu0 0
        %1935 = vmatpush2.bf16.msra.mxu0 0
        %1936 = vmatprep.subr.bf16.mxu0 0
        %1937 = vmatpush2.bf16.msra.mxu0 0
        %1938 = vmatprep.subr.bf16.mxu0 0
        %1939 = vmatpush2.bf16.msra.mxu0 0
        %1940 = vmatprep.subr.bf16.mxu0 0
        %1941 = vmatpush2.bf16.msra.mxu0 0
        %1942 = vmatprep.subr.bf16.mxu0 0
        %1943 = vmatpush2.bf16.msra.mxu0 0
        %1944 = vmatprep.mubr.bf16.mxu0 0
        %1945 = vmatmul.mubr.bf16.gmra.mxu0 %v1656
        %v1946 = vpop.f32.mrf.mxu0
        %v1947 = vadd.f32 %v1707, %v1946
        %v1948 = vpop.f32.mrf.mxu0
        %v1949 = vpop.f32.mrf.mxu0
        %v1950 = vadd.f32 %v1707, %v1949
        %v1951 = vpop.f32.mrf.mxu0
        %1952 = vmatprep.mubr.bf16.mxu0 0
        %1953 = vmatmul.mubr.bf16.gmra.mxu0 %v1657
        %v1954 = vpop.f32.mrf.mxu0
        %v1955 = vadd.f32 %v1707, %v1954
        %v1956 = vpop.f32.mrf.mxu0
        %v1957 = vpop.f32.mrf.mxu0
        %v1958 = vadd.f32 %v1707, %v1957
        %v1959 = vpop.f32.mrf.mxu0
        %1960 = vmatprep.mubr.bf16.mxu0 0
        %1961 = vmatmul.mubr.bf16.gmra.mxu0 %v1658
        %v1962 = vpop.f32.mrf.mxu0
        %v1963 = vadd.f32 %v1707, %v1962
        %v1964 = vpop.f32.mrf.mxu0
        %v1965 = vpop.f32.mrf.mxu0
        %v1966 = vadd.f32 %v1707, %v1965
        %v1967 = vpop.f32.mrf.mxu0
        %1968 = vmatprep.mubr.bf16.mxu0 0
        %1969 = vmatmul.mubr.bf16.gmra.mxu0 %v1659
        %v1970 = vpop.f32.mrf.mxu0
        %v1971 = vadd.f32 %v1707, %v1970
        %v1972 = vpop.f32.mrf.mxu0
        %v1973 = vpop.f32.mrf.mxu0
        %v1974 = vadd.f32 %v1707, %v1973
        %v1975 = vpop.f32.mrf.mxu0
        %1976 = vdwg.mxu0
        %s1977 = scalar_lea.vmem [#allocation2], 8
        %v1978 = vld [vmem:[%s1977] sm:$0xff]
        %s1979 = scalar_lea.vmem %s3, 192
        %v1980 = vld [vmem:[%s1979] sm:$0xff]
        %v1981 = vld [vmem:[%s1979 + $0x8] sm:$0xf]
        %v1982 = vld [vmem:[%s1979 + $0xc] sm:$0xff]
        %v1983 = vld [vmem:[%s1979 + $0x14] sm:$0xf]
        %v1984 = vld [vmem:[%s1979 + $0x18] sm:$0xff]
        %v1985 = vld [vmem:[%s1979 + $0x20] sm:$0xf]
        %v1986 = vld [vmem:[%s1979 + $0x24] sm:$0xff]
        %v1987 = vld [vmem:[%s1979 + $0x2c] sm:$0xf]
        %v1988 = vld [vmem:[%s1979 + $0x30] sm:$0xff]
        %v1989 = vld [vmem:[%s1979 + $0x38] sm:$0xf]
        %v1990 = vld [vmem:[%s1979 + $0x3c] sm:$0xff]
        %v1991 = vld [vmem:[%s1979 + $0x44] sm:$0xf]
        %v1992 = vld [vmem:[%s1979 + $0x48] sm:$0xff]
        %v1993 = vld [vmem:[%s1979 + $0x50] sm:$0xf]
        %v1994 = vld [vmem:[%s1979 + $0x54] sm:$0xff]
        %v1995 = vld [vmem:[%s1979 + $0x5c] sm:$0xf]
        %v1996 = vld [vmem:[%s1979 + $0x60] sm:$0xff]
        %v1997 = vld [vmem:[%s1979 + $0x68] sm:$0xf]
        %v1998 = vld [vmem:[%s1979 + $0x6c] sm:$0xff]
        %v1999 = vld [vmem:[%s1979 + $0x74] sm:$0xf]
        %v2000 = vld [vmem:[%s1979 + $0x78] sm:$0xff]
        %v2001 = vld [vmem:[%s1979 + $0x80] sm:$0xf]
        %v2002 = vld [vmem:[%s1979 + $0x84] sm:$0xff]
        %v2003 = vld [vmem:[%s1979 + $0x8c] sm:$0xf]
        %v2004 = vld [vmem:[%s1979 + $0x90] sm:$0xff]
        %v2005 = vld [vmem:[%s1979 + $0x98] sm:$0xf]
        %v2006 = vld [vmem:[%s1979 + $0x9c] sm:$0xff]
        %v2007 = vld [vmem:[%s1979 + $0xa4] sm:$0xf]
        %v2008 = vld [vmem:[%s1979 + $0xa8] sm:$0xff]
        %v2009 = vld [vmem:[%s1979 + $0xb0] sm:$0xf]
        %v2010 = vld [vmem:[%s1979 + $0xb4] sm:$0xff]
        %v2011 = vld [vmem:[%s1979 + $0xbc] sm:$0xf]
        %s2012 = scalar_lea.vmem %s5, 3
        %v2013 = vld [vmem:[%s2012] sm:$0x7]
        %v2014 = vpack.c.bf16 %v1978, %v1978
        %v2016 = vlaneseq
        %v2017 = vshrl.u32 %v2016, 7
        %v2018 = vsub.s32 0, %v2017
        %v2019 = vrot.slane %v2013, %v2018
        %v2020 = vlaneseq
        %v2021 = vshrl.u32 %v2020, 7
        %v2022 = vsub.s32 1, %v2021
        %v2023 = vrot.slane %v2013, %v2022
        %v2024 = vlaneseq
        %v2025 = vshrl.u32 %v2024, 7
        %v2026 = vsub.s32 2, %v2025
        %v2027 = vrot.slane %v2013, %v2026
        %v2063 = vunpack.c.l.b16 %v1980
        %v2064 = vunpack.c.h.b16 %v1980
        %v2065 = vunpack.c.l.b16 %v1981
        %v2066 = vunpack.c.l.b16 %v1982
        %v2067 = vunpack.c.h.b16 %v1982
        %v2068 = vunpack.c.l.b16 %v1983
        %v2069 = vunpack.c.l.b16 %v1984
        %v2070 = vunpack.c.h.b16 %v1984
        %v2071 = vunpack.c.l.b16 %v1985
        %v2072 = vunpack.c.l.b16 %v1986
        %v2073 = vunpack.c.h.b16 %v1986
        %v2074 = vunpack.c.l.b16 %v1987
        %v2075 = vunpack.c.l.b16 %v1988
        %v2076 = vunpack.c.h.b16 %v1988
        %v2077 = vunpack.c.l.b16 %v1989
        %v2078 = vunpack.c.l.b16 %v1990
        %v2079 = vunpack.c.h.b16 %v1990
        %v2080 = vunpack.c.l.b16 %v1991
        %v2081 = vunpack.c.l.b16 %v1992
        %v2082 = vunpack.c.h.b16 %v1992
        %v2083 = vunpack.c.l.b16 %v1993
        %v2084 = vunpack.c.l.b16 %v1994
        %v2085 = vunpack.c.h.b16 %v1994
        %v2086 = vunpack.c.l.b16 %v1995
        %v2087 = vunpack.c.l.b16 %v1996
        %v2088 = vunpack.c.h.b16 %v1996
        %v2089 = vunpack.c.l.b16 %v1997
        %v2090 = vunpack.c.l.b16 %v1998
        %v2091 = vunpack.c.h.b16 %v1998
        %v2092 = vunpack.c.l.b16 %v1999
        %v2093 = vunpack.c.l.b16 %v2000
        %v2094 = vunpack.c.h.b16 %v2000
        %v2095 = vunpack.c.l.b16 %v2001
        %v2096 = vunpack.c.l.b16 %v2002
        %v2097 = vunpack.c.h.b16 %v2002
        %v2098 = vunpack.c.l.b16 %v2003
        %v2099 = vunpack.c.l.b16 %v2004
        %v2100 = vunpack.c.h.b16 %v2004
        %v2101 = vunpack.c.l.b16 %v2005
        %v2102 = vunpack.c.l.b16 %v2006
        %v2103 = vunpack.c.h.b16 %v2006
        %v2104 = vunpack.c.l.b16 %v2007
        %v2105 = vunpack.c.l.b16 %v2008
        %v2106 = vunpack.c.h.b16 %v2008
        %v2107 = vunpack.c.l.b16 %v2009
        %v2108 = vunpack.c.l.b16 %v2010
        %v2109 = vunpack.c.h.b16 %v2010
        %v2110 = vunpack.c.l.b16 %v2011
        %v2111 = vpack.c.b16 %v2066, %v2063
        %v2112 = vpack.c.b16 %v2067, %v2064
        %v2113 = vpack.c.b16 %v2068, %v2065
        %v2114 = vpack.c.b16 %v2072, %v2069
        %v2115 = vpack.c.b16 %v2073, %v2070
        %v2116 = vpack.c.b16 %v2074, %v2071
        %v2117 = vpack.c.b16 %v2078, %v2075
        %v2118 = vpack.c.b16 %v2079, %v2076
        %v2119 = vpack.c.b16 %v2080, %v2077
        %v2120 = vpack.c.b16 %v2084, %v2081
        %v2121 = vpack.c.b16 %v2085, %v2082
        %v2122 = vpack.c.b16 %v2086, %v2083
        %v2123 = vpack.c.b16 %v2090, %v2087
        %v2124 = vpack.c.b16 %v2091, %v2088
        %v2125 = vpack.c.b16 %v2092, %v2089
        %v2126 = vpack.c.b16 %v2096, %v2093
        %v2127 = vpack.c.b16 %v2097, %v2094
        %v2128 = vpack.c.b16 %v2098, %v2095
        %v2129 = vpack.c.b16 %v2102, %v2099
        %v2130 = vpack.c.b16 %v2103, %v2100
        %v2131 = vpack.c.b16 %v2104, %v2101
        %v2132 = vpack.c.b16 %v2108, %v2105
        %v2133 = vpack.c.b16 %v2109, %v2106
        %v2134 = vpack.c.b16 %v2110, %v2107
        %2159 = vmatprep.subr.bf16.mxu0 %v2133
        %2160 = vmatpush1.bf16.msra.mxu0 %v2132
        %2161 = vmatprep.subr.bf16.mxu0 %v2130
        %2162 = vmatpush1.bf16.msra.mxu0 %v2129
        %2163 = vmatprep.subr.bf16.mxu0 %v2127
        %2164 = vmatpush1.bf16.msra.mxu0 %v2126
        %2165 = vmatprep.subr.bf16.mxu0 %v2124
        %2166 = vmatpush1.bf16.msra.mxu0 %v2123
        %2167 = vmatprep.subr.bf16.mxu0 %v2121
        %2168 = vmatpush1.bf16.msra.mxu0 %v2120
        %2169 = vmatprep.subr.bf16.mxu0 %v2118
        %2170 = vmatpush1.bf16.msra.mxu0 %v2117
        %2171 = vmatprep.subr.bf16.mxu0 %v2115
        %2172 = vmatpush1.bf16.msra.mxu0 %v2114
        %2173 = vmatprep.subr.bf16.mxu0 %v2112
        %2174 = vmatpush1.bf16.msra.mxu0 %v2111
        %2175 = vmatprep.subr.bf16.mxu0 0
        %2176 = vmatpush2.bf16.msra.mxu0 0
        %2177 = vmatprep.subr.bf16.mxu0 0
        %2178 = vmatpush2.bf16.msra.mxu0 0
        %2179 = vmatprep.subr.bf16.mxu0 0
        %2180 = vmatpush2.bf16.msra.mxu0 0
        %2181 = vmatprep.subr.bf16.mxu0 0
        %2182 = vmatpush2.bf16.msra.mxu0 0
        %2183 = vmatprep.subr.bf16.mxu0 0
        %2184 = vmatpush2.bf16.msra.mxu0 0
        %2185 = vmatprep.subr.bf16.mxu0 0
        %2186 = vmatpush2.bf16.msra.mxu0 0
        %2187 = vmatprep.subr.bf16.mxu0 0
        %2188 = vmatpush2.bf16.msra.mxu0 0
        %2189 = vmatprep.subr.bf16.mxu0 0
        %2190 = vmatpush2.bf16.msra.mxu0 0
        %2191 = vmatprep.mubr.bf16.mxu0 0
        %2192 = vmatmul.mubr.bf16.gmra.mxu0 %v2014
        %v2193 = vpop.f32.mrf.mxu0
        %v2194 = vadd.f32 %v2019, %v2193
        %v2195 = vpop.f32.mrf.mxu0
        %v2196 = vadd.f32 %v2023, %v2195
        %v2197 = vpop.f32.mrf.mxu0
        %v2198 = vpop.f32.mrf.mxu0
        %2199 = vdwg.mxu0
        %2200 = vmatprep.subr.bf16.mxu0 0
        %2201 = vmatpush1.bf16.msra.mxu0 %v2134
        %2202 = vmatprep.subr.bf16.mxu0 0
        %2203 = vmatpush1.bf16.msra.mxu0 %v2131
        %2204 = vmatprep.subr.bf16.mxu0 0
        %2205 = vmatpush1.bf16.msra.mxu0 %v2128
        %2206 = vmatprep.subr.bf16.mxu0 0
        %2207 = vmatpush1.bf16.msra.mxu0 %v2125
        %2208 = vmatprep.subr.bf16.mxu0 0
        %2209 = vmatpush1.bf16.msra.mxu0 %v2122
        %2210 = vmatprep.subr.bf16.mxu0 0
        %2211 = vmatpush1.bf16.msra.mxu0 %v2119
        %2212 = vmatprep.subr.bf16.mxu0 0
        %2213 = vmatpush1.bf16.msra.mxu0 %v2116
        %2214 = vmatprep.subr.bf16.mxu0 0
        %2215 = vmatpush1.bf16.msra.mxu0 %v2113
        %2216 = vmatprep.subr.bf16.mxu0 0
        %2217 = vmatpush2.bf16.msra.mxu0 0
        %2218 = vmatprep.subr.bf16.mxu0 0
        %2219 = vmatpush2.bf16.msra.mxu0 0
        %2220 = vmatprep.subr.bf16.mxu0 0
        %2221 = vmatpush2.bf16.msra.mxu0 0
        %2222 = vmatprep.subr.bf16.mxu0 0
        %2223 = vmatpush2.bf16.msra.mxu0 0
        %2224 = vmatprep.subr.bf16.mxu0 0
        %2225 = vmatpush2.bf16.msra.mxu0 0
        %2226 = vmatprep.subr.bf16.mxu0 0
        %2227 = vmatpush2.bf16.msra.mxu0 0
        %2228 = vmatprep.subr.bf16.mxu0 0
        %2229 = vmatpush2.bf16.msra.mxu0 0
        %2230 = vmatprep.subr.bf16.mxu0 0
        %2231 = vmatpush2.bf16.msra.mxu0 0
        %2232 = vmatprep.mubr.bf16.mxu0 0
        %2233 = vmatmul.mubr.bf16.gmra.mxu0 %v2014
        %v2234 = vpop.f32.mrf.mxu0
        %v2235 = vadd.f32 %v2027, %v2234
        %v2236 = vpop.f32.mrf.mxu0
        %v2237 = vpop.f32.mrf.mxu0
        %v2238 = vpop.f32.mrf.mxu0
        %2239 = vdwg.mxu0
        %v2240 = vadd.f32 %v1874, %v2194
        %v2241 = vxor.u32 %v2240, 2147483648
        %v2242 = vmul.f32 %v2241, 1.442695
        %v2243 = vpow.pop %v2242
        %v2244 = vadd.f32 %v2243, 1.0
        %v2245 = vrcp.pop %v2244
        %v2246 = vmul.f32 1.0, %v2245
        %v2247 = vadd.f32 %v1876, %v2196
        %v2248 = vxor.u32 %v2247, 2147483648
        %v2249 = vmul.f32 %v2248, 1.442695
        %v2250 = vpow.pop %v2249
        %v2251 = vadd.f32 %v2250, 1.0
        %v2252 = vrcp.pop %v2251
        %v2253 = vmul.f32 1.0, %v2252
        %v2254 = vmul.f32 %v2246, %v2235
        %v2255 = vadd.f32 %v1947, %v2254
        %v2256 = vtanh.pop %v2255
        %v2257 = vsub.f32 1.0, %v2253
        %v2258 = vmul.f32 %v2257, %v2256
        %v2259 = vmul.f32 %v2253, %v1978
        %v2260 = vadd.f32 %v2258, %v2259
        %2261 = vst [vmem:[%s279] sm:$0xff] %v2260
        %v2262 = vpack.c.bf16 %v2260, %v2260
        %2263 = vmatprep.subr.bf16.mxu0 %v2133
        %2264 = vmatpush1.bf16.msra.mxu0 %v2132
        %2265 = vmatprep.subr.bf16.mxu0 %v2130
        %2266 = vmatpush1.bf16.msra.mxu0 %v2129
        %2267 = vmatprep.subr.bf16.mxu0 %v2127
        %2268 = vmatpush1.bf16.msra.mxu0 %v2126
        %2269 = vmatprep.subr.bf16.mxu0 %v2124
        %2270 = vmatpush1.bf16.msra.mxu0 %v2123
        %2271 = vmatprep.subr.bf16.mxu0 %v2121
        %2272 = vmatpush1.bf16.msra.mxu0 %v2120
        %2273 = vmatprep.subr.bf16.mxu0 %v2118
        %2274 = vmatpush1.bf16.msra.mxu0 %v2117
        %2275 = vmatprep.subr.bf16.mxu0 %v2115
        %2276 = vmatpush1.bf16.msra.mxu0 %v2114
        %2277 = vmatprep.subr.bf16.mxu0 %v2112
        %2278 = vmatpush1.bf16.msra.mxu0 %v2111
        %2279 = vmatprep.subr.bf16.mxu0 0
        %2280 = vmatpush2.bf16.msra.mxu0 0
        %2281 = vmatprep.subr.bf16.mxu0 0
        %2282 = vmatpush2.bf16.msra.mxu0 0
        %2283 = vmatprep.subr.bf16.mxu0 0
        %2284 = vmatpush2.bf16.msra.mxu0 0
        %2285 = vmatprep.subr.bf16.mxu0 0
        %2286 = vmatpush2.bf16.msra.mxu0 0
        %2287 = vmatprep.subr.bf16.mxu0 0
        %2288 = vmatpush2.bf16.msra.mxu0 0
        %2289 = vmatprep.subr.bf16.mxu0 0
        %2290 = vmatpush2.bf16.msra.mxu0 0
        %2291 = vmatprep.subr.bf16.mxu0 0
        %2292 = vmatpush2.bf16.msra.mxu0 0
        %2293 = vmatprep.subr.bf16.mxu0 0
        %2294 = vmatpush2.bf16.msra.mxu0 0
        %2295 = vmatprep.mubr.bf16.mxu0 0
        %2296 = vmatmul.mubr.bf16.gmra.mxu0 %v2262
        %v2297 = vpop.f32.mrf.mxu0
        %v2298 = vadd.f32 %v2019, %v2297
        %v2299 = vpop.f32.mrf.mxu0
        %v2300 = vadd.f32 %v2023, %v2299
        %v2301 = vpop.f32.mrf.mxu0
        %v2302 = vpop.f32.mrf.mxu0
        %2303 = vdwg.mxu0
        %2304 = vmatprep.subr.bf16.mxu0 0
        %2305 = vmatpush1.bf16.msra.mxu0 %v2134
        %2306 = vmatprep.subr.bf16.mxu0 0
        %2307 = vmatpush1.bf16.msra.mxu0 %v2131
        %2308 = vmatprep.subr.bf16.mxu0 0
        %2309 = vmatpush1.bf16.msra.mxu0 %v2128
        %2310 = vmatprep.subr.bf16.mxu0 0
        %2311 = vmatpush1.bf16.msra.mxu0 %v2125
        %2312 = vmatprep.subr.bf16.mxu0 0
        %2313 = vmatpush1.bf16.msra.mxu0 %v2122
        %2314 = vmatprep.subr.bf16.mxu0 0
        %2315 = vmatpush1.bf16.msra.mxu0 %v2119
        %2316 = vmatprep.subr.bf16.mxu0 0
        %2317 = vmatpush1.bf16.msra.mxu0 %v2116
        %2318 = vmatprep.subr.bf16.mxu0 0
        %2319 = vmatpush1.bf16.msra.mxu0 %v2113
        %2320 = vmatprep.subr.bf16.mxu0 0
        %2321 = vmatpush2.bf16.msra.mxu0 0
        %2322 = vmatprep.subr.bf16.mxu0 0
        %2323 = vmatpush2.bf16.msra.mxu0 0
        %2324 = vmatprep.subr.bf16.mxu0 0
        %2325 = vmatpush2.bf16.msra.mxu0 0
        %2326 = vmatprep.subr.bf16.mxu0 0
        %2327 = vmatpush2.bf16.msra.mxu0 0
        %2328 = vmatprep.subr.bf16.mxu0 0
        %2329 = vmatpush2.bf16.msra.mxu0 0
        %2330 = vmatprep.subr.bf16.mxu0 0
        %2331 = vmatpush2.bf16.msra.mxu0 0
        %2332 = vmatprep.subr.bf16.mxu0 0
        %2333 = vmatpush2.bf16.msra.mxu0 0
        %2334 = vmatprep.subr.bf16.mxu0 0
        %2335 = vmatpush2.bf16.msra.mxu0 0
        %2336 = vmatprep.mubr.bf16.mxu0 0
        %2337 = vmatmul.mubr.bf16.gmra.mxu0 %v2262
        %v2338 = vpop.f32.mrf.mxu0
        %v2339 = vadd.f32 %v2027, %v2338
        %v2340 = vpop.f32.mrf.mxu0
        %v2341 = vpop.f32.mrf.mxu0
        %v2342 = vpop.f32.mrf.mxu0
        %2343 = vdwg.mxu0
        %v2344 = vadd.f32 %v1878, %v2298
        %v2345 = vxor.u32 %v2344, 2147483648
        %v2346 = vmul.f32 %v2345, 1.442695
        %v2347 = vpow.pop %v2346
        %v2348 = vadd.f32 %v2347, 1.0
        %v2349 = vrcp.pop %v2348
        %v2350 = vmul.f32 1.0, %v2349
        %v2351 = vadd.f32 %v1880, %v2300
        %v2352 = vxor.u32 %v2351, 2147483648
        %v2353 = vmul.f32 %v2352, 1.442695
        %v2354 = vpow.pop %v2353
        %v2355 = vadd.f32 %v2354, 1.0
        %v2356 = vrcp.pop %v2355
        %v2357 = vmul.f32 1.0, %v2356
        %v2358 = vmul.f32 %v2350, %v2339
        %v2359 = vadd.f32 %v1950, %v2358
        %v2360 = vtanh.pop %v2359
        %v2361 = vsub.f32 1.0, %v2357
        %v2362 = vmul.f32 %v2361, %v2360
        %v2363 = vmul.f32 %v2357, %v2260
        %v2364 = vadd.f32 %v2362, %v2363
        %s2365 = scalar_lea.vmem %s279, 8
        %2366 = vst [vmem:[%s2365] sm:$0xff] %v2364
        %v2367 = vpack.c.bf16 %v2364, %v2364
        %2368 = vmatprep.subr.bf16.mxu0 %v2133
        %2369 = vmatpush1.bf16.msra.mxu0 %v2132
        %2370 = vmatprep.subr.bf16.mxu0 %v2130
        %2371 = vmatpush1.bf16.msra.mxu0 %v2129
        %2372 = vmatprep.subr.bf16.mxu0 %v2127
        %2373 = vmatpush1.bf16.msra.mxu0 %v2126
        %2374 = vmatprep.subr.bf16.mxu0 %v2124
        %2375 = vmatpush1.bf16.msra.mxu0 %v2123
        %2376 = vmatprep.subr.bf16.mxu0 %v2121
        %2377 = vmatpush1.bf16.msra.mxu0 %v2120
        %2378 = vmatprep.subr.bf16.mxu0 %v2118
        %2379 = vmatpush1.bf16.msra.mxu0 %v2117
        %2380 = vmatprep.subr.bf16.mxu0 %v2115
        %2381 = vmatpush1.bf16.msra.mxu0 %v2114
        %2382 = vmatprep.subr.bf16.mxu0 %v2112
        %2383 = vmatpush1.bf16.msra.mxu0 %v2111
        %2384 = vmatprep.subr.bf16.mxu0 0
        %2385 = vmatpush2.bf16.msra.mxu0 0
        %2386 = vmatprep.subr.bf16.mxu0 0
        %2387 = vmatpush2.bf16.msra.mxu0 0
        %2388 = vmatprep.subr.bf16.mxu0 0
        %2389 = vmatpush2.bf16.msra.mxu0 0
        %2390 = vmatprep.subr.bf16.mxu0 0
        %2391 = vmatpush2.bf16.msra.mxu0 0
        %2392 = vmatprep.subr.bf16.mxu0 0
        %2393 = vmatpush2.bf16.msra.mxu0 0
        %2394 = vmatprep.subr.bf16.mxu0 0
        %2395 = vmatpush2.bf16.msra.mxu0 0
        %2396 = vmatprep.subr.bf16.mxu0 0
        %2397 = vmatpush2.bf16.msra.mxu0 0
        %2398 = vmatprep.subr.bf16.mxu0 0
        %2399 = vmatpush2.bf16.msra.mxu0 0
        %2400 = vmatprep.mubr.bf16.mxu0 0
        %2401 = vmatmul.mubr.bf16.gmra.mxu0 %v2367
        %v2402 = vpop.f32.mrf.mxu0
        %v2403 = vadd.f32 %v2019, %v2402
        %v2404 = vpop.f32.mrf.mxu0
        %v2405 = vadd.f32 %v2023, %v2404
        %v2406 = vpop.f32.mrf.mxu0
        %v2407 = vpop.f32.mrf.mxu0
        %2408 = vdwg.mxu0
        %2409 = vmatprep.subr.bf16.mxu0 0
        %2410 = vmatpush1.bf16.msra.mxu0 %v2134
        %2411 = vmatprep.subr.bf16.mxu0 0
        %2412 = vmatpush1.bf16.msra.mxu0 %v2131
        %2413 = vmatprep.subr.bf16.mxu0 0
        %2414 = vmatpush1.bf16.msra.mxu0 %v2128
        %2415 = vmatprep.subr.bf16.mxu0 0
        %2416 = vmatpush1.bf16.msra.mxu0 %v2125
        %2417 = vmatprep.subr.bf16.mxu0 0
        %2418 = vmatpush1.bf16.msra.mxu0 %v2122
        %2419 = vmatprep.subr.bf16.mxu0 0
        %2420 = vmatpush1.bf16.msra.mxu0 %v2119
        %2421 = vmatprep.subr.bf16.mxu0 0
        %2422 = vmatpush1.bf16.msra.mxu0 %v2116
        %2423 = vmatprep.subr.bf16.mxu0 0
        %2424 = vmatpush1.bf16.msra.mxu0 %v2113
        %2425 = vmatprep.subr.bf16.mxu0 0
        %2426 = vmatpush2.bf16.msra.mxu0 0
        %2427 = vmatprep.subr.bf16.mxu0 0
        %2428 = vmatpush2.bf16.msra.mxu0 0
        %2429 = vmatprep.subr.bf16.mxu0 0
        %2430 = vmatpush2.bf16.msra.mxu0 0
        %2431 = vmatprep.subr.bf16.mxu0 0
        %2432 = vmatpush2.bf16.msra.mxu0 0
        %2433 = vmatprep.subr.bf16.mxu0 0
        %2434 = vmatpush2.bf16.msra.mxu0 0
        %2435 = vmatprep.subr.bf16.mxu0 0
        %2436 = vmatpush2.bf16.msra.mxu0 0
        %2437 = vmatprep.subr.bf16.mxu0 0
        %2438 = vmatpush2.bf16.msra.mxu0 0
        %2439 = vmatprep.subr.bf16.mxu0 0
        %2440 = vmatpush2.bf16.msra.mxu0 0
        %2441 = vmatprep.mubr.bf16.mxu0 0
        %2442 = vmatmul.mubr.bf16.gmra.mxu0 %v2367
        %v2443 = vpop.f32.mrf.mxu0
        %v2444 = vadd.f32 %v2027, %v2443
        %v2445 = vpop.f32.mrf.mxu0
        %v2446 = vpop.f32.mrf.mxu0
        %v2447 = vpop.f32.mrf.mxu0
        %2448 = vdwg.mxu0
        %v2449 = vadd.f32 %v1884, %v2403
        %v2450 = vxor.u32 %v2449, 2147483648
        %v2451 = vmul.f32 %v2450, 1.442695
        %v2452 = vpow.pop %v2451
        %v2453 = vadd.f32 %v2452, 1.0
        %v2454 = vrcp.pop %v2453
        %v2455 = vmul.f32 1.0, %v2454
        %v2456 = vadd.f32 %v1886, %v2405
        %v2457 = vxor.u32 %v2456, 2147483648
        %v2458 = vmul.f32 %v2457, 1.442695
        %v2459 = vpow.pop %v2458
        %v2460 = vadd.f32 %v2459, 1.0
        %v2461 = vrcp.pop %v2460
        %v2462 = vmul.f32 1.0, %v2461
        %v2463 = vmul.f32 %v2455, %v2444
        %v2464 = vadd.f32 %v1955, %v2463
        %v2465 = vtanh.pop %v2464
        %v2466 = vsub.f32 1.0, %v2462
        %v2467 = vmul.f32 %v2466, %v2465
        %v2468 = vmul.f32 %v2462, %v2364
        %v2469 = vadd.f32 %v2467, %v2468
        %s2470 = scalar_lea.vmem %s279, 16
        %2471 = vst [vmem:[%s2470] sm:$0xff] %v2469
        %v2472 = vpack.c.bf16 %v2469, %v2469
        %2473 = vmatprep.subr.bf16.mxu0 %v2133
        %2474 = vmatpush1.bf16.msra.mxu0 %v2132
        %2475 = vmatprep.subr.bf16.mxu0 %v2130
        %2476 = vmatpush1.bf16.msra.mxu0 %v2129
        %2477 = vmatprep.subr.bf16.mxu0 %v2127
        %2478 = vmatpush1.bf16.msra.mxu0 %v2126
        %2479 = vmatprep.subr.bf16.mxu0 %v2124
        %2480 = vmatpush1.bf16.msra.mxu0 %v2123
        %2481 = vmatprep.subr.bf16.mxu0 %v2121
        %2482 = vmatpush1.bf16.msra.mxu0 %v2120
        %2483 = vmatprep.subr.bf16.mxu0 %v2118
        %2484 = vmatpush1.bf16.msra.mxu0 %v2117
        %2485 = vmatprep.subr.bf16.mxu0 %v2115
        %2486 = vmatpush1.bf16.msra.mxu0 %v2114
        %2487 = vmatprep.subr.bf16.mxu0 %v2112
        %2488 = vmatpush1.bf16.msra.mxu0 %v2111
        %2489 = vmatprep.subr.bf16.mxu0 0
        %2490 = vmatpush2.bf16.msra.mxu0 0
        %2491 = vmatprep.subr.bf16.mxu0 0
        %2492 = vmatpush2.bf16.msra.mxu0 0
        %2493 = vmatprep.subr.bf16.mxu0 0
        %2494 = vmatpush2.bf16.msra.mxu0 0
        %2495 = vmatprep.subr.bf16.mxu0 0
        %2496 = vmatpush2.bf16.msra.mxu0 0
        %2497 = vmatprep.subr.bf16.mxu0 0
        %2498 = vmatpush2.bf16.msra.mxu0 0
        %2499 = vmatprep.subr.bf16.mxu0 0
        %2500 = vmatpush2.bf16.msra.mxu0 0
        %2501 = vmatprep.subr.bf16.mxu0 0
        %2502 = vmatpush2.bf16.msra.mxu0 0
        %2503 = vmatprep.subr.bf16.mxu0 0
        %2504 = vmatpush2.bf16.msra.mxu0 0
        %2505 = vmatprep.mubr.bf16.mxu0 0
        %2506 = vmatmul.mubr.bf16.gmra.mxu0 %v2472
        %v2507 = vpop.f32.mrf.mxu0
        %v2508 = vadd.f32 %v2019, %v2507
        %v2509 = vpop.f32.mrf.mxu0
        %v2510 = vadd.f32 %v2023, %v2509
        %v2511 = vpop.f32.mrf.mxu0
        %v2512 = vpop.f32.mrf.mxu0
        %2513 = vdwg.mxu0
        %2514 = vmatprep.subr.bf16.mxu0 0
        %2515 = vmatpush1.bf16.msra.mxu0 %v2134
        %2516 = vmatprep.subr.bf16.mxu0 0
        %2517 = vmatpush1.bf16.msra.mxu0 %v2131
        %2518 = vmatprep.subr.bf16.mxu0 0
        %2519 = vmatpush1.bf16.msra.mxu0 %v2128
        %2520 = vmatprep.subr.bf16.mxu0 0
        %2521 = vmatpush1.bf16.msra.mxu0 %v2125
        %2522 = vmatprep.subr.bf16.mxu0 0
        %2523 = vmatpush1.bf16.msra.mxu0 %v2122
        %2524 = vmatprep.subr.bf16.mxu0 0
        %2525 = vmatpush1.bf16.msra.mxu0 %v2119
        %2526 = vmatprep.subr.bf16.mxu0 0
        %2527 = vmatpush1.bf16.msra.mxu0 %v2116
        %2528 = vmatprep.subr.bf16.mxu0 0
        %2529 = vmatpush1.bf16.msra.mxu0 %v2113
        %2530 = vmatprep.subr.bf16.mxu0 0
        %2531 = vmatpush2.bf16.msra.mxu0 0
        %2532 = vmatprep.subr.bf16.mxu0 0
        %2533 = vmatpush2.bf16.msra.mxu0 0
        %2534 = vmatprep.subr.bf16.mxu0 0
        %2535 = vmatpush2.bf16.msra.mxu0 0
        %2536 = vmatprep.subr.bf16.mxu0 0
        %2537 = vmatpush2.bf16.msra.mxu0 0
        %2538 = vmatprep.subr.bf16.mxu0 0
        %2539 = vmatpush2.bf16.msra.mxu0 0
        %2540 = vmatprep.subr.bf16.mxu0 0
        %2541 = vmatpush2.bf16.msra.mxu0 0
        %2542 = vmatprep.subr.bf16.mxu0 0
        %2543 = vmatpush2.bf16.msra.mxu0 0
        %2544 = vmatprep.subr.bf16.mxu0 0
        %2545 = vmatpush2.bf16.msra.mxu0 0
        %2546 = vmatprep.mubr.bf16.mxu0 0
        %2547 = vmatmul.mubr.bf16.gmra.mxu0 %v2472
        %v2548 = vpop.f32.mrf.mxu0
        %v2549 = vadd.f32 %v2027, %v2548
        %v2550 = vpop.f32.mrf.mxu0
        %v2551 = vpop.f32.mrf.mxu0
        %v2552 = vpop.f32.mrf.mxu0
        %2553 = vdwg.mxu0
        %v2554 = vadd.f32 %v1888, %v2508
        %v2555 = vxor.u32 %v2554, 2147483648
        %v2556 = vmul.f32 %v2555, 1.442695
        %v2557 = vpow.pop %v2556
        %v2558 = vadd.f32 %v2557, 1.0
        %v2559 = vrcp.pop %v2558
        %v2560 = vmul.f32 1.0, %v2559
        %v2561 = vadd.f32 %v1890, %v2510
        %v2562 = vxor.u32 %v2561, 2147483648
        %v2563 = vmul.f32 %v2562, 1.442695
        %v2564 = vpow.pop %v2563
        %v2565 = vadd.f32 %v2564, 1.0
        %v2566 = vrcp.pop %v2565
        %v2567 = vmul.f32 1.0, %v2566
        %v2568 = vmul.f32 %v2560, %v2549
        %v2569 = vadd.f32 %v1958, %v2568
        %v2570 = vtanh.pop %v2569
        %v2571 = vsub.f32 1.0, %v2567
        %v2572 = vmul.f32 %v2571, %v2570
        %v2573 = vmul.f32 %v2567, %v2469
        %v2574 = vadd.f32 %v2572, %v2573
        %s2575 = scalar_lea.vmem %s279, 24
        %2576 = vst [vmem:[%s2575] sm:$0xff] %v2574
        %v2577 = vpack.c.bf16 %v2574, %v2574
        %2578 = vmatprep.subr.bf16.mxu0 %v2133
        %2579 = vmatpush1.bf16.msra.mxu0 %v2132
        %2580 = vmatprep.subr.bf16.mxu0 %v2130
        %2581 = vmatpush1.bf16.msra.mxu0 %v2129
        %2582 = vmatprep.subr.bf16.mxu0 %v2127
        %2583 = vmatpush1.bf16.msra.mxu0 %v2126
        %2584 = vmatprep.subr.bf16.mxu0 %v2124
        %2585 = vmatpush1.bf16.msra.mxu0 %v2123
        %2586 = vmatprep.subr.bf16.mxu0 %v2121
        %2587 = vmatpush1.bf16.msra.mxu0 %v2120
        %2588 = vmatprep.subr.bf16.mxu0 %v2118
        %2589 = vmatpush1.bf16.msra.mxu0 %v2117
        %2590 = vmatprep.subr.bf16.mxu0 %v2115
        %2591 = vmatpush1.bf16.msra.mxu0 %v2114
        %2592 = vmatprep.subr.bf16.mxu0 %v2112
        %2593 = vmatpush1.bf16.msra.mxu0 %v2111
        %2594 = vmatprep.subr.bf16.mxu0 0
        %2595 = vmatpush2.bf16.msra.mxu0 0
        %2596 = vmatprep.subr.bf16.mxu0 0
        %2597 = vmatpush2.bf16.msra.mxu0 0
        %2598 = vmatprep.subr.bf16.mxu0 0
        %2599 = vmatpush2.bf16.msra.mxu0 0
        %2600 = vmatprep.subr.bf16.mxu0 0
        %2601 = vmatpush2.bf16.msra.mxu0 0
        %2602 = vmatprep.subr.bf16.mxu0 0
        %2603 = vmatpush2.bf16.msra.mxu0 0
        %2604 = vmatprep.subr.bf16.mxu0 0
        %2605 = vmatpush2.bf16.msra.mxu0 0
        %2606 = vmatprep.subr.bf16.mxu0 0
        %2607 = vmatpush2.bf16.msra.mxu0 0
        %2608 = vmatprep.subr.bf16.mxu0 0
        %2609 = vmatpush2.bf16.msra.mxu0 0
        %2610 = vmatprep.mubr.bf16.mxu0 0
        %2611 = vmatmul.mubr.bf16.gmra.mxu0 %v2577
        %v2612 = vpop.f32.mrf.mxu0
        %v2613 = vadd.f32 %v2019, %v2612
        %v2614 = vpop.f32.mrf.mxu0
        %v2615 = vadd.f32 %v2023, %v2614
        %v2616 = vpop.f32.mrf.mxu0
        %v2617 = vpop.f32.mrf.mxu0
        %2618 = vdwg.mxu0
        %2619 = vmatprep.subr.bf16.mxu0 0
        %2620 = vmatpush1.bf16.msra.mxu0 %v2134
        %2621 = vmatprep.subr.bf16.mxu0 0
        %2622 = vmatpush1.bf16.msra.mxu0 %v2131
        %2623 = vmatprep.subr.bf16.mxu0 0
        %2624 = vmatpush1.bf16.msra.mxu0 %v2128
        %2625 = vmatprep.subr.bf16.mxu0 0
        %2626 = vmatpush1.bf16.msra.mxu0 %v2125
        %2627 = vmatprep.subr.bf16.mxu0 0
        %2628 = vmatpush1.bf16.msra.mxu0 %v2122
        %2629 = vmatprep.subr.bf16.mxu0 0
        %2630 = vmatpush1.bf16.msra.mxu0 %v2119
        %2631 = vmatprep.subr.bf16.mxu0 0
        %2632 = vmatpush1.bf16.msra.mxu0 %v2116
        %2633 = vmatprep.subr.bf16.mxu0 0
        %2634 = vmatpush1.bf16.msra.mxu0 %v2113
        %2635 = vmatprep.subr.bf16.mxu0 0
        %2636 = vmatpush2.bf16.msra.mxu0 0
        %2637 = vmatprep.subr.bf16.mxu0 0
        %2638 = vmatpush2.bf16.msra.mxu0 0
        %2639 = vmatprep.subr.bf16.mxu0 0
        %2640 = vmatpush2.bf16.msra.mxu0 0
        %2641 = vmatprep.subr.bf16.mxu0 0
        %2642 = vmatpush2.bf16.msra.mxu0 0
        %2643 = vmatprep.subr.bf16.mxu0 0
        %2644 = vmatpush2.bf16.msra.mxu0 0
        %2645 = vmatprep.subr.bf16.mxu0 0
        %2646 = vmatpush2.bf16.msra.mxu0 0
        %2647 = vmatprep.subr.bf16.mxu0 0
        %2648 = vmatpush2.bf16.msra.mxu0 0
        %2649 = vmatprep.subr.bf16.mxu0 0
        %2650 = vmatpush2.bf16.msra.mxu0 0
        %2651 = vmatprep.mubr.bf16.mxu0 0
        %2652 = vmatmul.mubr.bf16.gmra.mxu0 %v2577
        %v2653 = vpop.f32.mrf.mxu0
        %v2654 = vadd.f32 %v2027, %v2653
        %v2655 = vpop.f32.mrf.mxu0
        %v2656 = vpop.f32.mrf.mxu0
        %v2657 = vpop.f32.mrf.mxu0
        %2658 = vdwg.mxu0
        %v2659 = vadd.f32 %v1894, %v2613
        %v2660 = vxor.u32 %v2659, 2147483648
        %v2661 = vmul.f32 %v2660, 1.442695
        %v2662 = vpow.pop %v2661
        %v2663 = vadd.f32 %v2662, 1.0
        %v2664 = vrcp.pop %v2663
        %v2665 = vmul.f32 1.0, %v2664
        %v2666 = vadd.f32 %v1896, %v2615
        %v2667 = vxor.u32 %v2666, 2147483648
        %v2668 = vmul.f32 %v2667, 1.442695
        %v2669 = vpow.pop %v2668
        %v2670 = vadd.f32 %v2669, 1.0
        %v2671 = vrcp.pop %v2670
        %v2672 = vmul.f32 1.0, %v2671
        %v2673 = vmul.f32 %v2665, %v2654
        %v2674 = vadd.f32 %v1963, %v2673
        %v2675 = vtanh.pop %v2674
        %v2676 = vsub.f32 1.0, %v2672
        %v2677 = vmul.f32 %v2676, %v2675
        %v2678 = vmul.f32 %v2672, %v2574
        %v2679 = vadd.f32 %v2677, %v2678
        %s2680 = scalar_lea.vmem %s279, 32
        %2681 = vst [vmem:[%s2680] sm:$0xff] %v2679
        %v2682 = vpack.c.bf16 %v2679, %v2679
        %2683 = vmatprep.subr.bf16.mxu0 %v2133
        %2684 = vmatpush1.bf16.msra.mxu0 %v2132
        %2685 = vmatprep.subr.bf16.mxu0 %v2130
        %2686 = vmatpush1.bf16.msra.mxu0 %v2129
        %2687 = vmatprep.subr.bf16.mxu0 %v2127
        %2688 = vmatpush1.bf16.msra.mxu0 %v2126
        %2689 = vmatprep.subr.bf16.mxu0 %v2124
        %2690 = vmatpush1.bf16.msra.mxu0 %v2123
        %2691 = vmatprep.subr.bf16.mxu0 %v2121
        %2692 = vmatpush1.bf16.msra.mxu0 %v2120
        %2693 = vmatprep.subr.bf16.mxu0 %v2118
        %2694 = vmatpush1.bf16.msra.mxu0 %v2117
        %2695 = vmatprep.subr.bf16.mxu0 %v2115
        %2696 = vmatpush1.bf16.msra.mxu0 %v2114
        %2697 = vmatprep.subr.bf16.mxu0 %v2112
        %2698 = vmatpush1.bf16.msra.mxu0 %v2111
        %2699 = vmatprep.subr.bf16.mxu0 0
        %2700 = vmatpush2.bf16.msra.mxu0 0
        %2701 = vmatprep.subr.bf16.mxu0 0
        %2702 = vmatpush2.bf16.msra.mxu0 0
        %2703 = vmatprep.subr.bf16.mxu0 0
        %2704 = vmatpush2.bf16.msra.mxu0 0
        %2705 = vmatprep.subr.bf16.mxu0 0
        %2706 = vmatpush2.bf16.msra.mxu0 0
        %2707 = vmatprep.subr.bf16.mxu0 0
        %2708 = vmatpush2.bf16.msra.mxu0 0
        %2709 = vmatprep.subr.bf16.mxu0 0
        %2710 = vmatpush2.bf16.msra.mxu0 0
        %2711 = vmatprep.subr.bf16.mxu0 0
        %2712 = vmatpush2.bf16.msra.mxu0 0
        %2713 = vmatprep.subr.bf16.mxu0 0
        %2714 = vmatpush2.bf16.msra.mxu0 0
        %2715 = vmatprep.mubr.bf16.mxu0 0
        %2716 = vmatmul.mubr.bf16.gmra.mxu0 %v2682
        %v2717 = vpop.f32.mrf.mxu0
        %v2718 = vadd.f32 %v2019, %v2717
        %v2719 = vpop.f32.mrf.mxu0
        %v2720 = vadd.f32 %v2023, %v2719
        %v2721 = vpop.f32.mrf.mxu0
        %v2722 = vpop.f32.mrf.mxu0
        %2723 = vdwg.mxu0
        %2724 = vmatprep.subr.bf16.mxu0 0
        %2725 = vmatpush1.bf16.msra.mxu0 %v2134
        %2726 = vmatprep.subr.bf16.mxu0 0
        %2727 = vmatpush1.bf16.msra.mxu0 %v2131
        %2728 = vmatprep.subr.bf16.mxu0 0
        %2729 = vmatpush1.bf16.msra.mxu0 %v2128
        %2730 = vmatprep.subr.bf16.mxu0 0
        %2731 = vmatpush1.bf16.msra.mxu0 %v2125
        %2732 = vmatprep.subr.bf16.mxu0 0
        %2733 = vmatpush1.bf16.msra.mxu0 %v2122
        %2734 = vmatprep.subr.bf16.mxu0 0
        %2735 = vmatpush1.bf16.msra.mxu0 %v2119
        %2736 = vmatprep.subr.bf16.mxu0 0
        %2737 = vmatpush1.bf16.msra.mxu0 %v2116
        %2738 = vmatprep.subr.bf16.mxu0 0
        %2739 = vmatpush1.bf16.msra.mxu0 %v2113
        %2740 = vmatprep.subr.bf16.mxu0 0
        %2741 = vmatpush2.bf16.msra.mxu0 0
        %2742 = vmatprep.subr.bf16.mxu0 0
        %2743 = vmatpush2.bf16.msra.mxu0 0
        %2744 = vmatprep.subr.bf16.mxu0 0
        %2745 = vmatpush2.bf16.msra.mxu0 0
        %2746 = vmatprep.subr.bf16.mxu0 0
        %2747 = vmatpush2.bf16.msra.mxu0 0
        %2748 = vmatprep.subr.bf16.mxu0 0
        %2749 = vmatpush2.bf16.msra.mxu0 0
        %2750 = vmatprep.subr.bf16.mxu0 0
        %2751 = vmatpush2.bf16.msra.mxu0 0
        %2752 = vmatprep.subr.bf16.mxu0 0
        %2753 = vmatpush2.bf16.msra.mxu0 0
        %2754 = vmatprep.subr.bf16.mxu0 0
        %2755 = vmatpush2.bf16.msra.mxu0 0
        %2756 = vmatprep.mubr.bf16.mxu0 0
        %2757 = vmatmul.mubr.bf16.gmra.mxu0 %v2682
        %v2758 = vpop.f32.mrf.mxu0
        %v2759 = vadd.f32 %v2027, %v2758
        %v2760 = vpop.f32.mrf.mxu0
        %v2761 = vpop.f32.mrf.mxu0
        %v2762 = vpop.f32.mrf.mxu0
        %2763 = vdwg.mxu0
        %v2764 = vadd.f32 %v1898, %v2718
        %v2765 = vxor.u32 %v2764, 2147483648
        %v2766 = vmul.f32 %v2765, 1.442695
        %v2767 = vpow.pop %v2766
        %v2768 = vadd.f32 %v2767, 1.0
        %v2769 = vrcp.pop %v2768
        %v2770 = vmul.f32 1.0, %v2769
        %v2771 = vadd.f32 %v1900, %v2720
        %v2772 = vxor.u32 %v2771, 2147483648
        %v2773 = vmul.f32 %v2772, 1.442695
        %v2774 = vpow.pop %v2773
        %v2775 = vadd.f32 %v2774, 1.0
        %v2776 = vrcp.pop %v2775
        %v2777 = vmul.f32 1.0, %v2776
        %v2778 = vmul.f32 %v2770, %v2759
        %v2779 = vadd.f32 %v1966, %v2778
        %v2780 = vtanh.pop %v2779
        %v2781 = vsub.f32 1.0, %v2777
        %v2782 = vmul.f32 %v2781, %v2780
        %v2783 = vmul.f32 %v2777, %v2679
        %v2784 = vadd.f32 %v2782, %v2783
        %s2785 = scalar_lea.vmem %s279, 40
        %2786 = vst [vmem:[%s2785] sm:$0xff] %v2784
        %v2787 = vpack.c.bf16 %v2784, %v2784
        %2788 = vmatprep.subr.bf16.mxu0 %v2133
        %2789 = vmatpush1.bf16.msra.mxu0 %v2132
        %2790 = vmatprep.subr.bf16.mxu0 %v2130
        %2791 = vmatpush1.bf16.msra.mxu0 %v2129
        %2792 = vmatprep.subr.bf16.mxu0 %v2127
        %2793 = vmatpush1.bf16.msra.mxu0 %v2126
        %2794 = vmatprep.subr.bf16.mxu0 %v2124
        %2795 = vmatpush1.bf16.msra.mxu0 %v2123
        %2796 = vmatprep.subr.bf16.mxu0 %v2121
        %2797 = vmatpush1.bf16.msra.mxu0 %v2120
        %2798 = vmatprep.subr.bf16.mxu0 %v2118
        %2799 = vmatpush1.bf16.msra.mxu0 %v2117
        %2800 = vmatprep.subr.bf16.mxu0 %v2115
        %2801 = vmatpush1.bf16.msra.mxu0 %v2114
        %2802 = vmatprep.subr.bf16.mxu0 %v2112
        %2803 = vmatpush1.bf16.msra.mxu0 %v2111
        %2804 = vmatprep.subr.bf16.mxu0 0
        %2805 = vmatpush2.bf16.msra.mxu0 0
        %2806 = vmatprep.subr.bf16.mxu0 0
        %2807 = vmatpush2.bf16.msra.mxu0 0
        %2808 = vmatprep.subr.bf16.mxu0 0
        %2809 = vmatpush2.bf16.msra.mxu0 0
        %2810 = vmatprep.subr.bf16.mxu0 0
        %2811 = vmatpush2.bf16.msra.mxu0 0
        %2812 = vmatprep.subr.bf16.mxu0 0
        %2813 = vmatpush2.bf16.msra.mxu0 0
        %2814 = vmatprep.subr.bf16.mxu0 0
        %2815 = vmatpush2.bf16.msra.mxu0 0
        %2816 = vmatprep.subr.bf16.mxu0 0
        %2817 = vmatpush2.bf16.msra.mxu0 0
        %2818 = vmatprep.subr.bf16.mxu0 0
        %2819 = vmatpush2.bf16.msra.mxu0 0
        %2820 = vmatprep.mubr.bf16.mxu0 0
        %2821 = vmatmul.mubr.bf16.gmra.mxu0 %v2787
        %v2822 = vpop.f32.mrf.mxu0
        %v2823 = vadd.f32 %v2019, %v2822
        %v2824 = vpop.f32.mrf.mxu0
        %v2825 = vadd.f32 %v2023, %v2824
        %v2826 = vpop.f32.mrf.mxu0
        %v2827 = vpop.f32.mrf.mxu0
        %2828 = vdwg.mxu0
        %2829 = vmatprep.subr.bf16.mxu0 0
        %2830 = vmatpush1.bf16.msra.mxu0 %v2134
        %2831 = vmatprep.subr.bf16.mxu0 0
        %2832 = vmatpush1.bf16.msra.mxu0 %v2131
        %2833 = vmatprep.subr.bf16.mxu0 0
        %2834 = vmatpush1.bf16.msra.mxu0 %v2128
        %2835 = vmatprep.subr.bf16.mxu0 0
        %2836 = vmatpush1.bf16.msra.mxu0 %v2125
        %2837 = vmatprep.subr.bf16.mxu0 0
        %2838 = vmatpush1.bf16.msra.mxu0 %v2122
        %2839 = vmatprep.subr.bf16.mxu0 0
        %2840 = vmatpush1.bf16.msra.mxu0 %v2119
        %2841 = vmatprep.subr.bf16.mxu0 0
        %2842 = vmatpush1.bf16.msra.mxu0 %v2116
        %2843 = vmatprep.subr.bf16.mxu0 0
        %2844 = vmatpush1.bf16.msra.mxu0 %v2113
        %2845 = vmatprep.subr.bf16.mxu0 0
        %2846 = vmatpush2.bf16.msra.mxu0 0
        %2847 = vmatprep.subr.bf16.mxu0 0
        %2848 = vmatpush2.bf16.msra.mxu0 0
        %2849 = vmatprep.subr.bf16.mxu0 0
        %2850 = vmatpush2.bf16.msra.mxu0 0
        %2851 = vmatprep.subr.bf16.mxu0 0
        %2852 = vmatpush2.bf16.msra.mxu0 0
        %2853 = vmatprep.subr.bf16.mxu0 0
        %2854 = vmatpush2.bf16.msra.mxu0 0
        %2855 = vmatprep.subr.bf16.mxu0 0
        %2856 = vmatpush2.bf16.msra.mxu0 0
        %2857 = vmatprep.subr.bf16.mxu0 0
        %2858 = vmatpush2.bf16.msra.mxu0 0
        %2859 = vmatprep.subr.bf16.mxu0 0
        %2860 = vmatpush2.bf16.msra.mxu0 0
        %2861 = vmatprep.mubr.bf16.mxu0 0
        %2862 = vmatmul.mubr.bf16.gmra.mxu0 %v2787
        %v2863 = vpop.f32.mrf.mxu0
        %v2864 = vadd.f32 %v2027, %v2863
        %v2865 = vpop.f32.mrf.mxu0
        %v2866 = vpop.f32.mrf.mxu0
        %v2867 = vpop.f32.mrf.mxu0
        %2868 = vdwg.mxu0
        %v2869 = vadd.f32 %v1904, %v2823
        %v2870 = vxor.u32 %v2869, 2147483648
        %v2871 = vmul.f32 %v2870, 1.442695
        %v2872 = vpow.pop %v2871
        %v2873 = vadd.f32 %v2872, 1.0
        %v2874 = vrcp.pop %v2873
        %v2875 = vmul.f32 1.0, %v2874
        %v2876 = vadd.f32 %v1906, %v2825
        %v2877 = vxor.u32 %v2876, 2147483648
        %v2878 = vmul.f32 %v2877, 1.442695
        %v2879 = vpow.pop %v2878
        %v2880 = vadd.f32 %v2879, 1.0
        %v2881 = vrcp.pop %v2880
        %v2882 = vmul.f32 1.0, %v2881
        %v2883 = vmul.f32 %v2875, %v2864
        %v2884 = vadd.f32 %v1971, %v2883
        %v2885 = vtanh.pop %v2884
        %v2886 = vsub.f32 1.0, %v2882
        %v2887 = vmul.f32 %v2886, %v2885
        %v2888 = vmul.f32 %v2882, %v2784
        %v2889 = vadd.f32 %v2887, %v2888
        %s2890 = scalar_lea.vmem %s279, 48
        %2891 = vst [vmem:[%s2890] sm:$0xff] %v2889
        %v2892 = vpack.c.bf16 %v2889, %v2889
        %2893 = vmatprep.subr.bf16.mxu0 %v2133
        %2894 = vmatpush1.bf16.msra.mxu0 %v2132
        %2895 = vmatprep.subr.bf16.mxu0 %v2130
        %2896 = vmatpush1.bf16.msra.mxu0 %v2129
        %2897 = vmatprep.subr.bf16.mxu0 %v2127
        %2898 = vmatpush1.bf16.msra.mxu0 %v2126
        %2899 = vmatprep.subr.bf16.mxu0 %v2124
        %2900 = vmatpush1.bf16.msra.mxu0 %v2123
        %2901 = vmatprep.subr.bf16.mxu0 %v2121
        %2902 = vmatpush1.bf16.msra.mxu0 %v2120
        %2903 = vmatprep.subr.bf16.mxu0 %v2118
        %2904 = vmatpush1.bf16.msra.mxu0 %v2117
        %2905 = vmatprep.subr.bf16.mxu0 %v2115
        %2906 = vmatpush1.bf16.msra.mxu0 %v2114
        %2907 = vmatprep.subr.bf16.mxu0 %v2112
        %2908 = vmatpush1.bf16.msra.mxu0 %v2111
        %2909 = vmatprep.subr.bf16.mxu0 0
        %2910 = vmatpush2.bf16.msra.mxu0 0
        %2911 = vmatprep.subr.bf16.mxu0 0
        %2912 = vmatpush2.bf16.msra.mxu0 0
        %2913 = vmatprep.subr.bf16.mxu0 0
        %2914 = vmatpush2.bf16.msra.mxu0 0
        %2915 = vmatprep.subr.bf16.mxu0 0
        %2916 = vmatpush2.bf16.msra.mxu0 0
        %2917 = vmatprep.subr.bf16.mxu0 0
        %2918 = vmatpush2.bf16.msra.mxu0 0
        %2919 = vmatprep.subr.bf16.mxu0 0
        %2920 = vmatpush2.bf16.msra.mxu0 0
        %2921 = vmatprep.subr.bf16.mxu0 0
        %2922 = vmatpush2.bf16.msra.mxu0 0
        %2923 = vmatprep.subr.bf16.mxu0 0
        %2924 = vmatpush2.bf16.msra.mxu0 0
        %2925 = vmatprep.mubr.bf16.mxu0 0
        %2926 = vmatmul.mubr.bf16.gmra.mxu0 %v2892
        %v2927 = vpop.f32.mrf.mxu0
        %v2928 = vadd.f32 %v2019, %v2927
        %v2929 = vpop.f32.mrf.mxu0
        %v2930 = vadd.f32 %v2023, %v2929
        %v2931 = vpop.f32.mrf.mxu0
        %v2932 = vpop.f32.mrf.mxu0
        %2933 = vdwg.mxu0
        %2934 = vmatprep.subr.bf16.mxu0 0
        %2935 = vmatpush1.bf16.msra.mxu0 %v2134
        %2936 = vmatprep.subr.bf16.mxu0 0
        %2937 = vmatpush1.bf16.msra.mxu0 %v2131
        %2938 = vmatprep.subr.bf16.mxu0 0
        %2939 = vmatpush1.bf16.msra.mxu0 %v2128
        %2940 = vmatprep.subr.bf16.mxu0 0
        %2941 = vmatpush1.bf16.msra.mxu0 %v2125
        %2942 = vmatprep.subr.bf16.mxu0 0
        %2943 = vmatpush1.bf16.msra.mxu0 %v2122
        %2944 = vmatprep.subr.bf16.mxu0 0
        %2945 = vmatpush1.bf16.msra.mxu0 %v2119
        %2946 = vmatprep.subr.bf16.mxu0 0
        %2947 = vmatpush1.bf16.msra.mxu0 %v2116
        %2948 = vmatprep.subr.bf16.mxu0 0
        %2949 = vmatpush1.bf16.msra.mxu0 %v2113
        %2950 = vmatprep.subr.bf16.mxu0 0
        %2951 = vmatpush2.bf16.msra.mxu0 0
        %2952 = vmatprep.subr.bf16.mxu0 0
        %2953 = vmatpush2.bf16.msra.mxu0 0
        %2954 = vmatprep.subr.bf16.mxu0 0
        %2955 = vmatpush2.bf16.msra.mxu0 0
        %2956 = vmatprep.subr.bf16.mxu0 0
        %2957 = vmatpush2.bf16.msra.mxu0 0
        %2958 = vmatprep.subr.bf16.mxu0 0
        %2959 = vmatpush2.bf16.msra.mxu0 0
        %2960 = vmatprep.subr.bf16.mxu0 0
        %2961 = vmatpush2.bf16.msra.mxu0 0
        %2962 = vmatprep.subr.bf16.mxu0 0
        %2963 = vmatpush2.bf16.msra.mxu0 0
        %2964 = vmatprep.subr.bf16.mxu0 0
        %2965 = vmatpush2.bf16.msra.mxu0 0
        %2966 = vmatprep.mubr.bf16.mxu0 0
        %2967 = vmatmul.mubr.bf16.gmra.mxu0 %v2892
        %v2968 = vpop.f32.mrf.mxu0
        %v2969 = vadd.f32 %v2027, %v2968
        %v2970 = vpop.f32.mrf.mxu0
        %v2971 = vpop.f32.mrf.mxu0
        %v2972 = vpop.f32.mrf.mxu0
        %2973 = vdwg.mxu0
        %v2974 = vadd.f32 %v1908, %v2928
        %v2975 = vxor.u32 %v2974, 2147483648
        %v2976 = vmul.f32 %v2975, 1.442695
        %v2977 = vpow.pop %v2976
        %v2978 = vadd.f32 %v2977, 1.0
        %v2979 = vrcp.pop %v2978
        %v2980 = vmul.f32 1.0, %v2979
        %v2981 = vadd.f32 %v1910, %v2930
        %v2982 = vxor.u32 %v2981, 2147483648
        %v2983 = vmul.f32 %v2982, 1.442695
        %v2984 = vpow.pop %v2983
        %v2985 = vadd.f32 %v2984, 1.0
        %v2986 = vrcp.pop %v2985
        %v2987 = vmul.f32 1.0, %v2986
        %v2988 = vmul.f32 %v2980, %v2969
        %v2989 = vadd.f32 %v1974, %v2988
        %v2990 = vtanh.pop %v2989
        %v2991 = vsub.f32 1.0, %v2987
        %v2992 = vmul.f32 %v2991, %v2990
        %v2993 = vmul.f32 %v2987, %v2889
        %v2994 = vadd.f32 %v2992, %v2993
        %s2995 = scalar_lea.vmem %s279, 56
        %2996 = vst [vmem:[%s2995] sm:$0xff] %v2994
        %2997 = vst [vmem:[%s1977] sm:$0xff] %v2994
        %p2998 = scmp.eq.s32.totalorder %s20, 3
        // Predicated region
        $region49: #{rnnlm_forward.2} parent=43 // pred_check
          %p2999 = pneg %p2998
        $region50: #{rnnlm_forward.2} parent=43 // pred_check_branch
          %3001 = sbr.rel (%p2999) target = $region52
        $region51: #{rnnlm_forward.2} parent=43 // pred_region
          %v3002 = vld [vmem:[#allocation2] sm:$0xff]
          %v3003 = vld [vmem:[#allocation2 + $0x8] sm:$0xff]
          %3004 = vst [vmem:[#allocation4] sm:$0xff] %v3002
          %3005 = vst [vmem:[#allocation4 + $0x8] sm:$0xff] %v3003
        $region52: #{rnnlm_forward.2} parent=43 // pred_fallthru
          _
        %s3006 = smul.u32 8, %s20
        %p3007 = scmp.lt.s32.totalorder %s3006, 31
        %s3008 = scalar_select %p3007, %s3006, 31
        %s3009 = smul.addr %s3008, 8
        %s3010 = scalar_lea.vmem %s6, %s3009
        // Predicated region
        $region53: #{rnnlm_forward.2} parent=43 // pred_check
          %p3011 = pneg %p169
        $region54: #{rnnlm_forward.2} parent=43 // pred_check_branch
          %3013 = sbr.rel (%p3011) target = $region56
        $region55: #{rnnlm_forward.2} parent=43 // pred_region
          %s3014 = smul.u32 8, %s20
        $region56: #{rnnlm_forward.2} parent=43 // pred_fallthru
          _
        // Predicated region
        $region57: #{rnnlm_forward.2} parent=43 // pred_check
          %p3015 = pneg %p190
        $region58: #{rnnlm_forward.2} parent=43 // pred_check_branch
          %3017 = sbr.rel (%p3015) target = $region60
        $region59: #{rnnlm_forward.2} parent=43 // pred_region
          %s3019 = ssub.s32 256, 256
          %3020 = vsyncadd [#allocation5], %s3019
          %s3021 = sshll.u32 [#allocation4], 4
          %s3022 = int_to_ptr.vmem [resolvable:$true] %s3021
          %3027 = dma.vmem_to_hbm [thread:$0]  %s3022, 256, %s7, [#allocation5], 128, 128, 8
        $region60: #{rnnlm_forward.2} parent=43 // pred_fallthru
          _
        // Predicated region
        $region61: #{rnnlm_forward.2} parent=43 // pred_check
          %p3028 = pneg %p190
        $region62: #{rnnlm_forward.2} parent=43 // pred_check_branch
          %3030 = sbr.rel (%p3028) target = $region64
        $region63: #{rnnlm_forward.2} parent=43 // pred_region
          %3031 = dma.done [#allocation5], 256
        $region64: #{rnnlm_forward.2} parent=43 // pred_fallthru
          _
      $region44: #{rnnlm_forward.2} parent=5 // pred_fallthru
        _
      %p3032 = scmp.le.s32.totalorder 2, %s15
      // Predicated region
      $region65: #{rnnlm_forward.2} parent=5 // pred_check
        %p3033 = pneg %p3032
      $region66: #{rnnlm_forward.2} parent=5 // pred_check_branch
        %3035 = sbr.rel (%p3033) target = $region68
      $region67: #{rnnlm_forward.2} parent=5 // pred_region
        %s3036 = ssub.s32 %s15, 2
        // Predicated region
        $region69: #{rnnlm_forward.2} parent=67 // pred_check
          %p3037 = pneg %p175
        $region70: #{rnnlm_forward.2} parent=67 // pred_check_branch
          %3039 = sbr.rel (%p3037) target = $region72
        $region71: #{rnnlm_forward.2} parent=67 // pred_region
          %s3040 = smul.u32 8, %s21
          %p3041 = scmp.lt.s32.totalorder %s3040, 31
          %s3042 = scalar_select %p3041, %s3040, 31
          %s3043 = smul.addr %s3042, 8
          %s3044 = scalar_lea.vmem %s6, %s3043
        $region72: #{rnnlm_forward.2} parent=67 // pred_fallthru
          _
      $region68: #{rnnlm_forward.2} parent=5 // pred_fallthru
        _
    $region6: #{rnnlm_forward.2} parent=1 // loop_footer
      %s19 = sadd.s32 1, %s15
    $region7: #{rnnlm_forward.2} parent=1 // loop_footer_branch
      %14 = sbr.rel target = $region3
    $region8: #{rnnlm_forward.2} parent=1 // loop_exit
      _
    %3045 = vsyncpa [#allocation5], 1
    %s3046 = scalar_lea.sflag [#allocation5], 1
    %3047 = vsyncpa %s3046, 1

</llo_original>
